<compile_context>
chip_gen: v7x
topology: tpu7x:2x2x1
jax: 0.10.0
libtpu: 0.0.40
codegen_flags: <defaults>
</compile_context>

<pallas_src>
import functools

import jax
import jax.numpy as jnp
from jax.experimental import pallas as pl
from jax.experimental.pallas import tpu as pltpu


def _round_up(x, m):
    return ((x + m - 1) // m) * m


def _pick_tq(c):
    """Q-tile rows.  Sized so the f32 tap accumulator (TQ, C) plus one bf16
    (TQ+8, C) window stay register-resident (keeps the 9-tap sum out of VMEM,
    per review), capped at 512 rows."""
    tq = (1 << 14) // max(c, 1)
    tq = max(64, min(512, tq))
    return (tq // 8) * 8


def _rpn_head_kernel(rs_ref, ws_ref, x_ref, w3_ref, b3_ref, wo_ref, bo_ref,
                     out_ref, *, tq):
    # rs_ref:  (T,)          int32 SMEM  per-tile start row into flattened x (8-aligned)
    # ws_ref:  (T,)          int32 SMEM  per-tile row stride = level's padded width (mult of 8)
    # x_ref:   (1, XTOT, C)  bf16        all levels' zero-padded NHWC features, flattened
    # w3_ref:  (9, C, C)     bf16        3x3 conv weights, tap-major, [cin, cout]
    # b3_ref:  (1, C)        f32         conv bias
    # wo_ref:  (C, NOUT)     bf16        fused 1x1 weights [logits | deltas | zero pad]
    # bo_ref:  (1, NOUT)     f32         fused 1x1 bias
    # out_ref: (1, TQ, NOUT) bf16        fused outputs for this tile
    t = pl.program_id(1)
    base = rs_ref[t]          # 8-aligned (x offsets, TQ are multiples of 8)
    wp = ws_ref[t]            # multiple of 8

    # 3x3 conv (padding=1) on the flattened padded grid: tap (dy, dx) reads flat
    # row r + dy*wp + dx.  One aligned (TQ+8, C) window load per dy; the dx taps
    # are in-register sublane shifts.  The 9 partial products accumulate in a
    # local f32 value (no VMEM scratch round-trips).
    acc = None
    for dy in range(3):
        row0 = pl.multiple_of(base + dy * wp, 8)
        window = x_ref[0, pl.ds(row0, tq + 8), :]            # (TQ+8, C) bf16, aligned
        for dx in range(3):
            lhs = window[dx:dx + tq, :]                       # (TQ, C), sublane shift
            contrib = jnp.dot(lhs, w3_ref[3 * dy + dx],
                              preferred_element_type=jnp.float32)
            acc = contrib if acc is None else acc + contrib

    # Shared hidden state: conv bias + ReLU in f32, back to bf16 for the MXU.
    h = jnp.maximum(acc + b3_ref[...], 0.0).astype(wo_ref.dtype)

    # Fused 1x1 convs: one lane-dense (TQ, NOUT) matmul + bias; bf16 store.
    out = jnp.dot(h, wo_ref[...], preferred_element_type=jnp.float32) + bo_ref[...]
    out_ref[0] = out.astype(out_ref.dtype)


def rpn_head_forward(features, params):
    """features: list of NCHW arrays -> (list[logits NCHW], list[deltas NCHW]).

    All levels are processed by a single pallas_call (weights shared across
    levels); per-level geometry is carried by SMEM scalar-prefetch arrays.
    """
    w3, b3, wl, bl, wd, bd = params
    C = w3.shape[1]
    A = wl.shape[1]
    AD = wd.shape[1]
    NOUT = _round_up(A + AD, 128)           # lane-dense fused 1x1 output width
    B = features[0].shape[0]
    TQ = _pick_tq(C)

    # --- per-level geometry + flattening (one transpose / pad / reshape each) ---
    x_parts, meta = [], []
    row_start, row_stride = [], []
    x_off, tile_off = 0, 0
    for x_nchw in features:
        _, _, H, W = x_nchw.shape
        WP = _round_up(W + 2, 8)            # padded width, sublane aligned
        Q = H * WP                          # flattened output rows (incl. wrap cols)
        n_t = -(-Q // TQ)                   # ceil-div tiles (no exact-divisor search)
        QPAD = n_t * TQ
        PPAD = QPAD + 2 * WP + 8            # input rows incl. tap + window headroom

        x = jnp.transpose(x_nchw, (0, 2, 3, 1))                        # NHWC
        x = jnp.pad(x, ((0, 0), (1, 0), (1, WP - W - 1), (0, 0)))      # top / left / right pad
        x = x.reshape(B, (H + 1) * WP, C)
        x = jnp.pad(x, ((0, 0), (0, PPAD - (H + 1) * WP), (0, 0)))     # bottom pad + headroom
        x_parts.append(x.astype(jnp.bfloat16))

        row_start += [x_off + i * TQ for i in range(n_t)]
        row_stride += [WP] * n_t
        meta.append((H, W, WP, Q, tile_off))
        x_off += PPAD
        tile_off += n_t

    n_total = tile_off
    x_all = jnp.concatenate(x_parts, axis=1)                           # (B, XTOT, C)
    XTOT = x_all.shape[1]
    rs = jnp.asarray(row_start, dtype=jnp.int32)
    ws = jnp.asarray(row_stride, dtype=jnp.int32)

    # --- weight prep: bf16 MXU operands; fused + lane-padded 1x1 head ---
    w3b = w3.astype(jnp.bfloat16)
    wo = jnp.zeros((C, NOUT), jnp.float32).at[:, :A + AD].set(
        jnp.concatenate([wl, wd], axis=1)).astype(jnp.bfloat16)
    bo = jnp.zeros((1, NOUT), jnp.float32).at[:, :A + AD].set(
        jnp.concatenate([bl, bd], axis=1))

    kernel = functools.partial(_rpn_head_kernel, tq=TQ)
    fused = pl.pallas_call(
        kernel,
        out_shape=jax.ShapeDtypeStruct((B, n_total * TQ, NOUT), jnp.bfloat16),
        grid_spec=pltpu.PrefetchScalarGridSpec(
            num_scalar_prefetch=2,
            grid=(B, n_total),
            in_specs=[
                # x is resident across the tile axis (re-fetched only when the
                # batch index changes).
                pl.BlockSpec((1, XTOT, C), lambda b, t, rs, ws: (b, 0, 0)),
                # Constant-index weight blocks (fetched once per call).
                pl.BlockSpec((9, C, C), lambda b, t, rs, ws: (0, 0, 0)),
                pl.BlockSpec((1, C), lambda b, t, rs, ws: (0, 0)),
                pl.BlockSpec((C, NOUT), lambda b, t, rs, ws: (0, 0)),
                pl.BlockSpec((1, NOUT), lambda b, t, rs, ws: (0, 0)),
            ],
            out_specs=pl.BlockSpec((1, TQ, NOUT), lambda b, t, rs, ws: (b, t, 0)),
        ),
        compiler_params=pltpu.CompilerParams(
            dimension_semantics=("parallel", "parallel")),
    )(rs, ws, x_all, w3b, b3, wo, bo)

    # --- post-kernel: split levels, split fused lanes, drop wrap cols, NCHW f32 ---
    pred_objectness_logits, pred_anchor_deltas = [], []
    for H, W, WP, Q, toff in meta:
        lvl = fused[:, toff * TQ: toff * TQ + Q, :].reshape(B, H, WP, NOUT)
        lvl = lvl[:, :, :W, :]
        logits = lvl[..., :A].transpose(0, 3, 1, 2).astype(jnp.float32)
        deltas = lvl[..., A:A + AD].transpose(0, 3, 1, 2).astype(jnp.float32)
        pred_objectness_logits.append(logits)
        pred_anchor_deltas.append(deltas)
    return pred_objectness_logits, pred_anchor_deltas


def init_params(key, in_channels, num_cell_anchors, box_dim):
    """Deterministic synthetic init matching nn.init.normal_(std=0.01), zero bias."""
    C, A, AD = in_channels, num_cell_anchors, num_cell_anchors * box_dim
    k1, k2, k3 = jax.random.split(key, 3)
    w3 = 0.01 * jax.random.normal(k1, (9, C, C), jnp.float32)   # [tap, cin, cout]
    b3 = jnp.zeros((1, C), jnp.float32)
    wl = 0.01 * jax.random.normal(k2, (C, A), jnp.float32)
    bl = jnp.zeros((1, A), jnp.float32)
    wd = 0.01 * jax.random.normal(k3, (C, AD), jnp.float32)
    bd = jnp.zeros((1, AD), jnp.float32)
    return (w3, b3, wl, bl, wd, bd)


def _reference_level(x_nchw, params):
    """Plain-JAX reference (XLA conv, f32) for correctness checking."""
    w3, b3, wl, bl, wd, bd = params
    C = w3.shape[1]
    w_hwio = w3.reshape(3, 3, C, C)
    x = jnp.transpose(x_nchw, (0, 2, 3, 1))  # NHWC
    t = jax.lax.conv_general_dilated(
        x, w_hwio, (1, 1), 'SAME',
        dimension_numbers=('NHWC', 'HWIO', 'NHWC'))
    t = jnp.maximum(t + b3.reshape(1, 1, 1, -1), 0.0)
    logits = jnp.einsum('bhwc,ca->bhwa', t, wl) + bl.reshape(1, 1, 1, -1)
    deltas = jnp.einsum('bhwc,cd->bhwd', t, wd) + bd.reshape(1, 1, 1, -1)
    return logits.transpose(0, 3, 1, 2), deltas.transpose(0, 3, 1, 2)


if __name__ == "__main__":
    key = jax.random.PRNGKey(0)
    kp, kx1, kx2 = jax.random.split(key, 3)

    # Small synthetic config: in_channels=64, num_cell_anchors=3, box_dim=4.
    C, A, BOX = 64, 3, 4
    params = init_params(kp, C, A, BOX)

    # Two feature levels (FPN-style), NCHW.
    features = [
        jax.random.normal(kx1, (2, C, 16, 16), jnp.float32),
        jax.random.normal(kx2, (2, C, 8, 8), jnp.float32),
    ]

    logits, deltas = rpn_head_forward(features, params)
    jax.block_until_ready((logits, deltas))

    # Validate against the plain-JAX f32 reference.  Tolerance accounts for the
    # bf16 quantization of inputs, weights, hidden state and the output slab
    # (MXU accumulation stays f32).
    for i, x in enumerate(features):
        ref_lg, ref_dl = _reference_level(x, params)
        assert logits[i].shape == ref_lg.shape and deltas[i].shape == ref_dl.shape
        assert jnp.allclose(logits[i], ref_lg, atol=1e-2, rtol=1e-2)
        assert jnp.allclose(deltas[i], ref_dl, atol=1e-2, rtol=1e-2)

    print("KERNEL_OK")
</pallas_src>

<mosaic_0001>
module attributes {stable_mosaic.version = 11 : i64} {
  func.func @_rpn_head_kernel(%arg0: i32, %arg1: i32, %arg2: memref<3xi32, #tpu.memory_space<smem>>, %arg3: memref<3xi32, #tpu.memory_space<smem>>, %arg4: memref<1x864x64xbf16, #tpu.memory_space<vmem>>, %arg5: memref<9x64x64xbf16, #tpu.memory_space<vmem>>, %arg6: memref<1x64xf32, #tpu.memory_space<vmem>>, %arg7: memref<64x128xbf16, #tpu.memory_space<vmem>>, %arg8: memref<1x128xf32, #tpu.memory_space<vmem>>, %arg9: memref<1x256x128xbf16, #tpu.memory_space<vmem>>) attributes {dimension_semantics = [#tpu.dimension_semantics<parallel>, #tpu.dimension_semantics<parallel>], iteration_bounds = array<i64: 2, 3>, scalar_prefetch = 2 : i64, scratch_operands = 0 : i64, tpu.core_type = #tpu.core_type<tc>, window_params = [{transform_indices = @transform_0, window_bounds = array<i64: 1, 864, 64>}, {pipeline_mode = #tpu.pipeline_mode<synchronous>, transform_indices = @transform_1, window_bounds = array<i64: 9, 64, 64>}, {pipeline_mode = #tpu.pipeline_mode<synchronous>, transform_indices = @transform_2, window_bounds = array<i64: 1, 64>}, {pipeline_mode = #tpu.pipeline_mode<synchronous>, transform_indices = @transform_3, window_bounds = array<i64: 64, 128>}, {pipeline_mode = #tpu.pipeline_mode<synchronous>, transform_indices = @transform_4, window_bounds = array<i64: 1, 128>}, {transform_indices = @transform_5, window_bounds = array<i64: 1, 256, 128>}]} {
    %0 = arith.index_cast %arg1 : i32 to index
    %1 = memref.load %arg2[%0] : memref<3xi32, #tpu.memory_space<smem>>
    %2 = arith.index_cast %arg1 : i32 to index
    %3 = memref.load %arg3[%2] : memref<3xi32, #tpu.memory_space<smem>>
    %c0_i32 = arith.constant 0 : i32
    %4 = arith.muli %c0_i32, %3 : i32
    %5 = arith.addi %1, %4 : i32
    %6 = tpu.assume_multiple %5, 8 : i32
    %c0 = arith.constant 0 : index
    %7 = arith.index_cast %6 : i32 to index
    %c0_0 = arith.constant 0 : index
    %8 = vector.load %arg4[%c0, %7, %c0_0] : memref<1x864x64xbf16, #tpu.memory_space<vmem>>, vector<1x264x64xbf16>
    %9 = vector.shape_cast %8 : vector<1x264x64xbf16> to vector<264x64xbf16>
    %10 = vector.extract_strided_slice %9 {offsets = [0, 0], sizes = [256, 64], strides = [1, 1]} : vector<264x64xbf16> to vector<256x64xbf16>
    %c0_1 = arith.constant 0 : index
    %c0_2 = arith.constant 0 : index
    %c0_3 = arith.constant 0 : index
    %11 = vector.load %arg5[%c0_1, %c0_2, %c0_3] : memref<9x64x64xbf16, #tpu.memory_space<vmem>>, vector<1x64x64xbf16>
    %12 = vector.shape_cast %11 : vector<1x64x64xbf16> to vector<64x64xbf16>
    %cst = arith.constant dense<0.000000e+00> : vector<256x64xf32>
    %13 = tpu.matmul %10, %12, %cst {dimension_numbers = #tpu.dot_dimension_numbers<[1], [0], [0], [1], [0, 0, 1, 1], [], []>} : vector<256x64xbf16>, vector<64x64xbf16>, vector<256x64xf32> -> vector<256x64xf32>
    %14 = vector.extract_strided_slice %9 {offsets = [1, 0], sizes = [256, 64], strides = [1, 1]} : vector<264x64xbf16> to vector<256x64xbf16>
    %c1 = arith.constant 1 : index
    %c0_4 = arith.constant 0 : index
    %c0_5 = arith.constant 0 : index
    %15 = vector.load %arg5[%c1, %c0_4, %c0_5] : memref<9x64x64xbf16, #tpu.memory_space<vmem>>, vector<1x64x64xbf16>
    %16 = vector.shape_cast %15 : vector<1x64x64xbf16> to vector<64x64xbf16>
    %cst_6 = arith.constant dense<0.000000e+00> : vector<256x64xf32>
    %17 = tpu.matmul %14, %16, %cst_6 {dimension_numbers = #tpu.dot_dimension_numbers<[1], [0], [0], [1], [0, 0, 1, 1], [], []>} : vector<256x64xbf16>, vector<64x64xbf16>, vector<256x64xf32> -> vector<256x64xf32>
    %18 = arith.addf %13, %17 : vector<256x64xf32>
    %19 = vector.extract_strided_slice %9 {offsets = [2, 0], sizes = [256, 64], strides = [1, 1]} : vector<264x64xbf16> to vector<256x64xbf16>
    %c2 = arith.constant 2 : index
    %c0_7 = arith.constant 0 : index
    %c0_8 = arith.constant 0 : index
    %20 = vector.load %arg5[%c2, %c0_7, %c0_8] : memref<9x64x64xbf16, #tpu.memory_space<vmem>>, vector<1x64x64xbf16>
    %21 = vector.shape_cast %20 : vector<1x64x64xbf16> to vector<64x64xbf16>
    %cst_9 = arith.constant dense<0.000000e+00> : vector<256x64xf32>
    %22 = tpu.matmul %19, %21, %cst_9 {dimension_numbers = #tpu.dot_dimension_numbers<[1], [0], [0], [1], [0, 0, 1, 1], [], []>} : vector<256x64xbf16>, vector<64x64xbf16>, vector<256x64xf32> -> vector<256x64xf32>
    %23 = arith.addf %18, %22 : vector<256x64xf32>
    %c1_i32 = arith.constant 1 : i32
    %24 = arith.muli %c1_i32, %3 : i32
    %25 = arith.addi %1, %24 : i32
    %26 = tpu.assume_multiple %25, 8 : i32
    %c0_10 = arith.constant 0 : index
    %27 = arith.index_cast %26 : i32 to index
    %c0_11 = arith.constant 0 : index
    %28 = vector.load %arg4[%c0_10, %27, %c0_11] : memref<1x864x64xbf16, #tpu.memory_space<vmem>>, vector<1x264x64xbf16>
    %29 = vector.shape_cast %28 : vector<1x264x64xbf16> to vector<264x64xbf16>
    %30 = vector.extract_strided_slice %29 {offsets = [0, 0], sizes = [256, 64], strides = [1, 1]} : vector<264x64xbf16> to vector<256x64xbf16>
    %c3 = arith.constant 3 : index
    %c0_12 = arith.constant 0 : index
    %c0_13 = arith.constant 0 : index
    %31 = vector.load %arg5[%c3, %c0_12, %c0_13] : memref<9x64x64xbf16, #tpu.memory_space<vmem>>, vector<1x64x64xbf16>
    %32 = vector.shape_cast %31 : vector<1x64x64xbf16> to vector<64x64xbf16>
    %cst_14 = arith.constant dense<0.000000e+00> : vector<256x64xf32>
    %33 = tpu.matmul %30, %32, %cst_14 {dimension_numbers = #tpu.dot_dimension_numbers<[1], [0], [0], [1], [0, 0, 1, 1], [], []>} : vector<256x64xbf16>, vector<64x64xbf16>, vector<256x64xf32> -> vector<256x64xf32>
    %34 = arith.addf %23, %33 : vector<256x64xf32>
    %35 = vector.extract_strided_slice %29 {offsets = [1, 0], sizes = [256, 64], strides = [1, 1]} : vector<264x64xbf16> to vector<256x64xbf16>
    %c4 = arith.constant 4 : index
    %c0_15 = arith.constant 0 : index
    %c0_16 = arith.constant 0 : index
    %36 = vector.load %arg5[%c4, %c0_15, %c0_16] : memref<9x64x64xbf16, #tpu.memory_space<vmem>>, vector<1x64x64xbf16>
    %37 = vector.shape_cast %36 : vector<1x64x64xbf16> to vector<64x64xbf16>
    %cst_17 = arith.constant dense<0.000000e+00> : vector<256x64xf32>
    %38 = tpu.matmul %35, %37, %cst_17 {dimension_numbers = #tpu.dot_dimension_numbers<[1], [0], [0], [1], [0, 0, 1, 1], [], []>} : vector<256x64xbf16>, vector<64x64xbf16>, vector<256x64xf32> -> vector<256x64xf32>
    %39 = arith.addf %34, %38 : vector<256x64xf32>
    %40 = vector.extract_strided_slice %29 {offsets = [2, 0], sizes = [256, 64], strides = [1, 1]} : vector<264x64xbf16> to vector<256x64xbf16>
    %c5 = arith.constant 5 : index
    %c0_18 = arith.constant 0 : index
    %c0_19 = arith.constant 0 : index
    %41 = vector.load %arg5[%c5, %c0_18, %c0_19] : memref<9x64x64xbf16, #tpu.memory_space<vmem>>, vector<1x64x64xbf16>
    %42 = vector.shape_cast %41 : vector<1x64x64xbf16> to vector<64x64xbf16>
    %cst_20 = arith.constant dense<0.000000e+00> : vector<256x64xf32>
    %43 = tpu.matmul %40, %42, %cst_20 {dimension_numbers = #tpu.dot_dimension_numbers<[1], [0], [0], [1], [0, 0, 1, 1], [], []>} : vector<256x64xbf16>, vector<64x64xbf16>, vector<256x64xf32> -> vector<256x64xf32>
    %44 = arith.addf %39, %43 : vector<256x64xf32>
    %c2_i32 = arith.constant 2 : i32
    %45 = arith.muli %c2_i32, %3 : i32
    %46 = arith.addi %1, %45 : i32
    %47 = tpu.assume_multiple %46, 8 : i32
    %c0_21 = arith.constant 0 : index
    %48 = arith.index_cast %47 : i32 to index
    %c0_22 = arith.constant 0 : index
    %49 = vector.load %arg4[%c0_21, %48, %c0_22] : memref<1x864x64xbf16, #tpu.memory_space<vmem>>, vector<1x264x64xbf16>
    %50 = vector.shape_cast %49 : vector<1x264x64xbf16> to vector<264x64xbf16>
    %51 = vector.extract_strided_slice %50 {offsets = [0, 0], sizes = [256, 64], strides = [1, 1]} : vector<264x64xbf16> to vector<256x64xbf16>
    %c6 = arith.constant 6 : index
    %c0_23 = arith.constant 0 : index
    %c0_24 = arith.constant 0 : index
    %52 = vector.load %arg5[%c6, %c0_23, %c0_24] : memref<9x64x64xbf16, #tpu.memory_space<vmem>>, vector<1x64x64xbf16>
    %53 = vector.shape_cast %52 : vector<1x64x64xbf16> to vector<64x64xbf16>
    %cst_25 = arith.constant dense<0.000000e+00> : vector<256x64xf32>
    %54 = tpu.matmul %51, %53, %cst_25 {dimension_numbers = #tpu.dot_dimension_numbers<[1], [0], [0], [1], [0, 0, 1, 1], [], []>} : vector<256x64xbf16>, vector<64x64xbf16>, vector<256x64xf32> -> vector<256x64xf32>
    %55 = arith.addf %44, %54 : vector<256x64xf32>
    %56 = vector.extract_strided_slice %50 {offsets = [1, 0], sizes = [256, 64], strides = [1, 1]} : vector<264x64xbf16> to vector<256x64xbf16>
    %c7 = arith.constant 7 : index
    %c0_26 = arith.constant 0 : index
    %c0_27 = arith.constant 0 : index
    %57 = vector.load %arg5[%c7, %c0_26, %c0_27] : memref<9x64x64xbf16, #tpu.memory_space<vmem>>, vector<1x64x64xbf16>
    %58 = vector.shape_cast %57 : vector<1x64x64xbf16> to vector<64x64xbf16>
    %cst_28 = arith.constant dense<0.000000e+00> : vector<256x64xf32>
    %59 = tpu.matmul %56, %58, %cst_28 {dimension_numbers = #tpu.dot_dimension_numbers<[1], [0], [0], [1], [0, 0, 1, 1], [], []>} : vector<256x64xbf16>, vector<64x64xbf16>, vector<256x64xf32> -> vector<256x64xf32>
    %60 = arith.addf %55, %59 : vector<256x64xf32>
    %61 = vector.extract_strided_slice %50 {offsets = [2, 0], sizes = [256, 64], strides = [1, 1]} : vector<264x64xbf16> to vector<256x64xbf16>
    %c8 = arith.constant 8 : index
    %c0_29 = arith.constant 0 : index
    %c0_30 = arith.constant 0 : index
    %62 = vector.load %arg5[%c8, %c0_29, %c0_30] : memref<9x64x64xbf16, #tpu.memory_space<vmem>>, vector<1x64x64xbf16>
    %63 = vector.shape_cast %62 : vector<1x64x64xbf16> to vector<64x64xbf16>
    %cst_31 = arith.constant dense<0.000000e+00> : vector<256x64xf32>
    %64 = tpu.matmul %61, %63, %cst_31 {dimension_numbers = #tpu.dot_dimension_numbers<[1], [0], [0], [1], [0, 0, 1, 1], [], []>} : vector<256x64xbf16>, vector<64x64xbf16>, vector<256x64xf32> -> vector<256x64xf32>
    %65 = arith.addf %60, %64 : vector<256x64xf32>
    %c0_32 = arith.constant 0 : index
    %c0_33 = arith.constant 0 : index
    %66 = vector.load %arg6[%c0_32, %c0_33] : memref<1x64xf32, #tpu.memory_space<vmem>>, vector<1x64xf32>
    %67 = vector.broadcast %66 : vector<1x64xf32> to vector<256x64xf32>
    %68 = arith.addf %65, %67 : vector<256x64xf32>
    %cst_34 = arith.constant 0.000000e+00 : f32
    %69 = vector.broadcast %cst_34 : f32 to vector<256x64xf32>
    %70 = arith.maximumf %68, %69 : vector<256x64xf32>
    %71 = arith.truncf %70 : vector<256x64xf32> to vector<256x64xbf16>
    %c0_35 = arith.constant 0 : index
    %c0_36 = arith.constant 0 : index
    %72 = vector.load %arg7[%c0_35, %c0_36] : memref<64x128xbf16, #tpu.memory_space<vmem>>, vector<64x128xbf16>
    %cst_37 = arith.constant dense<0.000000e+00> : vector<256x128xf32>
    %73 = tpu.matmul %71, %72, %cst_37 {dimension_numbers = #tpu.dot_dimension_numbers<[1], [0], [0], [1], [0, 0, 1, 1], [], []>} : vector<256x64xbf16>, vector<64x128xbf16>, vector<256x128xf32> -> vector<256x128xf32>
    %c0_38 = arith.constant 0 : index
    %c0_39 = arith.constant 0 : index
    %74 = vector.load %arg8[%c0_38, %c0_39] : memref<1x128xf32, #tpu.memory_space<vmem>>, vector<1x128xf32>
    %75 = vector.broadcast %74 : vector<1x128xf32> to vector<256x128xf32>
    %76 = arith.addf %73, %75 : vector<256x128xf32>
    %77 = arith.truncf %76 : vector<256x128xf32> to vector<256x128xbf16>
    %c0_40 = arith.constant 0 : index
    %c0_41 = arith.constant 0 : index
    %c0_42 = arith.constant 0 : index
    %78 = vector.load %arg9[%c0_40, %c0_41, %c0_42] : memref<1x256x128xbf16, #tpu.memory_space<vmem>>, vector<1x256x128xbf16>
    %79 = vector.shape_cast %78 : vector<1x256x128xbf16> to vector<256x128xbf16>
    %80 = vector.shape_cast %77 : vector<256x128xbf16> to vector<1x256x128xbf16>
    tpu.vector_store %arg9[%c0_40, %c0_41, %c0_42], %80 {strides = array<i32>} : memref<1x256x128xbf16, #tpu.memory_space<vmem>>, vector<1x256x128xbf16>,
    return
  }
  func.func @transform_0(%arg0: i32, %arg1: i32, %arg2: memref<3xi32, #tpu.memory_space<smem>>, %arg3: memref<3xi32, #tpu.memory_space<smem>>) -> (i32, i32, i32) {
    %c0_i32 = arith.constant 0 : i32
    %c0_i32_0 = arith.constant 0 : i32
    %c0_i32_1 = arith.constant 0 : i32
    return %arg0, %c0_i32, %c0_i32_0 : i32, i32, i32
  }
  func.func @transform_1(%arg0: i32, %arg1: i32, %arg2: memref<3xi32, #tpu.memory_space<smem>>, %arg3: memref<3xi32, #tpu.memory_space<smem>>) -> (i32, i32, i32) {
    %c0_i32 = arith.constant 0 : i32
    %c0_i32_0 = arith.constant 0 : i32
    %c0_i32_1 = arith.constant 0 : i32
    %c0_i32_2 = arith.constant 0 : i32
    return %c0_i32, %c0_i32_0, %c0_i32_1 : i32, i32, i32
  }
  func.func @transform_2(%arg0: i32, %arg1: i32, %arg2: memref<3xi32, #tpu.memory_space<smem>>, %arg3: memref<3xi32, #tpu.memory_space<smem>>) -> (i32, i32) {
    %c0_i32 = arith.constant 0 : i32
    %c0_i32_0 = arith.constant 0 : i32
    %c0_i32_1 = arith.constant 0 : i32
    return %c0_i32, %c0_i32_0 : i32, i32
  }
  func.func @transform_3(%arg0: i32, %arg1: i32, %arg2: memref<3xi32, #tpu.memory_space<smem>>, %arg3: memref<3xi32, #tpu.memory_space<smem>>) -> (i32, i32) {
    %c0_i32 = arith.constant 0 : i32
    %c0_i32_0 = arith.constant 0 : i32
    %c0_i32_1 = arith.constant 0 : i32
    return %c0_i32, %c0_i32_0 : i32, i32
  }
  func.func @transform_4(%arg0: i32, %arg1: i32, %arg2: memref<3xi32, #tpu.memory_space<smem>>, %arg3: memref<3xi32, #tpu.memory_space<smem>>) -> (i32, i32) {
    %c0_i32 = arith.constant 0 : i32
    %c0_i32_0 = arith.constant 0 : i32
    %c0_i32_1 = arith.constant 0 : i32
    return %c0_i32, %c0_i32_0 : i32, i32
  }
  func.func @transform_5(%arg0: i32, %arg1: i32, %arg2: memref<3xi32, #tpu.memory_space<smem>>, %arg3: memref<3xi32, #tpu.memory_space<smem>>) -> (i32, i32, i32) {
    %c0_i32 = arith.constant 0 : i32
    %c0_i32_0 = arith.constant 0 : i32
    return %arg0, %arg1, %c0_i32 : i32, i32, i32
  }
}

</mosaic_0001>

<llo_original>
// kernel: tpu_custom_call.1
$region0: #{tpu_custom_call.1}
  #allocation0 [shape = 'u32[]', space=smem, size = 0x4, offset = 0x4, fixed_abs, tag = 'smem constant byte address 0x4 - core index']
  #allocation1 [shape = 'u32[144,128]{1,0:T(1,128)}', space=vmem, size = 0x12000, scoped, tag = 'internal scratch']
  #allocation2 [shape = 's32[1]{0}', space=sflag, size = 0x4, scoped, tag = 'scoped memory for tpu_custom_call.1']
  #allocation3 [shape = 'u8[512]{0}', space=smem, size = 0x200, scoped, tag = 'prefetched SMEM operand 0']
  #allocation4 [shape = 'u8[512]{0}', space=smem, size = 0x200, scoped, tag = 'prefetched SMEM operand 1']
  %s0 = inlined_call_operand.vmem [shape: s32[3], index: 0, kind: input, shape index: {}]
  %s1 = inlined_call_operand.vmem [shape: s32[3], index: 1, kind: input, shape index: {}]
  %s2 = inlined_call_operand.vmem [shape: bf16[2,864,64], index: 2, kind: input, shape index: {}]
  %s3 = inlined_call_operand.vmem [shape: bf16[9,64,64], index: 3, kind: input, shape index: {}]
  %s4 = inlined_call_operand.vmem [shape: f32[1,64], index: 4, kind: input, shape index: {}]
  %s5 = inlined_call_operand.vmem [shape: bf16[64,128], index: 5, kind: input, shape index: {}]
  %s6 = inlined_call_operand.vmem [shape: f32[1,128], index: 6, kind: input, shape index: {}]
  %s7 = inlined_call_operand.hbm [shape: bf16[2,768,128], index: 7, kind: output, shape index: {}]
  %s8 = sld [smem:[#allocation0]]
  $region53: #{tpu_custom_call.1} parent=0
    _
  %s10 = ssub.s32 1, %s8
  %s11 = scalar_select 0, %s10, %s8
  %s12 = sshll.u32 %s0, 4
  %s13 = int_to_ptr.vmem [resolvable:$true] %s12
  %15 = dma.vmem_to_smem %s13, 16, [#allocation3], [#allocation2]
  %s16 = sshll.u32 %s1, 4
  %s17 = int_to_ptr.vmem [resolvable:$true] %s16
  %19 = dma.vmem_to_smem %s17, 16, [#allocation4], [#allocation2]
  %20 = dma.done [#allocation2], 32
  %21 = sfence
  $region1: #{tpu_custom_call.1} parent=0
    #allocation5 [shape = 'u8[131072]{0}', space=vmem, size = 0x20000, scoped, tag = 'output window, operand 0']
    #allocation6 [shape = 's32[2]{0}', space=sflag, size = 0x8, scoped, tag = 'scoped memory for tpu_custom_call.1']
    %22 = vsyncpa [#allocation6], 0
    %s23 = scalar_lea.sflag [#allocation6], 1
    %24 = vsyncpa %s23, 0
    loop: start=0, step=1, limit=8
    $region2: #{tpu_custom_call.1} parent=1 // loop_pre_header
      _
    $region3: #{tpu_custom_call.1} parent=1 // loop_header
      %s26 = sphi 0, %s30
      %p27 = scmp.ge.s32.totalorder %s26, 8
      %s33 = sphi 0, %s45
      %s34 = sphi 0, %s41
      %s35 = sphi 0, %s33
      %s36 = sphi 0, %s34
      %s37 = sphi 0, %s35
      %s38 = sphi 0, %s36
      %s48 = sphi 0, %s50
      %s51 = sphi 0, %s48
      %s52 = sphi 0, %s51
      %s68 = sphi 0, %s52
      %s72 = sphi 0, %s72
      %s74 = sphi 0, %s72
      %s75 = sphi 0, %s74
      %s89 = sphi 0, %s75
      %s93 = sphi 0, %s93
      %s95 = sphi 0, %s93
      %s96 = sphi 0, %s95
      %s110 = sphi 0, %s96
      %s114 = sphi 0, %s114
      %s116 = sphi 0, %s114
      %s117 = sphi 0, %s116
      %s131 = sphi 0, %s117
      %s135 = sphi 0, %s135
      %s137 = sphi 0, %s135
      %s138 = sphi 0, %s137
      %s152 = sphi 0, %s138
      %s160 = sphi 0, %s162
      %s163 = sphi 0, %s160
      %s164 = sphi 0, %s163
      %s180 = sphi 0, %s164
    $region4: #{tpu_custom_call.1} parent=1 // loop_header_branch
      %29 = sbr.rel (%p27) target = $region8
    $region5: #{tpu_custom_call.1} parent=1 // loop_body
      %s31 = ssub.s32 %s26, 1
      %s32 = ssub.s32 %s26, 2
      %s39 = sadd.s32 1, %s34
      %p40 = scmp.ge.s32.totalorder %s39, 3
      %s41 = scalar_select %p40, 0, %s39
      %s42 = sadd.s32 1, %s33
      %s43 = scalar_select %p40, %s42, %s33
      %p44 = scmp.ge.s32.totalorder %s43, 2
      %s45 = scalar_select %p44, 0, %s43
      %s46 = ssub.s32 %s33, %s45
      %p47 = scmp.eq.s32.totalorder %s46, 0
      %s49 = sadd.s32 %s48, 1
      %s50 = scalar_select %p47, %s48, %s49
      %p53 = pneg %p47
      %p54 = scmp.eq.s32.totalorder %s26, 5
      %p55 = por %p53, %p54
      %p56 = scmp.ne.s32.totalorder %s48, %s51
      %p57 = scmp.eq.s32.totalorder %s26, 0
      %p58 = por %p56, %p57
      %p59 = scmp.ne.s32.totalorder %s48, %s51
      %p60 = scmp.eq.s32.totalorder %s31, 5
      %p61 = por %p59, %p60
      %p62 = scmp.ne.s32.totalorder %s51, %s52
      %p63 = scmp.eq.s32.totalorder %s31, 0
      %p64 = por %p62, %p63
      %p65 = scmp.ne.s32.totalorder %s51, %s52
      %p66 = scmp.eq.s32.totalorder %s32, 5
      %p67 = por %p65, %p66
      %p69 = scmp.ne.s32.totalorder %s52, %s68
      %p70 = scmp.eq.s32.totalorder %s32, 0
      %p71 = por %p69, %p70
      %s73 = sadd.s32 %s72, 1
      %p76 = scmp.eq.s32.totalorder %s26, 5
      %p77 = scmp.ne.s32.totalorder %s72, %s74
      %p78 = scmp.eq.s32.totalorder %s26, 0
      %p79 = por %p77, %p78
      %p80 = scmp.ne.s32.totalorder %s72, %s74
      %p81 = scmp.eq.s32.totalorder %s31, 5
      %p82 = por %p80, %p81
      %p83 = scmp.ne.s32.totalorder %s74, %s75
      %p84 = scmp.eq.s32.totalorder %s31, 0
      %p85 = por %p83, %p84
      %p86 = scmp.ne.s32.totalorder %s74, %s75
      %p87 = scmp.eq.s32.totalorder %s32, 5
      %p88 = por %p86, %p87
      %p90 = scmp.ne.s32.totalorder %s75, %s89
      %p91 = scmp.eq.s32.totalorder %s32, 0
      %p92 = por %p90, %p91
      %s94 = sadd.s32 %s93, 1
      %p97 = scmp.eq.s32.totalorder %s26, 5
      %p98 = scmp.ne.s32.totalorder %s93, %s95
      %p99 = scmp.eq.s32.totalorder %s26, 0
      %p100 = por %p98, %p99
      %p101 = scmp.ne.s32.totalorder %s93, %s95
      %p102 = scmp.eq.s32.totalorder %s31, 5
      %p103 = por %p101, %p102
      %p104 = scmp.ne.s32.totalorder %s95, %s96
      %p105 = scmp.eq.s32.totalorder %s31, 0
      %p106 = por %p104, %p105
      %p107 = scmp.ne.s32.totalorder %s95, %s96
      %p108 = scmp.eq.s32.totalorder %s32, 5
      %p109 = por %p107, %p108
      %p111 = scmp.ne.s32.totalorder %s96, %s110
      %p112 = scmp.eq.s32.totalorder %s32, 0
      %p113 = por %p111, %p112
      %s115 = sadd.s32 %s114, 1
      %p118 = scmp.eq.s32.totalorder %s26, 5
      %p119 = scmp.ne.s32.totalorder %s114, %s116
      %p120 = scmp.eq.s32.totalorder %s26, 0
      %p121 = por %p119, %p120
      %p122 = scmp.ne.s32.totalorder %s114, %s116
      %p123 = scmp.eq.s32.totalorder %s31, 5
      %p124 = por %p122, %p123
      %p125 = scmp.ne.s32.totalorder %s116, %s117
      %p126 = scmp.eq.s32.totalorder %s31, 0
      %p127 = por %p125, %p126
      %p128 = scmp.ne.s32.totalorder %s116, %s117
      %p129 = scmp.eq.s32.totalorder %s32, 5
      %p130 = por %p128, %p129
      %p132 = scmp.ne.s32.totalorder %s117, %s131
      %p133 = scmp.eq.s32.totalorder %s32, 0
      %p134 = por %p132, %p133
      %s136 = sadd.s32 %s135, 1
      %p139 = scmp.eq.s32.totalorder %s26, 5
      %p140 = scmp.ne.s32.totalorder %s135, %s137
      %p141 = scmp.eq.s32.totalorder %s26, 0
      %p142 = por %p140, %p141
      %p143 = scmp.ne.s32.totalorder %s135, %s137
      %p144 = scmp.eq.s32.totalorder %s31, 5
      %p145 = por %p143, %p144
      %p146 = scmp.ne.s32.totalorder %s137, %s138
      %p147 = scmp.eq.s32.totalorder %s31, 0
      %p148 = por %p146, %p147
      %p149 = scmp.ne.s32.totalorder %s137, %s138
      %p150 = scmp.eq.s32.totalorder %s32, 5
      %p151 = por %p149, %p150
      %p153 = scmp.ne.s32.totalorder %s138, %s152
      %p154 = scmp.eq.s32.totalorder %s32, 0
      %p155 = por %p153, %p154
      %s156 = ssub.s32 %s33, %s45
      %s157 = ssub.s32 %s34, %s41
      %s158 = sor.u32 %s156, %s157
      %p159 = scmp.eq.s32.totalorder %s158, 0
      %s161 = sadd.s32 %s160, 1
      %s162 = scalar_select %p159, %s160, %s161
      %p165 = pneg %p159
      %p166 = scmp.eq.s32.totalorder %s26, 5
      %p167 = por %p165, %p166
      %p168 = scmp.ne.s32.totalorder %s160, %s163
      %p169 = scmp.eq.s32.totalorder %s26, 0
      %p170 = por %p168, %p169
      %p171 = scmp.ne.s32.totalorder %s160, %s163
      %p172 = scmp.eq.s32.totalorder %s31, 5
      %p173 = por %p171, %p172
      %p174 = scmp.ne.s32.totalorder %s163, %s164
      %p175 = scmp.eq.s32.totalorder %s31, 0
      %p176 = por %p174, %p175
      %p177 = scmp.ne.s32.totalorder %s163, %s164
      %p178 = scmp.eq.s32.totalorder %s32, 5
      %p179 = por %p177, %p178
      %p181 = scmp.ne.s32.totalorder %s164, %s180
      %p182 = scmp.eq.s32.totalorder %s32, 0
      %p183 = por %p181, %p182
      %p184 = scmp.le.s32.totalorder 1, %s26
      %p185 = scmp.lt.s32.totalorder %s26, 7
      %p186 = pnand %p184, %p185
      %p187 = pneg %p186
      // Predicated region
      $region9: #{tpu_custom_call.1} parent=5 // pred_check
        _
      $region10: #{tpu_custom_call.1} parent=5 // pred_check_branch
        %189 = sbr.rel (%p186) target = $region12
      $region11: #{tpu_custom_call.1} parent=5 // pred_region
        %s190 = ssub.s32 %s26, 1
        // Predicated region
        $region13: #{tpu_custom_call.1} parent=11 // pred_check
          %p191 = pneg %p85
        $region14: #{tpu_custom_call.1} parent=11 // pred_check_branch
          %193 = sbr.rel (%p191) target = $region16
        $region15: #{tpu_custom_call.1} parent=11 // pred_region
          _
        $region16: #{tpu_custom_call.1} parent=11 // pred_fallthru
          _
        // Predicated region
        $region17: #{tpu_custom_call.1} parent=11 // pred_check
          %p194 = pneg %p106
        $region18: #{tpu_custom_call.1} parent=11 // pred_check_branch
          %196 = sbr.rel (%p194) target = $region20
        $region19: #{tpu_custom_call.1} parent=11 // pred_region
          _
        $region20: #{tpu_custom_call.1} parent=11 // pred_fallthru
          _
        // Predicated region
        $region21: #{tpu_custom_call.1} parent=11 // pred_check
          %p197 = pneg %p127
        $region22: #{tpu_custom_call.1} parent=11 // pred_check_branch
          %199 = sbr.rel (%p197) target = $region24
        $region23: #{tpu_custom_call.1} parent=11 // pred_region
          _
        $region24: #{tpu_custom_call.1} parent=11 // pred_fallthru
          _
        // Predicated region
        $region25: #{tpu_custom_call.1} parent=11 // pred_check
          %p200 = pneg %p148
        $region26: #{tpu_custom_call.1} parent=11 // pred_check_branch
          %202 = sbr.rel (%p200) target = $region28
        $region27: #{tpu_custom_call.1} parent=11 // pred_region
          _
        $region28: #{tpu_custom_call.1} parent=11 // pred_fallthru
          _
      $region12: #{tpu_custom_call.1} parent=5 // pred_fallthru
        _
      %p203 = scmp.lt.s32.totalorder %s26, 6
      // Predicated region
      $region29: #{tpu_custom_call.1} parent=5 // pred_check
        %p204 = pneg %p203
      $region30: #{tpu_custom_call.1} parent=5 // pred_check_branch
        %206 = sbr.rel (%p204) target = $region32
      $region31: #{tpu_custom_call.1} parent=5 // pred_region
        // Predicated region
        $region33: #{tpu_custom_call.1} parent=31 // pred_check
          %p207 = pneg %p58
        $region34: #{tpu_custom_call.1} parent=31 // pred_check_branch
          %209 = sbr.rel (%p207) target = $region36
        $region35: #{tpu_custom_call.1} parent=31 // pred_region
          %p210 = scmp.lt.s32.totalorder %s33, 1
          %s211 = scalar_select %p210, %s33, 1
          %s212 = smul.addr %s211, 108
          %s213 = smul.addr %s212, 4
          %s214 = scalar_lea.vmem %s2, %s213
        $region36: #{tpu_custom_call.1} parent=31 // pred_fallthru
          _
      $region32: #{tpu_custom_call.1} parent=5 // pred_fallthru
        _
      %p215 = scmp.le.s32.totalorder 1, %s26
      %p216 = scmp.lt.s32.totalorder %s26, 7
      %p217 = pnand %p215, %p216
      %p218 = pneg %p217
      // Predicated region
      $region37: #{tpu_custom_call.1} parent=5 // pred_check
        _
      $region38: #{tpu_custom_call.1} parent=5 // pred_check_branch
        %220 = sbr.rel (%p217) target = $region40
      $region39: #{tpu_custom_call.1} parent=5 // pred_region
        %s221 = ssub.s32 %s26, 1
        %p222 = scmp.lt.s32.totalorder %s35, 1
        %s223 = scalar_select %p222, %s35, 1
        %s224 = smul.addr %s223, 108
        %s225 = smul.addr %s224, 4
        %s226 = scalar_lea.vmem %s2, %s225
        %p227 = pneg %p64
        %p228 = pneg %p61
        %p229 = pneg %p85
        %p230 = pneg %p82
        %p231 = pneg %p106
        %p232 = pneg %p103
        %p233 = pneg %p127
        %p234 = pneg %p124
        %p235 = pneg %p148
        %p236 = pneg %p145
        %p237 = pneg %p176
        %p238 = pneg %p173
        %s239 = sand.u32 %s163, 1
        %s240 = scalar_lea.sflag [#allocation6], %s239
        %s241 = sand.u32 %s163, 1
        %s242 = smul.addr %s241, 128
        %s243 = scalar_lea.vmem [#allocation5], %s242
        %p244 = scmp.lt.s32.totalorder %s35, 1
        %s245 = scalar_select %p244, %s35, 1
        %s246 = smul.addr %s245, 108
        %s247 = smul.addr %s246, 4
        %s248 = scalar_lea.vmem %s2, %s247
        %s249 = smul.u32 32, %s36
        %s251 = sld [smem:[#allocation3 + %s36]]
        %s252 = sld [smem:[#allocation4 + %s36]]
        %s253 = sshra.s32 %s251, 3
        %s254 = sand.u32 %s251, 7
        %s255 = smul.addr %s253, 4
        %s256 = scalar_lea.vmem %s248, %s255
        %v257 = vld [vmem:[%s256] sm:$0xf]
        %v258 = vld [vmem:[%s256 + $0x4] sm:$0xf]
        %v259 = vld [vmem:[%s256 + $0x8] sm:$0xf]
        %v260 = vld [vmem:[%s256 + $0xc] sm:$0xf]
        %v261 = vld [vmem:[%s256 + $0x10] sm:$0xf]
        %v262 = vld [vmem:[%s256 + $0x14] sm:$0xf]
        %v263 = vld [vmem:[%s256 + $0x18] sm:$0xf]
        %v264 = vld [vmem:[%s256 + $0x1c] sm:$0xf]
        %v265 = vld [vmem:[%s256 + $0x20] sm:$0xf]
        %v266 = vld [vmem:[%s256 + $0x24] sm:$0xf]
        %v267 = vld [vmem:[%s256 + $0x28] sm:$0xf]
        %v268 = vld [vmem:[%s256 + $0x2c] sm:$0xf]
        %v269 = vld [vmem:[%s256 + $0x30] sm:$0xf]
        %v270 = vld [vmem:[%s256 + $0x34] sm:$0xf]
        %v271 = vld [vmem:[%s256 + $0x38] sm:$0xf]
        %v272 = vld [vmem:[%s256 + $0x3c] sm:$0xf]
        %v273 = vld [vmem:[%s256 + $0x40] sm:$0xf]
        %v274 = vld [vmem:[%s256 + $0x44] sm:$0xf]
        %v275 = vld [vmem:[%s256 + $0x48] sm:$0xf]
        %v276 = vld [vmem:[%s256 + $0x4c] sm:$0xf]
        %v277 = vld [vmem:[%s256 + $0x50] sm:$0xf]
        %v278 = vld [vmem:[%s256 + $0x54] sm:$0xf]
        %v279 = vld [vmem:[%s256 + $0x58] sm:$0xf]
        %v280 = vld [vmem:[%s256 + $0x5c] sm:$0xf]
        %v281 = vld [vmem:[%s256 + $0x60] sm:$0xf]
        %v282 = vld [vmem:[%s256 + $0x64] sm:$0xf]
        %v283 = vld [vmem:[%s256 + $0x68] sm:$0xf]
        %v284 = vld [vmem:[%s256 + $0x6c] sm:$0xf]
        %v285 = vld [vmem:[%s256 + $0x70] sm:$0xf]
        %v286 = vld [vmem:[%s256 + $0x74] sm:$0xf]
        %v287 = vld [vmem:[%s256 + $0x78] sm:$0xf]
        %v288 = vld [vmem:[%s256 + $0x7c] sm:$0xf]
        %v289 = vld [vmem:[%s256 + $0x80] sm:$0xf]
        %v290 = vld [vmem:[%s3] sm:$0xf]
        %v291 = vld [vmem:[%s3 + $0x4] sm:$0xf]
        %v292 = vld [vmem:[%s3 + $0x8] sm:$0xf]
        %v293 = vld [vmem:[%s3 + $0xc] sm:$0xf]
        %v294 = vld [vmem:[%s3 + $0x10] sm:$0xf]
        %v295 = vld [vmem:[%s3 + $0x14] sm:$0xf]
        %v296 = vld [vmem:[%s3 + $0x18] sm:$0xf]
        %v297 = vld [vmem:[%s3 + $0x1c] sm:$0xf]
        %s298 = scalar_lea.vmem %s3, 32
        %v299 = vld [vmem:[%s298] sm:$0xf]
        %v300 = vld [vmem:[%s298 + $0x4] sm:$0xf]
        %v301 = vld [vmem:[%s298 + $0x8] sm:$0xf]
        %v302 = vld [vmem:[%s298 + $0xc] sm:$0xf]
        %v303 = vld [vmem:[%s298 + $0x10] sm:$0xf]
        %v304 = vld [vmem:[%s298 + $0x14] sm:$0xf]
        %v305 = vld [vmem:[%s298 + $0x18] sm:$0xf]
        %v306 = vld [vmem:[%s298 + $0x1c] sm:$0xf]
        %v340 = vunpack.c.l.b16 %v257
        %v341 = vunpack.c.l.b16 %v258
        %v342 = vunpack.c.l.b16 %v259
        %v343 = vunpack.c.l.b16 %v260
        %v344 = vunpack.c.l.b16 %v261
        %v345 = vunpack.c.l.b16 %v262
        %v346 = vunpack.c.l.b16 %v263
        %v347 = vunpack.c.l.b16 %v264
        %v348 = vunpack.c.l.b16 %v265
        %v349 = vunpack.c.l.b16 %v266
        %v350 = vunpack.c.l.b16 %v267
        %v351 = vunpack.c.l.b16 %v268
        %v352 = vunpack.c.l.b16 %v269
        %v353 = vunpack.c.l.b16 %v270
        %v354 = vunpack.c.l.b16 %v271
        %v355 = vunpack.c.l.b16 %v272
        %v356 = vunpack.c.l.b16 %v273
        %v357 = vunpack.c.l.b16 %v274
        %v358 = vunpack.c.l.b16 %v275
        %v359 = vunpack.c.l.b16 %v276
        %v360 = vunpack.c.l.b16 %v277
        %v361 = vunpack.c.l.b16 %v278
        %v362 = vunpack.c.l.b16 %v279
        %v363 = vunpack.c.l.b16 %v280
        %v364 = vunpack.c.l.b16 %v281
        %v365 = vunpack.c.l.b16 %v282
        %v366 = vunpack.c.l.b16 %v283
        %v367 = vunpack.c.l.b16 %v284
        %v368 = vunpack.c.l.b16 %v285
        %v369 = vunpack.c.l.b16 %v286
        %v370 = vunpack.c.l.b16 %v287
        %v371 = vunpack.c.l.b16 %v288
        %v372 = vunpack.c.l.b16 %v289
        %v373 = vpack.c.b16 %v341, %v340
        %v374 = vpack.c.b16 %v343, %v342
        %v375 = vpack.c.b16 %v345, %v344
        %v376 = vpack.c.b16 %v347, %v346
        %v377 = vpack.c.b16 %v349, %v348
        %v378 = vpack.c.b16 %v351, %v350
        %v379 = vpack.c.b16 %v353, %v352
        %v380 = vpack.c.b16 %v355, %v354
        %v381 = vpack.c.b16 %v357, %v356
        %v382 = vpack.c.b16 %v359, %v358
        %v383 = vpack.c.b16 %v361, %v360
        %v384 = vpack.c.b16 %v363, %v362
        %v385 = vpack.c.b16 %v365, %v364
        %v386 = vpack.c.b16 %v367, %v366
        %v387 = vpack.c.b16 %v369, %v368
        %v388 = vpack.c.b16 %v371, %v370
        %v389 = vpack.c.b16 %v372, %v372
        %vm390 = vsmask.f32 7424
        %v392 = vshrl.u32 %v373, 16
        %v394 = vshll.u32 %v373, 16
        %v396 = vrot.slane %v394, 1
        %v397 = vor.u32 %v392, %v396
        %v399 = vshll.u32 %v374, 16
        %v401 = vrot.slane %v399, 1
        %v402 = vsel %vm390, %v397, %v401
        %v403 = vshrl.u32 %v374, 16
        %v405 = vor.u32 %v403, %v401
        %v407 = vshll.u32 %v375, 16
        %v409 = vrot.slane %v407, 1
        %v410 = vsel %vm390, %v405, %v409
        %v411 = vshrl.u32 %v375, 16
        %v413 = vor.u32 %v411, %v409
        %v415 = vshll.u32 %v376, 16
        %v417 = vrot.slane %v415, 1
        %v418 = vsel %vm390, %v413, %v417
        %v419 = vshrl.u32 %v376, 16
        %v421 = vor.u32 %v419, %v417
        %v423 = vshll.u32 %v377, 16
        %v425 = vrot.slane %v423, 1
        %v426 = vsel %vm390, %v421, %v425
        %v427 = vshrl.u32 %v377, 16
        %v429 = vor.u32 %v427, %v425
        %v431 = vshll.u32 %v378, 16
        %v433 = vrot.slane %v431, 1
        %v434 = vsel %vm390, %v429, %v433
        %v435 = vshrl.u32 %v378, 16
        %v437 = vor.u32 %v435, %v433
        %v439 = vshll.u32 %v379, 16
        %v441 = vrot.slane %v439, 1
        %v442 = vsel %vm390, %v437, %v441
        %v443 = vshrl.u32 %v379, 16
        %v445 = vor.u32 %v443, %v441
        %v447 = vshll.u32 %v380, 16
        %v449 = vrot.slane %v447, 1
        %v450 = vsel %vm390, %v445, %v449
        %v451 = vshrl.u32 %v380, 16
        %v453 = vor.u32 %v451, %v449
        %v455 = vshll.u32 %v381, 16
        %v457 = vrot.slane %v455, 1
        %v458 = vsel %vm390, %v453, %v457
        %v459 = vshrl.u32 %v381, 16
        %v461 = vor.u32 %v459, %v457
        %v463 = vshll.u32 %v382, 16
        %v465 = vrot.slane %v463, 1
        %v466 = vsel %vm390, %v461, %v465
        %v467 = vshrl.u32 %v382, 16
        %v469 = vor.u32 %v467, %v465
        %v471 = vshll.u32 %v383, 16
        %v473 = vrot.slane %v471, 1
        %v474 = vsel %vm390, %v469, %v473
        %v475 = vshrl.u32 %v383, 16
        %v477 = vor.u32 %v475, %v473
        %v479 = vshll.u32 %v384, 16
        %v481 = vrot.slane %v479, 1
        %v482 = vsel %vm390, %v477, %v481
        %v483 = vshrl.u32 %v384, 16
        %v485 = vor.u32 %v483, %v481
        %v487 = vshll.u32 %v385, 16
        %v489 = vrot.slane %v487, 1
        %v490 = vsel %vm390, %v485, %v489
        %v491 = vshrl.u32 %v385, 16
        %v493 = vor.u32 %v491, %v489
        %v495 = vshll.u32 %v386, 16
        %v497 = vrot.slane %v495, 1
        %v498 = vsel %vm390, %v493, %v497
        %v499 = vshrl.u32 %v386, 16
        %v501 = vor.u32 %v499, %v497
        %v503 = vshll.u32 %v387, 16
        %v505 = vrot.slane %v503, 1
        %v506 = vsel %vm390, %v501, %v505
        %v507 = vshrl.u32 %v387, 16
        %v509 = vor.u32 %v507, %v505
        %v511 = vshll.u32 %v388, 16
        %v513 = vrot.slane %v511, 1
        %v514 = vsel %vm390, %v509, %v513
        %v515 = vshrl.u32 %v388, 16
        %v517 = vor.u32 %v515, %v513
        %v519 = vshll.u32 %v389, 16
        %v521 = vrot.slane %v519, 1
        %v522 = vsel %vm390, %v517, %v521
        %v531 = vunpack.c.l.b16 %v299
        %v532 = vunpack.c.l.b16 %v300
        %v533 = vunpack.c.l.b16 %v301
        %v534 = vunpack.c.l.b16 %v302
        %v535 = vunpack.c.l.b16 %v303
        %v536 = vunpack.c.l.b16 %v304
        %v537 = vunpack.c.l.b16 %v305
        %v538 = vunpack.c.l.b16 %v306
        %v539 = vpack.c.b16 %v532, %v531
        %v540 = vpack.c.b16 %v534, %v533
        %v541 = vpack.c.b16 %v536, %v535
        %v542 = vpack.c.b16 %v538, %v537
        %vm547 = vcmask 523264
        %v549 = vsel %vm547, %v402, 0
        %v552 = vsel %vm547, %v410, 0
        %v555 = vsel %vm547, %v418, 0
        %v558 = vsel %vm547, %v426, 0
        %v561 = vsel %vm547, %v434, 0
        %v564 = vsel %vm547, %v442, 0
        %v567 = vsel %vm547, %v450, 0
        %v570 = vsel %vm547, %v458, 0
        %v573 = vsel %vm547, %v466, 0
        %v576 = vsel %vm547, %v474, 0
        %v579 = vsel %vm547, %v482, 0
        %v582 = vsel %vm547, %v490, 0
        %v585 = vsel %vm547, %v498, 0
        %v588 = vsel %vm547, %v506, 0
        %v591 = vsel %vm547, %v514, 0
        %v594 = vsel %vm547, %v522, 0
        %596 = vmatprep.subr.bf16.mxu0 0
        %597 = vmatpush1.bf16.msra.mxu0 %v539
        %598 = vmatprep.subr.bf16.mxu0 0
        %599 = vmatpush1.bf16.msra.mxu0 %v540
        %600 = vmatprep.subr.bf16.mxu0 0
        %601 = vmatpush1.bf16.msra.mxu0 %v541
        %602 = vmatprep.subr.bf16.mxu0 0
        %603 = vmatpush1.bf16.msra.mxu0 %v542
        %604 = vmatprep.subr.bf16.mxu0 0
        %605 = vmatpush1.bf16.msra.mxu0 0
        %606 = vmatprep.subr.bf16.mxu0 0
        %607 = vmatpush1.bf16.msra.mxu0 0
        %608 = vmatprep.subr.bf16.mxu0 0
        %609 = vmatpush1.bf16.msra.mxu0 0
        %610 = vmatprep.subr.bf16.mxu0 0
        %611 = vmatpush1.bf16.msra.mxu0 0
        %612 = vmatprep.subr.bf16.mxu0 0
        %613 = vmatpush1.bf16.msra.mxu0 0
        %614 = vmatprep.subr.bf16.mxu0 0
        %615 = vmatpush1.bf16.msra.mxu0 0
        %616 = vmatprep.subr.bf16.mxu0 0
        %617 = vmatpush1.bf16.msra.mxu0 0
        %618 = vmatprep.subr.bf16.mxu0 0
        %619 = vmatpush1.bf16.msra.mxu0 0
        %620 = vmatprep.subr.bf16.mxu0 0
        %621 = vmatpush1.bf16.msra.mxu0 0
        %622 = vmatprep.subr.bf16.mxu0 0
        %623 = vmatpush1.bf16.msra.mxu0 0
        %624 = vmatprep.subr.bf16.mxu0 0
        %625 = vmatpush1.bf16.msra.mxu0 0
        %626 = vmatprep.subr.bf16.mxu0 0
        %627 = vmatpush1.bf16.msra.mxu0 0
        %628 = vmatprep.mubr.bf16.mxu0 0
        %629 = vmatmul.mubr.bf16.gmra.mrb[0].mxu0 %v549
        %v630 = vpop.f32.mrb[0].mxu0
        %v631 = vadd.f32 0.0, %v630
        %v632 = vpop.f32.mrb[0].mxu0
        %v633 = vpop.f32.mrb[0].mxu0
        %v634 = vadd.f32 0.0, %v633
        %v635 = vpop.f32.mrb[0].mxu0
        %636 = vmatprep.mubr.bf16.mxu0 0
        %637 = vmatmul.mubr.bf16.gmra.mrb[0].mxu0 %v552
        %v638 = vpop.f32.mrb[0].mxu0
        %v639 = vadd.f32 0.0, %v638
        %v640 = vpop.f32.mrb[0].mxu0
        %v641 = vpop.f32.mrb[0].mxu0
        %v642 = vadd.f32 0.0, %v641
        %v643 = vpop.f32.mrb[0].mxu0
        %644 = vmatprep.mubr.bf16.mxu0 0
        %645 = vmatmul.mubr.bf16.gmra.mrb[0].mxu0 %v555
        %v646 = vpop.f32.mrb[0].mxu0
        %v647 = vadd.f32 0.0, %v646
        %v648 = vpop.f32.mrb[0].mxu0
        %v649 = vpop.f32.mrb[0].mxu0
        %v650 = vadd.f32 0.0, %v649
        %v651 = vpop.f32.mrb[0].mxu0
        %652 = vmatprep.mubr.bf16.mxu0 0
        %653 = vmatmul.mubr.bf16.gmra.mrb[0].mxu0 %v558
        %v654 = vpop.f32.mrb[0].mxu0
        %v655 = vadd.f32 0.0, %v654
        %v656 = vpop.f32.mrb[0].mxu0
        %v657 = vpop.f32.mrb[0].mxu0
        %v658 = vadd.f32 0.0, %v657
        %v659 = vpop.f32.mrb[0].mxu0
        %660 = vmatprep.mubr.bf16.mxu0 0
        %661 = vmatmul.mubr.bf16.gmra.mrb[0].mxu0 %v561
        %v662 = vpop.f32.mrb[0].mxu0
        %v663 = vadd.f32 0.0, %v662
        %v664 = vpop.f32.mrb[0].mxu0
        %v665 = vpop.f32.mrb[0].mxu0
        %v666 = vadd.f32 0.0, %v665
        %v667 = vpop.f32.mrb[0].mxu0
        %668 = vmatprep.mubr.bf16.mxu0 0
        %669 = vmatmul.mubr.bf16.gmra.mrb[0].mxu0 %v564
        %v670 = vpop.f32.mrb[0].mxu0
        %v671 = vadd.f32 0.0, %v670
        %v672 = vpop.f32.mrb[0].mxu0
        %v673 = vpop.f32.mrb[0].mxu0
        %v674 = vadd.f32 0.0, %v673
        %v675 = vpop.f32.mrb[0].mxu0
        %676 = vmatprep.mubr.bf16.mxu0 0
        %677 = vmatmul.mubr.bf16.gmra.mrb[0].mxu0 %v567
        %v678 = vpop.f32.mrb[0].mxu0
        %v679 = vadd.f32 0.0, %v678
        %v680 = vpop.f32.mrb[0].mxu0
        %v681 = vpop.f32.mrb[0].mxu0
        %v682 = vadd.f32 0.0, %v681
        %v683 = vpop.f32.mrb[0].mxu0
        %684 = vmatprep.mubr.bf16.mxu0 0
        %685 = vmatmul.mubr.bf16.gmra.mrb[0].mxu0 %v570
        %v686 = vpop.f32.mrb[0].mxu0
        %v687 = vadd.f32 0.0, %v686
        %v688 = vpop.f32.mrb[0].mxu0
        %v689 = vpop.f32.mrb[0].mxu0
        %v690 = vadd.f32 0.0, %v689
        %v691 = vpop.f32.mrb[0].mxu0
        %692 = vmatprep.mubr.bf16.mxu0 0
        %693 = vmatmul.mubr.bf16.gmra.mrb[0].mxu0 %v573
        %v694 = vpop.f32.mrb[0].mxu0
        %v695 = vadd.f32 0.0, %v694
        %v696 = vpop.f32.mrb[0].mxu0
        %v697 = vpop.f32.mrb[0].mxu0
        %v698 = vadd.f32 0.0, %v697
        %v699 = vpop.f32.mrb[0].mxu0
        %700 = vmatprep.mubr.bf16.mxu0 0
        %701 = vmatmul.mubr.bf16.gmra.mrb[0].mxu0 %v576
        %v702 = vpop.f32.mrb[0].mxu0
        %v703 = vadd.f32 0.0, %v702
        %v704 = vpop.f32.mrb[0].mxu0
        %v705 = vpop.f32.mrb[0].mxu0
        %v706 = vadd.f32 0.0, %v705
        %v707 = vpop.f32.mrb[0].mxu0
        %708 = vmatprep.mubr.bf16.mxu0 0
        %709 = vmatmul.mubr.bf16.gmra.mrb[0].mxu0 %v579
        %v710 = vpop.f32.mrb[0].mxu0
        %v711 = vadd.f32 0.0, %v710
        %v712 = vpop.f32.mrb[0].mxu0
        %v713 = vpop.f32.mrb[0].mxu0
        %v714 = vadd.f32 0.0, %v713
        %v715 = vpop.f32.mrb[0].mxu0
        %716 = vmatprep.mubr.bf16.mxu0 0
        %717 = vmatmul.mubr.bf16.gmra.mrb[0].mxu0 %v582
        %v718 = vpop.f32.mrb[0].mxu0
        %v719 = vadd.f32 0.0, %v718
        %v720 = vpop.f32.mrb[0].mxu0
        %v721 = vpop.f32.mrb[0].mxu0
        %v722 = vadd.f32 0.0, %v721
        %v723 = vpop.f32.mrb[0].mxu0
        %724 = vmatprep.mubr.bf16.mxu0 0
        %725 = vmatmul.mubr.bf16.gmra.mrb[0].mxu0 %v585
        %v726 = vpop.f32.mrb[0].mxu0
        %v727 = vadd.f32 0.0, %v726
        %v728 = vpop.f32.mrb[0].mxu0
        %v729 = vpop.f32.mrb[0].mxu0
        %v730 = vadd.f32 0.0, %v729
        %v731 = vpop.f32.mrb[0].mxu0
        %732 = vmatprep.mubr.bf16.mxu0 0
        %733 = vmatmul.mubr.bf16.gmra.mrb[0].mxu0 %v588
        %v734 = vpop.f32.mrb[0].mxu0
        %v735 = vadd.f32 0.0, %v734
        %v736 = vpop.f32.mrb[0].mxu0
        %v737 = vpop.f32.mrb[0].mxu0
        %v738 = vadd.f32 0.0, %v737
        %v739 = vpop.f32.mrb[0].mxu0
        %740 = vmatprep.mubr.bf16.mxu0 0
        %741 = vmatmul.mubr.bf16.gmra.mrb[0].mxu0 %v591
        %v742 = vpop.f32.mrb[0].mxu0
        %v743 = vadd.f32 0.0, %v742
        %v744 = vpop.f32.mrb[0].mxu0
        %v745 = vpop.f32.mrb[0].mxu0
        %v746 = vadd.f32 0.0, %v745
        %v747 = vpop.f32.mrb[0].mxu0
        %748 = vmatprep.mubr.bf16.mxu0 0
        %749 = vmatmul.mubr.bf16.gmra.mrb[0].mxu0 %v594
        %v750 = vpop.f32.mrb[0].mxu0
        %v751 = vadd.f32 0.0, %v750
        %v752 = vpop.f32.mrb[0].mxu0
        %v753 = vpop.f32.mrb[0].mxu0
        %v754 = vadd.f32 0.0, %v753
        %v755 = vpop.f32.mrb[0].mxu0
        %756 = vdwg.mxu0
        %v765 = vunpack.c.l.b16 %v290
        %v766 = vunpack.c.l.b16 %v291
        %v767 = vunpack.c.l.b16 %v292
        %v768 = vunpack.c.l.b16 %v293
        %v769 = vunpack.c.l.b16 %v294
        %v770 = vunpack.c.l.b16 %v295
        %v771 = vunpack.c.l.b16 %v296
        %v772 = vunpack.c.l.b16 %v297
        %v773 = vpack.c.b16 %v766, %v765
        %v774 = vpack.c.b16 %v768, %v767
        %v775 = vpack.c.b16 %v770, %v769
        %v776 = vpack.c.b16 %v772, %v771
        %v781 = vsel %vm547, %v373, 0
        %v783 = vsel %vm547, %v374, 0
        %v785 = vsel %vm547, %v375, 0
        %v787 = vsel %vm547, %v376, 0
        %v789 = vsel %vm547, %v377, 0
        %v791 = vsel %vm547, %v378, 0
        %v793 = vsel %vm547, %v379, 0
        %v795 = vsel %vm547, %v380, 0
        %v797 = vsel %vm547, %v381, 0
        %v799 = vsel %vm547, %v382, 0
        %v801 = vsel %vm547, %v383, 0
        %v803 = vsel %vm547, %v384, 0
        %v805 = vsel %vm547, %v385, 0
        %v807 = vsel %vm547, %v386, 0
        %v809 = vsel %vm547, %v387, 0
        %v811 = vsel %vm547, %v388, 0
        %813 = vmatprep.subr.bf16.mxu0 0
        %814 = vmatpush1.bf16.msra.mxu0 %v773
        %815 = vmatprep.subr.bf16.mxu0 0
        %816 = vmatpush1.bf16.msra.mxu0 %v774
        %817 = vmatprep.subr.bf16.mxu0 0
        %818 = vmatpush1.bf16.msra.mxu0 %v775
        %819 = vmatprep.subr.bf16.mxu0 0
        %820 = vmatpush1.bf16.msra.mxu0 %v776
        %821 = vmatprep.subr.bf16.mxu0 0
        %822 = vmatpush1.bf16.msra.mxu0 0
        %823 = vmatprep.subr.bf16.mxu0 0
        %824 = vmatpush1.bf16.msra.mxu0 0
        %825 = vmatprep.subr.bf16.mxu0 0
        %826 = vmatpush1.bf16.msra.mxu0 0
        %827 = vmatprep.subr.bf16.mxu0 0
        %828 = vmatpush1.bf16.msra.mxu0 0
        %829 = vmatprep.subr.bf16.mxu0 0
        %830 = vmatpush1.bf16.msra.mxu0 0
        %831 = vmatprep.subr.bf16.mxu0 0
        %832 = vmatpush1.bf16.msra.mxu0 0
        %833 = vmatprep.subr.bf16.mxu0 0
        %834 = vmatpush1.bf16.msra.mxu0 0
        %835 = vmatprep.subr.bf16.mxu0 0
        %836 = vmatpush1.bf16.msra.mxu0 0
        %837 = vmatprep.subr.bf16.mxu0 0
        %838 = vmatpush1.bf16.msra.mxu0 0
        %839 = vmatprep.subr.bf16.mxu0 0
        %840 = vmatpush1.bf16.msra.mxu0 0
        %841 = vmatprep.subr.bf16.mxu0 0
        %842 = vmatpush1.bf16.msra.mxu0 0
        %843 = vmatprep.subr.bf16.mxu0 0
        %844 = vmatpush1.bf16.msra.mxu0 0
        %845 = vmatprep.mubr.bf16.mxu0 0
        %846 = vmatmul.mubr.bf16.gmra.mrb[0].mxu0 %v781
        %v847 = vpop.f32.mrb[0].mxu0
        %v848 = vadd.f32 %v631, %v847
        %v849 = vpop.f32.mrb[0].mxu0
        %v850 = vpop.f32.mrb[0].mxu0
        %v851 = vadd.f32 %v634, %v850
        %v852 = vpop.f32.mrb[0].mxu0
        %853 = vmatprep.mubr.bf16.mxu0 0
        %854 = vmatmul.mubr.bf16.gmra.mrb[0].mxu0 %v783
        %v855 = vpop.f32.mrb[0].mxu0
        %v856 = vadd.f32 %v639, %v855
        %v857 = vpop.f32.mrb[0].mxu0
        %v858 = vpop.f32.mrb[0].mxu0
        %v859 = vadd.f32 %v642, %v858
        %v860 = vpop.f32.mrb[0].mxu0
        %861 = vmatprep.mubr.bf16.mxu0 0
        %862 = vmatmul.mubr.bf16.gmra.mrb[0].mxu0 %v785
        %v863 = vpop.f32.mrb[0].mxu0
        %v864 = vadd.f32 %v647, %v863
        %v865 = vpop.f32.mrb[0].mxu0
        %v866 = vpop.f32.mrb[0].mxu0
        %v867 = vadd.f32 %v650, %v866
        %v868 = vpop.f32.mrb[0].mxu0
        %869 = vmatprep.mubr.bf16.mxu0 0
        %870 = vmatmul.mubr.bf16.gmra.mrb[0].mxu0 %v787
        %v871 = vpop.f32.mrb[0].mxu0
        %v872 = vadd.f32 %v655, %v871
        %v873 = vpop.f32.mrb[0].mxu0
        %v874 = vpop.f32.mrb[0].mxu0
        %v875 = vadd.f32 %v658, %v874
        %v876 = vpop.f32.mrb[0].mxu0
        %877 = vmatprep.mubr.bf16.mxu0 0
        %878 = vmatmul.mubr.bf16.gmra.mrb[0].mxu0 %v789
        %v879 = vpop.f32.mrb[0].mxu0
        %v880 = vadd.f32 %v663, %v879
        %v881 = vpop.f32.mrb[0].mxu0
        %v882 = vpop.f32.mrb[0].mxu0
        %v883 = vadd.f32 %v666, %v882
        %v884 = vpop.f32.mrb[0].mxu0
        %885 = vmatprep.mubr.bf16.mxu0 0
        %886 = vmatmul.mubr.bf16.gmra.mrb[0].mxu0 %v791
        %v887 = vpop.f32.mrb[0].mxu0
        %v888 = vadd.f32 %v671, %v887
        %v889 = vpop.f32.mrb[0].mxu0
        %v890 = vpop.f32.mrb[0].mxu0
        %v891 = vadd.f32 %v674, %v890
        %v892 = vpop.f32.mrb[0].mxu0
        %893 = vmatprep.mubr.bf16.mxu0 0
        %894 = vmatmul.mubr.bf16.gmra.mrb[0].mxu0 %v793
        %v895 = vpop.f32.mrb[0].mxu0
        %v896 = vadd.f32 %v679, %v895
        %v897 = vpop.f32.mrb[0].mxu0
        %v898 = vpop.f32.mrb[0].mxu0
        %v899 = vadd.f32 %v682, %v898
        %v900 = vpop.f32.mrb[0].mxu0
        %901 = vmatprep.mubr.bf16.mxu0 0
        %902 = vmatmul.mubr.bf16.gmra.mrb[0].mxu0 %v795
        %v903 = vpop.f32.mrb[0].mxu0
        %v904 = vadd.f32 %v687, %v903
        %v905 = vpop.f32.mrb[0].mxu0
        %v906 = vpop.f32.mrb[0].mxu0
        %v907 = vadd.f32 %v690, %v906
        %v908 = vpop.f32.mrb[0].mxu0
        %909 = vmatprep.mubr.bf16.mxu0 0
        %910 = vmatmul.mubr.bf16.gmra.mrb[0].mxu0 %v797
        %v911 = vpop.f32.mrb[0].mxu0
        %v912 = vadd.f32 %v695, %v911
        %v913 = vpop.f32.mrb[0].mxu0
        %v914 = vpop.f32.mrb[0].mxu0
        %v915 = vadd.f32 %v698, %v914
        %v916 = vpop.f32.mrb[0].mxu0
        %917 = vmatprep.mubr.bf16.mxu0 0
        %918 = vmatmul.mubr.bf16.gmra.mrb[0].mxu0 %v799
        %v919 = vpop.f32.mrb[0].mxu0
        %v920 = vadd.f32 %v703, %v919
        %v921 = vpop.f32.mrb[0].mxu0
        %v922 = vpop.f32.mrb[0].mxu0
        %v923 = vadd.f32 %v706, %v922
        %v924 = vpop.f32.mrb[0].mxu0
        %925 = vmatprep.mubr.bf16.mxu0 0
        %926 = vmatmul.mubr.bf16.gmra.mrb[0].mxu0 %v801
        %v927 = vpop.f32.mrb[0].mxu0
        %v928 = vadd.f32 %v711, %v927
        %v929 = vpop.f32.mrb[0].mxu0
        %v930 = vpop.f32.mrb[0].mxu0
        %v931 = vadd.f32 %v714, %v930
        %v932 = vpop.f32.mrb[0].mxu0
        %933 = vmatprep.mubr.bf16.mxu0 0
        %934 = vmatmul.mubr.bf16.gmra.mrb[0].mxu0 %v803
        %v935 = vpop.f32.mrb[0].mxu0
        %v936 = vadd.f32 %v719, %v935
        %v937 = vpop.f32.mrb[0].mxu0
        %v938 = vpop.f32.mrb[0].mxu0
        %v939 = vadd.f32 %v722, %v938
        %v940 = vpop.f32.mrb[0].mxu0
        %941 = vmatprep.mubr.bf16.mxu0 0
        %942 = vmatmul.mubr.bf16.gmra.mrb[0].mxu0 %v805
        %v943 = vpop.f32.mrb[0].mxu0
        %v944 = vadd.f32 %v727, %v943
        %v945 = vpop.f32.mrb[0].mxu0
        %v946 = vpop.f32.mrb[0].mxu0
        %v947 = vadd.f32 %v730, %v946
        %v948 = vpop.f32.mrb[0].mxu0
        %949 = vmatprep.mubr.bf16.mxu0 0
        %950 = vmatmul.mubr.bf16.gmra.mrb[0].mxu0 %v807
        %v951 = vpop.f32.mrb[0].mxu0
        %v952 = vadd.f32 %v735, %v951
        %v953 = vpop.f32.mrb[0].mxu0
        %v954 = vpop.f32.mrb[0].mxu0
        %v955 = vadd.f32 %v738, %v954
        %v956 = vpop.f32.mrb[0].mxu0
        %957 = vmatprep.mubr.bf16.mxu0 0
        %958 = vmatmul.mubr.bf16.gmra.mrb[0].mxu0 %v809
        %v959 = vpop.f32.mrb[0].mxu0
        %v960 = vadd.f32 %v743, %v959
        %v961 = vpop.f32.mrb[0].mxu0
        %v962 = vpop.f32.mrb[0].mxu0
        %v963 = vadd.f32 %v746, %v962
        %v964 = vpop.f32.mrb[0].mxu0
        %965 = vmatprep.mubr.bf16.mxu0 0
        %966 = vmatmul.mubr.bf16.gmra.mrb[0].mxu0 %v811
        %v967 = vpop.f32.mrb[0].mxu0
        %v968 = vadd.f32 %v751, %v967
        %v969 = vpop.f32.mrb[0].mxu0
        %v970 = vpop.f32.mrb[0].mxu0
        %v971 = vadd.f32 %v754, %v970
        %v972 = vpop.f32.mrb[0].mxu0
        %973 = vdwg.mxu0
        %s974 = scalar_lea.vmem %s3, 64
        %v975 = vld [vmem:[%s974] sm:$0xf]
        %v976 = vld [vmem:[%s974 + $0x4] sm:$0xf]
        %v977 = vld [vmem:[%s974 + $0x8] sm:$0xf]
        %v978 = vld [vmem:[%s974 + $0xc] sm:$0xf]
        %v979 = vld [vmem:[%s974 + $0x10] sm:$0xf]
        %v980 = vld [vmem:[%s974 + $0x14] sm:$0xf]
        %v981 = vld [vmem:[%s974 + $0x18] sm:$0xf]
        %v982 = vld [vmem:[%s974 + $0x1c] sm:$0xf]
        %vm983 = vcmask 1046528
        %v984 = vrot.slane %v373, 1
        %v985 = vrot.slane %v374, 1
        %v986 = vsel %vm983, %v984, %v985
        %v987 = vrot.slane %v375, 1
        %v988 = vsel %vm983, %v985, %v987
        %v989 = vrot.slane %v376, 1
        %v990 = vsel %vm983, %v987, %v989
        %v991 = vrot.slane %v377, 1
        %v992 = vsel %vm983, %v989, %v991
        %v993 = vrot.slane %v378, 1
        %v994 = vsel %vm983, %v991, %v993
        %v995 = vrot.slane %v379, 1
        %v996 = vsel %vm983, %v993, %v995
        %v997 = vrot.slane %v380, 1
        %v998 = vsel %vm983, %v995, %v997
        %v999 = vrot.slane %v381, 1
        %v1000 = vsel %vm983, %v997, %v999
        %v1001 = vrot.slane %v382, 1
        %v1002 = vsel %vm983, %v999, %v1001
        %v1003 = vrot.slane %v383, 1
        %v1004 = vsel %vm983, %v1001, %v1003
        %v1005 = vrot.slane %v384, 1
        %v1006 = vsel %vm983, %v1003, %v1005
        %v1007 = vrot.slane %v385, 1
        %v1008 = vsel %vm983, %v1005, %v1007
        %v1009 = vrot.slane %v386, 1
        %v1010 = vsel %vm983, %v1007, %v1009
        %v1011 = vrot.slane %v387, 1
        %v1012 = vsel %vm983, %v1009, %v1011
        %v1013 = vrot.slane %v388, 1
        %v1014 = vsel %vm983, %v1011, %v1013
        %v1015 = vrot.slane %v389, 1
        %v1016 = vsel %vm983, %v1013, %v1015
        %v1025 = vunpack.c.l.b16 %v975
        %v1026 = vunpack.c.l.b16 %v976
        %v1027 = vunpack.c.l.b16 %v977
        %v1028 = vunpack.c.l.b16 %v978
        %v1029 = vunpack.c.l.b16 %v979
        %v1030 = vunpack.c.l.b16 %v980
        %v1031 = vunpack.c.l.b16 %v981
        %v1032 = vunpack.c.l.b16 %v982
        %v1033 = vpack.c.b16 %v1026, %v1025
        %v1034 = vpack.c.b16 %v1028, %v1027
        %v1035 = vpack.c.b16 %v1030, %v1029
        %v1036 = vpack.c.b16 %v1032, %v1031
        %v1042 = vsel %vm547, %v986, 0
        %v1045 = vsel %vm547, %v988, 0
        %v1048 = vsel %vm547, %v990, 0
        %v1051 = vsel %vm547, %v992, 0
        %v1054 = vsel %vm547, %v994, 0
        %v1057 = vsel %vm547, %v996, 0
        %v1060 = vsel %vm547, %v998, 0
        %v1063 = vsel %vm547, %v1000, 0
        %v1066 = vsel %vm547, %v1002, 0
        %v1069 = vsel %vm547, %v1004, 0
        %v1072 = vsel %vm547, %v1006, 0
        %v1075 = vsel %vm547, %v1008, 0
        %v1078 = vsel %vm547, %v1010, 0
        %v1081 = vsel %vm547, %v1012, 0
        %v1084 = vsel %vm547, %v1014, 0
        %v1087 = vsel %vm547, %v1016, 0
        %1089 = vmatprep.subr.bf16.mxu0 0
        %1090 = vmatpush1.bf16.msra.mxu0 %v1033
        %1091 = vmatprep.subr.bf16.mxu0 0
        %1092 = vmatpush1.bf16.msra.mxu0 %v1034
        %1093 = vmatprep.subr.bf16.mxu0 0
        %1094 = vmatpush1.bf16.msra.mxu0 %v1035
        %1095 = vmatprep.subr.bf16.mxu0 0
        %1096 = vmatpush1.bf16.msra.mxu0 %v1036
        %1097 = vmatprep.subr.bf16.mxu0 0
        %1098 = vmatpush1.bf16.msra.mxu0 0
        %1099 = vmatprep.subr.bf16.mxu0 0
        %1100 = vmatpush1.bf16.msra.mxu0 0
        %1101 = vmatprep.subr.bf16.mxu0 0
        %1102 = vmatpush1.bf16.msra.mxu0 0
        %1103 = vmatprep.subr.bf16.mxu0 0
        %1104 = vmatpush1.bf16.msra.mxu0 0
        %1105 = vmatprep.subr.bf16.mxu0 0
        %1106 = vmatpush1.bf16.msra.mxu0 0
        %1107 = vmatprep.subr.bf16.mxu0 0
        %1108 = vmatpush1.bf16.msra.mxu0 0
        %1109 = vmatprep.subr.bf16.mxu0 0
        %1110 = vmatpush1.bf16.msra.mxu0 0
        %1111 = vmatprep.subr.bf16.mxu0 0
        %1112 = vmatpush1.bf16.msra.mxu0 0
        %1113 = vmatprep.subr.bf16.mxu0 0
        %1114 = vmatpush1.bf16.msra.mxu0 0
        %1115 = vmatprep.subr.bf16.mxu0 0
        %1116 = vmatpush1.bf16.msra.mxu0 0
        %1117 = vmatprep.subr.bf16.mxu0 0
        %1118 = vmatpush1.bf16.msra.mxu0 0
        %1119 = vmatprep.subr.bf16.mxu0 0
        %1120 = vmatpush1.bf16.msra.mxu0 0
        %1121 = vmatprep.mubr.bf16.mxu0 0
        %1122 = vmatmul.mubr.bf16.gmra.mrb[0].mxu0 %v1042
        %v1123 = vpop.f32.mrb[0].mxu0
        %v1124 = vadd.f32 0.0, %v1123
        %v1125 = vpop.f32.mrb[0].mxu0
        %v1126 = vpop.f32.mrb[0].mxu0
        %v1127 = vadd.f32 0.0, %v1126
        %v1128 = vpop.f32.mrb[0].mxu0
        %1129 = vmatprep.mubr.bf16.mxu0 0
        %1130 = vmatmul.mubr.bf16.gmra.mrb[0].mxu0 %v1045
        %v1131 = vpop.f32.mrb[0].mxu0
        %v1132 = vadd.f32 0.0, %v1131
        %v1133 = vpop.f32.mrb[0].mxu0
        %v1134 = vpop.f32.mrb[0].mxu0
        %v1135 = vadd.f32 0.0, %v1134
        %v1136 = vpop.f32.mrb[0].mxu0
        %1137 = vmatprep.mubr.bf16.mxu0 0
        %1138 = vmatmul.mubr.bf16.gmra.mrb[0].mxu0 %v1048
        %v1139 = vpop.f32.mrb[0].mxu0
        %v1140 = vadd.f32 0.0, %v1139
        %v1141 = vpop.f32.mrb[0].mxu0
        %v1142 = vpop.f32.mrb[0].mxu0
        %v1143 = vadd.f32 0.0, %v1142
        %v1144 = vpop.f32.mrb[0].mxu0
        %1145 = vmatprep.mubr.bf16.mxu0 0
        %1146 = vmatmul.mubr.bf16.gmra.mrb[0].mxu0 %v1051
        %v1147 = vpop.f32.mrb[0].mxu0
        %v1148 = vadd.f32 0.0, %v1147
        %v1149 = vpop.f32.mrb[0].mxu0
        %v1150 = vpop.f32.mrb[0].mxu0
        %v1151 = vadd.f32 0.0, %v1150
        %v1152 = vpop.f32.mrb[0].mxu0
        %1153 = vmatprep.mubr.bf16.mxu0 0
        %1154 = vmatmul.mubr.bf16.gmra.mrb[0].mxu0 %v1054
        %v1155 = vpop.f32.mrb[0].mxu0
        %v1156 = vadd.f32 0.0, %v1155
        %v1157 = vpop.f32.mrb[0].mxu0
        %v1158 = vpop.f32.mrb[0].mxu0
        %v1159 = vadd.f32 0.0, %v1158
        %v1160 = vpop.f32.mrb[0].mxu0
        %1161 = vmatprep.mubr.bf16.mxu0 0
        %1162 = vmatmul.mubr.bf16.gmra.mrb[0].mxu0 %v1057
        %v1163 = vpop.f32.mrb[0].mxu0
        %v1164 = vadd.f32 0.0, %v1163
        %v1165 = vpop.f32.mrb[0].mxu0
        %v1166 = vpop.f32.mrb[0].mxu0
        %v1167 = vadd.f32 0.0, %v1166
        %v1168 = vpop.f32.mrb[0].mxu0
        %1169 = vmatprep.mubr.bf16.mxu0 0
        %1170 = vmatmul.mubr.bf16.gmra.mrb[0].mxu0 %v1060
        %v1171 = vpop.f32.mrb[0].mxu0
        %v1172 = vadd.f32 0.0, %v1171
        %v1173 = vpop.f32.mrb[0].mxu0
        %v1174 = vpop.f32.mrb[0].mxu0
        %v1175 = vadd.f32 0.0, %v1174
        %v1176 = vpop.f32.mrb[0].mxu0
        %1177 = vmatprep.mubr.bf16.mxu0 0
        %1178 = vmatmul.mubr.bf16.gmra.mrb[0].mxu0 %v1063
        %v1179 = vpop.f32.mrb[0].mxu0
        %v1180 = vadd.f32 0.0, %v1179
        %v1181 = vpop.f32.mrb[0].mxu0
        %v1182 = vpop.f32.mrb[0].mxu0
        %v1183 = vadd.f32 0.0, %v1182
        %v1184 = vpop.f32.mrb[0].mxu0
        %1185 = vmatprep.mubr.bf16.mxu0 0
        %1186 = vmatmul.mubr.bf16.gmra.mrb[0].mxu0 %v1066
        %v1187 = vpop.f32.mrb[0].mxu0
        %v1188 = vadd.f32 0.0, %v1187
        %v1189 = vpop.f32.mrb[0].mxu0
        %v1190 = vpop.f32.mrb[0].mxu0
        %v1191 = vadd.f32 0.0, %v1190
        %v1192 = vpop.f32.mrb[0].mxu0
        %1193 = vmatprep.mubr.bf16.mxu0 0
        %1194 = vmatmul.mubr.bf16.gmra.mrb[0].mxu0 %v1069
        %v1195 = vpop.f32.mrb[0].mxu0
        %v1196 = vadd.f32 0.0, %v1195
        %v1197 = vpop.f32.mrb[0].mxu0
        %v1198 = vpop.f32.mrb[0].mxu0
        %v1199 = vadd.f32 0.0, %v1198
        %v1200 = vpop.f32.mrb[0].mxu0
        %1201 = vmatprep.mubr.bf16.mxu0 0
        %1202 = vmatmul.mubr.bf16.gmra.mrb[0].mxu0 %v1072
        %v1203 = vpop.f32.mrb[0].mxu0
        %v1204 = vadd.f32 0.0, %v1203
        %v1205 = vpop.f32.mrb[0].mxu0
        %v1206 = vpop.f32.mrb[0].mxu0
        %v1207 = vadd.f32 0.0, %v1206
        %v1208 = vpop.f32.mrb[0].mxu0
        %1209 = vmatprep.mubr.bf16.mxu0 0
        %1210 = vmatmul.mubr.bf16.gmra.mrb[0].mxu0 %v1075
        %v1211 = vpop.f32.mrb[0].mxu0
        %v1212 = vadd.f32 0.0, %v1211
        %v1213 = vpop.f32.mrb[0].mxu0
        %v1214 = vpop.f32.mrb[0].mxu0
        %v1215 = vadd.f32 0.0, %v1214
        %v1216 = vpop.f32.mrb[0].mxu0
        %1217 = vmatprep.mubr.bf16.mxu0 0
        %1218 = vmatmul.mubr.bf16.gmra.mrb[0].mxu0 %v1078
        %v1219 = vpop.f32.mrb[0].mxu0
        %v1220 = vadd.f32 0.0, %v1219
        %v1221 = vpop.f32.mrb[0].mxu0
        %v1222 = vpop.f32.mrb[0].mxu0
        %v1223 = vadd.f32 0.0, %v1222
        %v1224 = vpop.f32.mrb[0].mxu0
        %1225 = vmatprep.mubr.bf16.mxu0 0
        %1226 = vmatmul.mubr.bf16.gmra.mrb[0].mxu0 %v1081
        %v1227 = vpop.f32.mrb[0].mxu0
        %v1228 = vadd.f32 0.0, %v1227
        %v1229 = vpop.f32.mrb[0].mxu0
        %v1230 = vpop.f32.mrb[0].mxu0
        %v1231 = vadd.f32 0.0, %v1230
        %v1232 = vpop.f32.mrb[0].mxu0
        %1233 = vmatprep.mubr.bf16.mxu0 0
        %1234 = vmatmul.mubr.bf16.gmra.mrb[0].mxu0 %v1084
        %v1235 = vpop.f32.mrb[0].mxu0
        %v1236 = vadd.f32 0.0, %v1235
        %v1237 = vpop.f32.mrb[0].mxu0
        %v1238 = vpop.f32.mrb[0].mxu0
        %v1239 = vadd.f32 0.0, %v1238
        %v1240 = vpop.f32.mrb[0].mxu0
        %1241 = vmatprep.mubr.bf16.mxu0 0
        %1242 = vmatmul.mubr.bf16.gmra.mrb[0].mxu0 %v1087
        %v1243 = vpop.f32.mrb[0].mxu0
        %v1244 = vadd.f32 0.0, %v1243
        %v1245 = vpop.f32.mrb[0].mxu0
        %v1246 = vpop.f32.mrb[0].mxu0
        %v1247 = vadd.f32 0.0, %v1246
        %v1248 = vpop.f32.mrb[0].mxu0
        %1249 = vdwg.mxu0
        %v1250 = vadd.f32 %v848, %v1124
        %v1251 = vadd.f32 %v851, %v1127
        %v1252 = vadd.f32 %v856, %v1132
        %v1253 = vadd.f32 %v859, %v1135
        %v1254 = vadd.f32 %v864, %v1140
        %v1255 = vadd.f32 %v867, %v1143
        %v1256 = vadd.f32 %v872, %v1148
        %v1257 = vadd.f32 %v875, %v1151
        %v1258 = vadd.f32 %v880, %v1156
        %v1259 = vadd.f32 %v883, %v1159
        %v1260 = vadd.f32 %v888, %v1164
        %v1261 = vadd.f32 %v891, %v1167
        %v1262 = vadd.f32 %v896, %v1172
        %v1263 = vadd.f32 %v899, %v1175
        %v1264 = vadd.f32 %v904, %v1180
        %v1265 = vadd.f32 %v907, %v1183
        %v1266 = vadd.f32 %v912, %v1188
        %v1267 = vadd.f32 %v915, %v1191
        %v1268 = vadd.f32 %v920, %v1196
        %v1269 = vadd.f32 %v923, %v1199
        %v1270 = vadd.f32 %v928, %v1204
        %v1271 = vadd.f32 %v931, %v1207
        %v1272 = vadd.f32 %v936, %v1212
        %v1273 = vadd.f32 %v939, %v1215
        %v1274 = vadd.f32 %v944, %v1220
        %v1275 = vadd.f32 %v947, %v1223
        %v1276 = vadd.f32 %v952, %v1228
        %v1277 = vadd.f32 %v955, %v1231
        %v1278 = vadd.f32 %v960, %v1236
        %v1279 = vadd.f32 %v963, %v1239
        %v1280 = vadd.f32 %v968, %v1244
        %v1281 = vadd.f32 %v971, %v1247
        %s1282 = sadd.s32 %s251, %s252
        %s1283 = sshra.s32 %s1282, 3
        %s1284 = sand.u32 %s1282, 7
        %s1285 = smul.addr %s1283, 4
        %s1286 = scalar_lea.vmem %s248, %s1285
        %v1287 = vld [vmem:[%s1286] sm:$0xf]
        %v1288 = vld [vmem:[%s1286 + $0x4] sm:$0xf]
        %v1289 = vld [vmem:[%s1286 + $0x8] sm:$0xf]
        %v1290 = vld [vmem:[%s1286 + $0xc] sm:$0xf]
        %v1291 = vld [vmem:[%s1286 + $0x10] sm:$0xf]
        %v1292 = vld [vmem:[%s1286 + $0x14] sm:$0xf]
        %v1293 = vld [vmem:[%s1286 + $0x18] sm:$0xf]
        %v1294 = vld [vmem:[%s1286 + $0x1c] sm:$0xf]
        %v1295 = vld [vmem:[%s1286 + $0x20] sm:$0xf]
        %v1296 = vld [vmem:[%s1286 + $0x24] sm:$0xf]
        %v1297 = vld [vmem:[%s1286 + $0x28] sm:$0xf]
        %v1298 = vld [vmem:[%s1286 + $0x2c] sm:$0xf]
        %v1299 = vld [vmem:[%s1286 + $0x30] sm:$0xf]
        %v1300 = vld [vmem:[%s1286 + $0x34] sm:$0xf]
        %v1301 = vld [vmem:[%s1286 + $0x38] sm:$0xf]
        %v1302 = vld [vmem:[%s1286 + $0x3c] sm:$0xf]
        %v1303 = vld [vmem:[%s1286 + $0x40] sm:$0xf]
        %v1304 = vld [vmem:[%s1286 + $0x44] sm:$0xf]
        %v1305 = vld [vmem:[%s1286 + $0x48] sm:$0xf]
        %v1306 = vld [vmem:[%s1286 + $0x4c] sm:$0xf]
        %v1307 = vld [vmem:[%s1286 + $0x50] sm:$0xf]
        %v1308 = vld [vmem:[%s1286 + $0x54] sm:$0xf]
        %v1309 = vld [vmem:[%s1286 + $0x58] sm:$0xf]
        %v1310 = vld [vmem:[%s1286 + $0x5c] sm:$0xf]
        %v1311 = vld [vmem:[%s1286 + $0x60] sm:$0xf]
        %v1312 = vld [vmem:[%s1286 + $0x64] sm:$0xf]
        %v1313 = vld [vmem:[%s1286 + $0x68] sm:$0xf]
        %v1314 = vld [vmem:[%s1286 + $0x6c] sm:$0xf]
        %v1315 = vld [vmem:[%s1286 + $0x70] sm:$0xf]
        %v1316 = vld [vmem:[%s1286 + $0x74] sm:$0xf]
        %v1317 = vld [vmem:[%s1286 + $0x78] sm:$0xf]
        %v1318 = vld [vmem:[%s1286 + $0x7c] sm:$0xf]
        %v1319 = vld [vmem:[%s1286 + $0x80] sm:$0xf]
        %s1320 = scalar_lea.vmem %s3, 96
        %v1321 = vld [vmem:[%s1320] sm:$0xf]
        %v1322 = vld [vmem:[%s1320 + $0x4] sm:$0xf]
        %v1323 = vld [vmem:[%s1320 + $0x8] sm:$0xf]
        %v1324 = vld [vmem:[%s1320 + $0xc] sm:$0xf]
        %v1325 = vld [vmem:[%s1320 + $0x10] sm:$0xf]
        %v1326 = vld [vmem:[%s1320 + $0x14] sm:$0xf]
        %v1327 = vld [vmem:[%s1320 + $0x18] sm:$0xf]
        %v1328 = vld [vmem:[%s1320 + $0x1c] sm:$0xf]
        %v1361 = vunpack.c.l.b16 %v1287
        %v1362 = vunpack.c.l.b16 %v1288
        %v1363 = vunpack.c.l.b16 %v1289
        %v1364 = vunpack.c.l.b16 %v1290
        %v1365 = vunpack.c.l.b16 %v1291
        %v1366 = vunpack.c.l.b16 %v1292
        %v1367 = vunpack.c.l.b16 %v1293
        %v1368 = vunpack.c.l.b16 %v1294
        %v1369 = vunpack.c.l.b16 %v1295
        %v1370 = vunpack.c.l.b16 %v1296
        %v1371 = vunpack.c.l.b16 %v1297
        %v1372 = vunpack.c.l.b16 %v1298
        %v1373 = vunpack.c.l.b16 %v1299
        %v1374 = vunpack.c.l.b16 %v1300
        %v1375 = vunpack.c.l.b16 %v1301
        %v1376 = vunpack.c.l.b16 %v1302
        %v1377 = vunpack.c.l.b16 %v1303
        %v1378 = vunpack.c.l.b16 %v1304
        %v1379 = vunpack.c.l.b16 %v1305
        %v1380 = vunpack.c.l.b16 %v1306
        %v1381 = vunpack.c.l.b16 %v1307
        %v1382 = vunpack.c.l.b16 %v1308
        %v1383 = vunpack.c.l.b16 %v1309
        %v1384 = vunpack.c.l.b16 %v1310
        %v1385 = vunpack.c.l.b16 %v1311
        %v1386 = vunpack.c.l.b16 %v1312
        %v1387 = vunpack.c.l.b16 %v1313
        %v1388 = vunpack.c.l.b16 %v1314
        %v1389 = vunpack.c.l.b16 %v1315
        %v1390 = vunpack.c.l.b16 %v1316
        %v1391 = vunpack.c.l.b16 %v1317
        %v1392 = vunpack.c.l.b16 %v1318
        %v1393 = vpack.c.b16 %v1362, %v1361
        %v1394 = vpack.c.b16 %v1364, %v1363
        %v1395 = vpack.c.b16 %v1366, %v1365
        %v1396 = vpack.c.b16 %v1368, %v1367
        %v1397 = vpack.c.b16 %v1370, %v1369
        %v1398 = vpack.c.b16 %v1372, %v1371
        %v1399 = vpack.c.b16 %v1374, %v1373
        %v1400 = vpack.c.b16 %v1376, %v1375
        %v1401 = vpack.c.b16 %v1378, %v1377
        %v1402 = vpack.c.b16 %v1380, %v1379
        %v1403 = vpack.c.b16 %v1382, %v1381
        %v1404 = vpack.c.b16 %v1384, %v1383
        %v1405 = vpack.c.b16 %v1386, %v1385
        %v1406 = vpack.c.b16 %v1388, %v1387
        %v1407 = vpack.c.b16 %v1390, %v1389
        %v1408 = vpack.c.b16 %v1392, %v1391
        %v1417 = vunpack.c.l.b16 %v1321
        %v1418 = vunpack.c.l.b16 %v1322
        %v1419 = vunpack.c.l.b16 %v1323
        %v1420 = vunpack.c.l.b16 %v1324
        %v1421 = vunpack.c.l.b16 %v1325
        %v1422 = vunpack.c.l.b16 %v1326
        %v1423 = vunpack.c.l.b16 %v1327
        %v1424 = vunpack.c.l.b16 %v1328
        %v1425 = vpack.c.b16 %v1418, %v1417
        %v1426 = vpack.c.b16 %v1420, %v1419
        %v1427 = vpack.c.b16 %v1422, %v1421
        %v1428 = vpack.c.b16 %v1424, %v1423
        %v1434 = vsel %vm547, %v1393, 0
        %v1437 = vsel %vm547, %v1394, 0
        %v1440 = vsel %vm547, %v1395, 0
        %v1443 = vsel %vm547, %v1396, 0
        %v1446 = vsel %vm547, %v1397, 0
        %v1449 = vsel %vm547, %v1398, 0
        %v1452 = vsel %vm547, %v1399, 0
        %v1455 = vsel %vm547, %v1400, 0
        %v1458 = vsel %vm547, %v1401, 0
        %v1461 = vsel %vm547, %v1402, 0
        %v1464 = vsel %vm547, %v1403, 0
        %v1467 = vsel %vm547, %v1404, 0
        %v1470 = vsel %vm547, %v1405, 0
        %v1473 = vsel %vm547, %v1406, 0
        %v1476 = vsel %vm547, %v1407, 0
        %v1479 = vsel %vm547, %v1408, 0
        %1481 = vmatprep.subr.bf16.mxu0 0
        %1482 = vmatpush1.bf16.msra.mxu0 %v1425
        %1483 = vmatprep.subr.bf16.mxu0 0
        %1484 = vmatpush1.bf16.msra.mxu0 %v1426
        %1485 = vmatprep.subr.bf16.mxu0 0
        %1486 = vmatpush1.bf16.msra.mxu0 %v1427
        %1487 = vmatprep.subr.bf16.mxu0 0
        %1488 = vmatpush1.bf16.msra.mxu0 %v1428
        %1489 = vmatprep.subr.bf16.mxu0 0
        %1490 = vmatpush1.bf16.msra.mxu0 0
        %1491 = vmatprep.subr.bf16.mxu0 0
        %1492 = vmatpush1.bf16.msra.mxu0 0
        %1493 = vmatprep.subr.bf16.mxu0 0
        %1494 = vmatpush1.bf16.msra.mxu0 0
        %1495 = vmatprep.subr.bf16.mxu0 0
        %1496 = vmatpush1.bf16.msra.mxu0 0
        %1497 = vmatprep.subr.bf16.mxu0 0
        %1498 = vmatpush1.bf16.msra.mxu0 0
        %1499 = vmatprep.subr.bf16.mxu0 0
        %1500 = vmatpush1.bf16.msra.mxu0 0
        %1501 = vmatprep.subr.bf16.mxu0 0
        %1502 = vmatpush1.bf16.msra.mxu0 0
        %1503 = vmatprep.subr.bf16.mxu0 0
        %1504 = vmatpush1.bf16.msra.mxu0 0
        %1505 = vmatprep.subr.bf16.mxu0 0
        %1506 = vmatpush1.bf16.msra.mxu0 0
        %1507 = vmatprep.subr.bf16.mxu0 0
        %1508 = vmatpush1.bf16.msra.mxu0 0
        %1509 = vmatprep.subr.bf16.mxu0 0
        %1510 = vmatpush1.bf16.msra.mxu0 0
        %1511 = vmatprep.subr.bf16.mxu0 0
        %1512 = vmatpush1.bf16.msra.mxu0 0
        %1513 = vmatprep.mubr.bf16.mxu0 0
        %1514 = vmatmul.mubr.bf16.gmra.mrb[0].mxu0 %v1434
        %v1515 = vpop.f32.mrb[0].mxu0
        %v1516 = vadd.f32 0.0, %v1515
        %v1517 = vpop.f32.mrb[0].mxu0
        %v1518 = vpop.f32.mrb[0].mxu0
        %v1519 = vadd.f32 0.0, %v1518
        %v1520 = vpop.f32.mrb[0].mxu0
        %1521 = vmatprep.mubr.bf16.mxu0 0
        %1522 = vmatmul.mubr.bf16.gmra.mrb[0].mxu0 %v1437
        %v1523 = vpop.f32.mrb[0].mxu0
        %v1524 = vadd.f32 0.0, %v1523
        %v1525 = vpop.f32.mrb[0].mxu0
        %v1526 = vpop.f32.mrb[0].mxu0
        %v1527 = vadd.f32 0.0, %v1526
        %v1528 = vpop.f32.mrb[0].mxu0
        %1529 = vmatprep.mubr.bf16.mxu0 0
        %1530 = vmatmul.mubr.bf16.gmra.mrb[0].mxu0 %v1440
        %v1531 = vpop.f32.mrb[0].mxu0
        %v1532 = vadd.f32 0.0, %v1531
        %v1533 = vpop.f32.mrb[0].mxu0
        %v1534 = vpop.f32.mrb[0].mxu0
        %v1535 = vadd.f32 0.0, %v1534
        %v1536 = vpop.f32.mrb[0].mxu0
        %1537 = vmatprep.mubr.bf16.mxu0 0
        %1538 = vmatmul.mubr.bf16.gmra.mrb[0].mxu0 %v1443
        %v1539 = vpop.f32.mrb[0].mxu0
        %v1540 = vadd.f32 0.0, %v1539
        %v1541 = vpop.f32.mrb[0].mxu0
        %v1542 = vpop.f32.mrb[0].mxu0
        %v1543 = vadd.f32 0.0, %v1542
        %v1544 = vpop.f32.mrb[0].mxu0
        %1545 = vmatprep.mubr.bf16.mxu0 0
        %1546 = vmatmul.mubr.bf16.gmra.mrb[0].mxu0 %v1446
        %v1547 = vpop.f32.mrb[0].mxu0
        %v1548 = vadd.f32 0.0, %v1547
        %v1549 = vpop.f32.mrb[0].mxu0
        %v1550 = vpop.f32.mrb[0].mxu0
        %v1551 = vadd.f32 0.0, %v1550
        %v1552 = vpop.f32.mrb[0].mxu0
        %1553 = vmatprep.mubr.bf16.mxu0 0
        %1554 = vmatmul.mubr.bf16.gmra.mrb[0].mxu0 %v1449
        %v1555 = vpop.f32.mrb[0].mxu0
        %v1556 = vadd.f32 0.0, %v1555
        %v1557 = vpop.f32.mrb[0].mxu0
        %v1558 = vpop.f32.mrb[0].mxu0
        %v1559 = vadd.f32 0.0, %v1558
        %v1560 = vpop.f32.mrb[0].mxu0
        %1561 = vmatprep.mubr.bf16.mxu0 0
        %1562 = vmatmul.mubr.bf16.gmra.mrb[0].mxu0 %v1452
        %v1563 = vpop.f32.mrb[0].mxu0
        %v1564 = vadd.f32 0.0, %v1563
        %v1565 = vpop.f32.mrb[0].mxu0
        %v1566 = vpop.f32.mrb[0].mxu0
        %v1567 = vadd.f32 0.0, %v1566
        %v1568 = vpop.f32.mrb[0].mxu0
        %1569 = vmatprep.mubr.bf16.mxu0 0
        %1570 = vmatmul.mubr.bf16.gmra.mrb[0].mxu0 %v1455
        %v1571 = vpop.f32.mrb[0].mxu0
        %v1572 = vadd.f32 0.0, %v1571
        %v1573 = vpop.f32.mrb[0].mxu0
        %v1574 = vpop.f32.mrb[0].mxu0
        %v1575 = vadd.f32 0.0, %v1574
        %v1576 = vpop.f32.mrb[0].mxu0
        %1577 = vmatprep.mubr.bf16.mxu0 0
        %1578 = vmatmul.mubr.bf16.gmra.mrb[0].mxu0 %v1458
        %v1579 = vpop.f32.mrb[0].mxu0
        %v1580 = vadd.f32 0.0, %v1579
        %v1581 = vpop.f32.mrb[0].mxu0
        %v1582 = vpop.f32.mrb[0].mxu0
        %v1583 = vadd.f32 0.0, %v1582
        %v1584 = vpop.f32.mrb[0].mxu0
        %1585 = vmatprep.mubr.bf16.mxu0 0
        %1586 = vmatmul.mubr.bf16.gmra.mrb[0].mxu0 %v1461
        %v1587 = vpop.f32.mrb[0].mxu0
        %v1588 = vadd.f32 0.0, %v1587
        %v1589 = vpop.f32.mrb[0].mxu0
        %v1590 = vpop.f32.mrb[0].mxu0
        %v1591 = vadd.f32 0.0, %v1590
        %v1592 = vpop.f32.mrb[0].mxu0
        %1593 = vmatprep.mubr.bf16.mxu0 0
        %1594 = vmatmul.mubr.bf16.gmra.mrb[0].mxu0 %v1464
        %v1595 = vpop.f32.mrb[0].mxu0
        %v1596 = vadd.f32 0.0, %v1595
        %v1597 = vpop.f32.mrb[0].mxu0
        %v1598 = vpop.f32.mrb[0].mxu0
        %v1599 = vadd.f32 0.0, %v1598
        %v1600 = vpop.f32.mrb[0].mxu0
        %1601 = vmatprep.mubr.bf16.mxu0 0
        %1602 = vmatmul.mubr.bf16.gmra.mrb[0].mxu0 %v1467
        %v1603 = vpop.f32.mrb[0].mxu0
        %v1604 = vadd.f32 0.0, %v1603
        %v1605 = vpop.f32.mrb[0].mxu0
        %v1606 = vpop.f32.mrb[0].mxu0
        %v1607 = vadd.f32 0.0, %v1606
        %v1608 = vpop.f32.mrb[0].mxu0
        %1609 = vmatprep.mubr.bf16.mxu0 0
        %1610 = vmatmul.mubr.bf16.gmra.mrb[0].mxu0 %v1470
        %v1611 = vpop.f32.mrb[0].mxu0
        %v1612 = vadd.f32 0.0, %v1611
        %v1613 = vpop.f32.mrb[0].mxu0
        %v1614 = vpop.f32.mrb[0].mxu0
        %v1615 = vadd.f32 0.0, %v1614
        %v1616 = vpop.f32.mrb[0].mxu0
        %1617 = vmatprep.mubr.bf16.mxu0 0
        %1618 = vmatmul.mubr.bf16.gmra.mrb[0].mxu0 %v1473
        %v1619 = vpop.f32.mrb[0].mxu0
        %v1620 = vadd.f32 0.0, %v1619
        %v1621 = vpop.f32.mrb[0].mxu0
        %v1622 = vpop.f32.mrb[0].mxu0
        %v1623 = vadd.f32 0.0, %v1622
        %v1624 = vpop.f32.mrb[0].mxu0
        %1625 = vmatprep.mubr.bf16.mxu0 0
        %1626 = vmatmul.mubr.bf16.gmra.mrb[0].mxu0 %v1476
        %v1627 = vpop.f32.mrb[0].mxu0
        %v1628 = vadd.f32 0.0, %v1627
        %v1629 = vpop.f32.mrb[0].mxu0
        %v1630 = vpop.f32.mrb[0].mxu0
        %v1631 = vadd.f32 0.0, %v1630
        %v1632 = vpop.f32.mrb[0].mxu0
        %1633 = vmatprep.mubr.bf16.mxu0 0
        %1634 = vmatmul.mubr.bf16.gmra.mrb[0].mxu0 %v1479
        %v1635 = vpop.f32.mrb[0].mxu0
        %v1636 = vadd.f32 0.0, %v1635
        %v1637 = vpop.f32.mrb[0].mxu0
        %v1638 = vpop.f32.mrb[0].mxu0
        %v1639 = vadd.f32 0.0, %v1638
        %v1640 = vpop.f32.mrb[0].mxu0
        %1641 = vdwg.mxu0
        %v1642 = vadd.f32 %v1250, %v1516
        %v1643 = vadd.f32 %v1251, %v1519
        %v1644 = vadd.f32 %v1252, %v1524
        %v1645 = vadd.f32 %v1253, %v1527
        %v1646 = vadd.f32 %v1254, %v1532
        %v1647 = vadd.f32 %v1255, %v1535
        %v1648 = vadd.f32 %v1256, %v1540
        %v1649 = vadd.f32 %v1257, %v1543
        %v1650 = vadd.f32 %v1258, %v1548
        %v1651 = vadd.f32 %v1259, %v1551
        %v1652 = vadd.f32 %v1260, %v1556
        %v1653 = vadd.f32 %v1261, %v1559
        %v1654 = vadd.f32 %v1262, %v1564
        %v1655 = vadd.f32 %v1263, %v1567
        %v1656 = vadd.f32 %v1264, %v1572
        %v1657 = vadd.f32 %v1265, %v1575
        %v1658 = vadd.f32 %v1266, %v1580
        %v1659 = vadd.f32 %v1267, %v1583
        %v1660 = vadd.f32 %v1268, %v1588
        %v1661 = vadd.f32 %v1269, %v1591
        %v1662 = vadd.f32 %v1270, %v1596
        %v1663 = vadd.f32 %v1271, %v1599
        %v1664 = vadd.f32 %v1272, %v1604
        %v1665 = vadd.f32 %v1273, %v1607
        %v1666 = vadd.f32 %v1274, %v1612
        %v1667 = vadd.f32 %v1275, %v1615
        %v1668 = vadd.f32 %v1276, %v1620
        %v1669 = vadd.f32 %v1277, %v1623
        %v1670 = vadd.f32 %v1278, %v1628
        %v1671 = vadd.f32 %v1279, %v1631
        %v1672 = vadd.f32 %v1280, %v1636
        %v1673 = vadd.f32 %v1281, %v1639
        %s1674 = scalar_lea.vmem %s3, 128
        %v1675 = vld [vmem:[%s1674] sm:$0xf]
        %v1676 = vld [vmem:[%s1674 + $0x4] sm:$0xf]
        %v1677 = vld [vmem:[%s1674 + $0x8] sm:$0xf]
        %v1678 = vld [vmem:[%s1674 + $0xc] sm:$0xf]
        %v1679 = vld [vmem:[%s1674 + $0x10] sm:$0xf]
        %v1680 = vld [vmem:[%s1674 + $0x14] sm:$0xf]
        %v1681 = vld [vmem:[%s1674 + $0x18] sm:$0xf]
        %v1682 = vld [vmem:[%s1674 + $0x1c] sm:$0xf]
        %v1684 = vunpack.c.l.b16 %v1319
        %v1685 = vpack.c.b16 %v1684, %v1684
        %v1686 = vshrl.u32 %v1393, 16
        %v1688 = vshll.u32 %v1393, 16
        %v1690 = vrot.slane %v1688, 1
        %v1691 = vor.u32 %v1686, %v1690
        %v1692 = vshll.u32 %v1394, 16
        %v1694 = vrot.slane %v1692, 1
        %v1695 = vsel %vm390, %v1691, %v1694
        %v1696 = vshrl.u32 %v1394, 16
        %v1698 = vor.u32 %v1696, %v1694
        %v1699 = vshll.u32 %v1395, 16
        %v1701 = vrot.slane %v1699, 1
        %v1702 = vsel %vm390, %v1698, %v1701
        %v1703 = vshrl.u32 %v1395, 16
        %v1705 = vor.u32 %v1703, %v1701
        %v1706 = vshll.u32 %v1396, 16
        %v1708 = vrot.slane %v1706, 1
        %v1709 = vsel %vm390, %v1705, %v1708
        %v1710 = vshrl.u32 %v1396, 16
        %v1712 = vor.u32 %v1710, %v1708
        %v1713 = vshll.u32 %v1397, 16
        %v1715 = vrot.slane %v1713, 1
        %v1716 = vsel %vm390, %v1712, %v1715
        %v1717 = vshrl.u32 %v1397, 16
        %v1719 = vor.u32 %v1717, %v1715
        %v1720 = vshll.u32 %v1398, 16
        %v1722 = vrot.slane %v1720, 1
        %v1723 = vsel %vm390, %v1719, %v1722
        %v1724 = vshrl.u32 %v1398, 16
        %v1726 = vor.u32 %v1724, %v1722
        %v1727 = vshll.u32 %v1399, 16
        %v1729 = vrot.slane %v1727, 1
        %v1730 = vsel %vm390, %v1726, %v1729
        %v1731 = vshrl.u32 %v1399, 16
        %v1733 = vor.u32 %v1731, %v1729
        %v1734 = vshll.u32 %v1400, 16
        %v1736 = vrot.slane %v1734, 1
        %v1737 = vsel %vm390, %v1733, %v1736
        %v1738 = vshrl.u32 %v1400, 16
        %v1740 = vor.u32 %v1738, %v1736
        %v1741 = vshll.u32 %v1401, 16
        %v1743 = vrot.slane %v1741, 1
        %v1744 = vsel %vm390, %v1740, %v1743
        %v1745 = vshrl.u32 %v1401, 16
        %v1747 = vor.u32 %v1745, %v1743
        %v1748 = vshll.u32 %v1402, 16
        %v1750 = vrot.slane %v1748, 1
        %v1751 = vsel %vm390, %v1747, %v1750
        %v1752 = vshrl.u32 %v1402, 16
        %v1754 = vor.u32 %v1752, %v1750
        %v1755 = vshll.u32 %v1403, 16
        %v1757 = vrot.slane %v1755, 1
        %v1758 = vsel %vm390, %v1754, %v1757
        %v1759 = vshrl.u32 %v1403, 16
        %v1761 = vor.u32 %v1759, %v1757
        %v1762 = vshll.u32 %v1404, 16
        %v1764 = vrot.slane %v1762, 1
        %v1765 = vsel %vm390, %v1761, %v1764
        %v1766 = vshrl.u32 %v1404, 16
        %v1768 = vor.u32 %v1766, %v1764
        %v1769 = vshll.u32 %v1405, 16
        %v1771 = vrot.slane %v1769, 1
        %v1772 = vsel %vm390, %v1768, %v1771
        %v1773 = vshrl.u32 %v1405, 16
        %v1775 = vor.u32 %v1773, %v1771
        %v1776 = vshll.u32 %v1406, 16
        %v1778 = vrot.slane %v1776, 1
        %v1779 = vsel %vm390, %v1775, %v1778
        %v1780 = vshrl.u32 %v1406, 16
        %v1782 = vor.u32 %v1780, %v1778
        %v1783 = vshll.u32 %v1407, 16
        %v1785 = vrot.slane %v1783, 1
        %v1786 = vsel %vm390, %v1782, %v1785
        %v1787 = vshrl.u32 %v1407, 16
        %v1789 = vor.u32 %v1787, %v1785
        %v1790 = vshll.u32 %v1408, 16
        %v1792 = vrot.slane %v1790, 1
        %v1793 = vsel %vm390, %v1789, %v1792
        %v1794 = vshrl.u32 %v1408, 16
        %v1796 = vor.u32 %v1794, %v1792
        %v1798 = vshll.u32 %v1685, 16
        %v1800 = vrot.slane %v1798, 1
        %v1801 = vsel %vm390, %v1796, %v1800
        %v1810 = vunpack.c.l.b16 %v1675
        %v1811 = vunpack.c.l.b16 %v1676
        %v1812 = vunpack.c.l.b16 %v1677
        %v1813 = vunpack.c.l.b16 %v1678
        %v1814 = vunpack.c.l.b16 %v1679
        %v1815 = vunpack.c.l.b16 %v1680
        %v1816 = vunpack.c.l.b16 %v1681
        %v1817 = vunpack.c.l.b16 %v1682
        %v1818 = vpack.c.b16 %v1811, %v1810
        %v1819 = vpack.c.b16 %v1813, %v1812
        %v1820 = vpack.c.b16 %v1815, %v1814
        %v1821 = vpack.c.b16 %v1817, %v1816
        %v1827 = vsel %vm547, %v1695, 0
        %v1830 = vsel %vm547, %v1702, 0
        %v1833 = vsel %vm547, %v1709, 0
        %v1836 = vsel %vm547, %v1716, 0
        %v1839 = vsel %vm547, %v1723, 0
        %v1842 = vsel %vm547, %v1730, 0
        %v1845 = vsel %vm547, %v1737, 0
        %v1848 = vsel %vm547, %v1744, 0
        %v1851 = vsel %vm547, %v1751, 0
        %v1854 = vsel %vm547, %v1758, 0
        %v1857 = vsel %vm547, %v1765, 0
        %v1860 = vsel %vm547, %v1772, 0
        %v1863 = vsel %vm547, %v1779, 0
        %v1866 = vsel %vm547, %v1786, 0
        %v1869 = vsel %vm547, %v1793, 0
        %v1872 = vsel %vm547, %v1801, 0
        %1874 = vmatprep.subr.bf16.mxu0 0
        %1875 = vmatpush1.bf16.msra.mxu0 %v1818
        %1876 = vmatprep.subr.bf16.mxu0 0
        %1877 = vmatpush1.bf16.msra.mxu0 %v1819
        %1878 = vmatprep.subr.bf16.mxu0 0
        %1879 = vmatpush1.bf16.msra.mxu0 %v1820
        %1880 = vmatprep.subr.bf16.mxu0 0
        %1881 = vmatpush1.bf16.msra.mxu0 %v1821
        %1882 = vmatprep.subr.bf16.mxu0 0
        %1883 = vmatpush1.bf16.msra.mxu0 0
        %1884 = vmatprep.subr.bf16.mxu0 0
        %1885 = vmatpush1.bf16.msra.mxu0 0
        %1886 = vmatprep.subr.bf16.mxu0 0
        %1887 = vmatpush1.bf16.msra.mxu0 0
        %1888 = vmatprep.subr.bf16.mxu0 0
        %1889 = vmatpush1.bf16.msra.mxu0 0
        %1890 = vmatprep.subr.bf16.mxu0 0
        %1891 = vmatpush1.bf16.msra.mxu0 0
        %1892 = vmatprep.subr.bf16.mxu0 0
        %1893 = vmatpush1.bf16.msra.mxu0 0
        %1894 = vmatprep.subr.bf16.mxu0 0
        %1895 = vmatpush1.bf16.msra.mxu0 0
        %1896 = vmatprep.subr.bf16.mxu0 0
        %1897 = vmatpush1.bf16.msra.mxu0 0
        %1898 = vmatprep.subr.bf16.mxu0 0
        %1899 = vmatpush1.bf16.msra.mxu0 0
        %1900 = vmatprep.subr.bf16.mxu0 0
        %1901 = vmatpush1.bf16.msra.mxu0 0
        %1902 = vmatprep.subr.bf16.mxu0 0
        %1903 = vmatpush1.bf16.msra.mxu0 0
        %1904 = vmatprep.subr.bf16.mxu0 0
        %1905 = vmatpush1.bf16.msra.mxu0 0
        %1906 = vmatprep.mubr.bf16.mxu0 0
        %1907 = vmatmul.mubr.bf16.gmra.mrb[0].mxu0 %v1827
        %v1908 = vpop.f32.mrb[0].mxu0
        %v1909 = vadd.f32 0.0, %v1908
        %v1910 = vpop.f32.mrb[0].mxu0
        %v1911 = vpop.f32.mrb[0].mxu0
        %v1912 = vadd.f32 0.0, %v1911
        %v1913 = vpop.f32.mrb[0].mxu0
        %1914 = vmatprep.mubr.bf16.mxu0 0
        %1915 = vmatmul.mubr.bf16.gmra.mrb[0].mxu0 %v1830
        %v1916 = vpop.f32.mrb[0].mxu0
        %v1917 = vadd.f32 0.0, %v1916
        %v1918 = vpop.f32.mrb[0].mxu0
        %v1919 = vpop.f32.mrb[0].mxu0
        %v1920 = vadd.f32 0.0, %v1919
        %v1921 = vpop.f32.mrb[0].mxu0
        %1922 = vmatprep.mubr.bf16.mxu0 0
        %1923 = vmatmul.mubr.bf16.gmra.mrb[0].mxu0 %v1833
        %v1924 = vpop.f32.mrb[0].mxu0
        %v1925 = vadd.f32 0.0, %v1924
        %v1926 = vpop.f32.mrb[0].mxu0
        %v1927 = vpop.f32.mrb[0].mxu0
        %v1928 = vadd.f32 0.0, %v1927
        %v1929 = vpop.f32.mrb[0].mxu0
        %1930 = vmatprep.mubr.bf16.mxu0 0
        %1931 = vmatmul.mubr.bf16.gmra.mrb[0].mxu0 %v1836
        %v1932 = vpop.f32.mrb[0].mxu0
        %v1933 = vadd.f32 0.0, %v1932
        %v1934 = vpop.f32.mrb[0].mxu0
        %v1935 = vpop.f32.mrb[0].mxu0
        %v1936 = vadd.f32 0.0, %v1935
        %v1937 = vpop.f32.mrb[0].mxu0
        %1938 = vmatprep.mubr.bf16.mxu0 0
        %1939 = vmatmul.mubr.bf16.gmra.mrb[0].mxu0 %v1839
        %v1940 = vpop.f32.mrb[0].mxu0
        %v1941 = vadd.f32 0.0, %v1940
        %v1942 = vpop.f32.mrb[0].mxu0
        %v1943 = vpop.f32.mrb[0].mxu0
        %v1944 = vadd.f32 0.0, %v1943
        %v1945 = vpop.f32.mrb[0].mxu0
        %1946 = vmatprep.mubr.bf16.mxu0 0
        %1947 = vmatmul.mubr.bf16.gmra.mrb[0].mxu0 %v1842
        %v1948 = vpop.f32.mrb[0].mxu0
        %v1949 = vadd.f32 0.0, %v1948
        %v1950 = vpop.f32.mrb[0].mxu0
        %v1951 = vpop.f32.mrb[0].mxu0
        %v1952 = vadd.f32 0.0, %v1951
        %v1953 = vpop.f32.mrb[0].mxu0
        %1954 = vmatprep.mubr.bf16.mxu0 0
        %1955 = vmatmul.mubr.bf16.gmra.mrb[0].mxu0 %v1845
        %v1956 = vpop.f32.mrb[0].mxu0
        %v1957 = vadd.f32 0.0, %v1956
        %v1958 = vpop.f32.mrb[0].mxu0
        %v1959 = vpop.f32.mrb[0].mxu0
        %v1960 = vadd.f32 0.0, %v1959
        %v1961 = vpop.f32.mrb[0].mxu0
        %1962 = vmatprep.mubr.bf16.mxu0 0
        %1963 = vmatmul.mubr.bf16.gmra.mrb[0].mxu0 %v1848
        %v1964 = vpop.f32.mrb[0].mxu0
        %v1965 = vadd.f32 0.0, %v1964
        %v1966 = vpop.f32.mrb[0].mxu0
        %v1967 = vpop.f32.mrb[0].mxu0
        %v1968 = vadd.f32 0.0, %v1967
        %v1969 = vpop.f32.mrb[0].mxu0
        %1970 = vmatprep.mubr.bf16.mxu0 0
        %1971 = vmatmul.mubr.bf16.gmra.mrb[0].mxu0 %v1851
        %v1972 = vpop.f32.mrb[0].mxu0
        %v1973 = vadd.f32 0.0, %v1972
        %v1974 = vpop.f32.mrb[0].mxu0
        %v1975 = vpop.f32.mrb[0].mxu0
        %v1976 = vadd.f32 0.0, %v1975
        %v1977 = vpop.f32.mrb[0].mxu0
        %1978 = vmatprep.mubr.bf16.mxu0 0
        %1979 = vmatmul.mubr.bf16.gmra.mrb[0].mxu0 %v1854
        %v1980 = vpop.f32.mrb[0].mxu0
        %v1981 = vadd.f32 0.0, %v1980
        %v1982 = vpop.f32.mrb[0].mxu0
        %v1983 = vpop.f32.mrb[0].mxu0
        %v1984 = vadd.f32 0.0, %v1983
        %v1985 = vpop.f32.mrb[0].mxu0
        %1986 = vmatprep.mubr.bf16.mxu0 0
        %1987 = vmatmul.mubr.bf16.gmra.mrb[0].mxu0 %v1857
        %v1988 = vpop.f32.mrb[0].mxu0
        %v1989 = vadd.f32 0.0, %v1988
        %v1990 = vpop.f32.mrb[0].mxu0
        %v1991 = vpop.f32.mrb[0].mxu0
        %v1992 = vadd.f32 0.0, %v1991
        %v1993 = vpop.f32.mrb[0].mxu0
        %1994 = vmatprep.mubr.bf16.mxu0 0
        %1995 = vmatmul.mubr.bf16.gmra.mrb[0].mxu0 %v1860
        %v1996 = vpop.f32.mrb[0].mxu0
        %v1997 = vadd.f32 0.0, %v1996
        %v1998 = vpop.f32.mrb[0].mxu0
        %v1999 = vpop.f32.mrb[0].mxu0
        %v2000 = vadd.f32 0.0, %v1999
        %v2001 = vpop.f32.mrb[0].mxu0
        %2002 = vmatprep.mubr.bf16.mxu0 0
        %2003 = vmatmul.mubr.bf16.gmra.mrb[0].mxu0 %v1863
        %v2004 = vpop.f32.mrb[0].mxu0
        %v2005 = vadd.f32 0.0, %v2004
        %v2006 = vpop.f32.mrb[0].mxu0
        %v2007 = vpop.f32.mrb[0].mxu0
        %v2008 = vadd.f32 0.0, %v2007
        %v2009 = vpop.f32.mrb[0].mxu0
        %2010 = vmatprep.mubr.bf16.mxu0 0
        %2011 = vmatmul.mubr.bf16.gmra.mrb[0].mxu0 %v1866
        %v2012 = vpop.f32.mrb[0].mxu0
        %v2013 = vadd.f32 0.0, %v2012
        %v2014 = vpop.f32.mrb[0].mxu0
        %v2015 = vpop.f32.mrb[0].mxu0
        %v2016 = vadd.f32 0.0, %v2015
        %v2017 = vpop.f32.mrb[0].mxu0
        %2018 = vmatprep.mubr.bf16.mxu0 0
        %2019 = vmatmul.mubr.bf16.gmra.mrb[0].mxu0 %v1869
        %v2020 = vpop.f32.mrb[0].mxu0
        %v2021 = vadd.f32 0.0, %v2020
        %v2022 = vpop.f32.mrb[0].mxu0
        %v2023 = vpop.f32.mrb[0].mxu0
        %v2024 = vadd.f32 0.0, %v2023
        %v2025 = vpop.f32.mrb[0].mxu0
        %2026 = vmatprep.mubr.bf16.mxu0 0
        %2027 = vmatmul.mubr.bf16.gmra.mrb[0].mxu0 %v1872
        %v2028 = vpop.f32.mrb[0].mxu0
        %v2029 = vadd.f32 0.0, %v2028
        %v2030 = vpop.f32.mrb[0].mxu0
        %v2031 = vpop.f32.mrb[0].mxu0
        %v2032 = vadd.f32 0.0, %v2031
        %v2033 = vpop.f32.mrb[0].mxu0
        %2034 = vdwg.mxu0
        %v2035 = vadd.f32 %v1642, %v1909
        %v2036 = vadd.f32 %v1643, %v1912
        %v2037 = vadd.f32 %v1644, %v1917
        %v2038 = vadd.f32 %v1645, %v1920
        %v2039 = vadd.f32 %v1646, %v1925
        %v2040 = vadd.f32 %v1647, %v1928
        %v2041 = vadd.f32 %v1648, %v1933
        %v2042 = vadd.f32 %v1649, %v1936
        %v2043 = vadd.f32 %v1650, %v1941
        %v2044 = vadd.f32 %v1651, %v1944
        %v2045 = vadd.f32 %v1652, %v1949
        %v2046 = vadd.f32 %v1653, %v1952
        %v2047 = vadd.f32 %v1654, %v1957
        %v2048 = vadd.f32 %v1655, %v1960
        %v2049 = vadd.f32 %v1656, %v1965
        %v2050 = vadd.f32 %v1657, %v1968
        %v2051 = vadd.f32 %v1658, %v1973
        %v2052 = vadd.f32 %v1659, %v1976
        %v2053 = vadd.f32 %v1660, %v1981
        %v2054 = vadd.f32 %v1661, %v1984
        %v2055 = vadd.f32 %v1662, %v1989
        %v2056 = vadd.f32 %v1663, %v1992
        %v2057 = vadd.f32 %v1664, %v1997
        %v2058 = vadd.f32 %v1665, %v2000
        %v2059 = vadd.f32 %v1666, %v2005
        %v2060 = vadd.f32 %v1667, %v2008
        %v2061 = vadd.f32 %v1668, %v2013
        %v2062 = vadd.f32 %v1669, %v2016
        %v2063 = vadd.f32 %v1670, %v2021
        %v2064 = vadd.f32 %v1671, %v2024
        %v2065 = vadd.f32 %v1672, %v2029
        %v2066 = vadd.f32 %v1673, %v2032
        %s2067 = scalar_lea.vmem %s3, 160
        %v2068 = vld [vmem:[%s2067] sm:$0xf]
        %v2069 = vld [vmem:[%s2067 + $0x4] sm:$0xf]
        %v2070 = vld [vmem:[%s2067 + $0x8] sm:$0xf]
        %v2071 = vld [vmem:[%s2067 + $0xc] sm:$0xf]
        %v2072 = vld [vmem:[%s2067 + $0x10] sm:$0xf]
        %v2073 = vld [vmem:[%s2067 + $0x14] sm:$0xf]
        %v2074 = vld [vmem:[%s2067 + $0x18] sm:$0xf]
        %v2075 = vld [vmem:[%s2067 + $0x1c] sm:$0xf]
        %v2076 = vrot.slane %v1393, 1
        %v2077 = vrot.slane %v1394, 1
        %v2078 = vsel %vm983, %v2076, %v2077
        %v2079 = vrot.slane %v1395, 1
        %v2080 = vsel %vm983, %v2077, %v2079
        %v2081 = vrot.slane %v1396, 1
        %v2082 = vsel %vm983, %v2079, %v2081
        %v2083 = vrot.slane %v1397, 1
        %v2084 = vsel %vm983, %v2081, %v2083
        %v2085 = vrot.slane %v1398, 1
        %v2086 = vsel %vm983, %v2083, %v2085
        %v2087 = vrot.slane %v1399, 1
        %v2088 = vsel %vm983, %v2085, %v2087
        %v2089 = vrot.slane %v1400, 1
        %v2090 = vsel %vm983, %v2087, %v2089
        %v2091 = vrot.slane %v1401, 1
        %v2092 = vsel %vm983, %v2089, %v2091
        %v2093 = vrot.slane %v1402, 1
        %v2094 = vsel %vm983, %v2091, %v2093
        %v2095 = vrot.slane %v1403, 1
        %v2096 = vsel %vm983, %v2093, %v2095
        %v2097 = vrot.slane %v1404, 1
        %v2098 = vsel %vm983, %v2095, %v2097
        %v2099 = vrot.slane %v1405, 1
        %v2100 = vsel %vm983, %v2097, %v2099
        %v2101 = vrot.slane %v1406, 1
        %v2102 = vsel %vm983, %v2099, %v2101
        %v2103 = vrot.slane %v1407, 1
        %v2104 = vsel %vm983, %v2101, %v2103
        %v2105 = vrot.slane %v1408, 1
        %v2106 = vsel %vm983, %v2103, %v2105
        %v2107 = vrot.slane %v1685, 1
        %v2108 = vsel %vm983, %v2105, %v2107
        %v2117 = vunpack.c.l.b16 %v2068
        %v2118 = vunpack.c.l.b16 %v2069
        %v2119 = vunpack.c.l.b16 %v2070
        %v2120 = vunpack.c.l.b16 %v2071
        %v2121 = vunpack.c.l.b16 %v2072
        %v2122 = vunpack.c.l.b16 %v2073
        %v2123 = vunpack.c.l.b16 %v2074
        %v2124 = vunpack.c.l.b16 %v2075
        %v2125 = vpack.c.b16 %v2118, %v2117
        %v2126 = vpack.c.b16 %v2120, %v2119
        %v2127 = vpack.c.b16 %v2122, %v2121
        %v2128 = vpack.c.b16 %v2124, %v2123
        %v2134 = vsel %vm547, %v2078, 0
        %v2137 = vsel %vm547, %v2080, 0
        %v2140 = vsel %vm547, %v2082, 0
        %v2143 = vsel %vm547, %v2084, 0
        %v2146 = vsel %vm547, %v2086, 0
        %v2149 = vsel %vm547, %v2088, 0
        %v2152 = vsel %vm547, %v2090, 0
        %v2155 = vsel %vm547, %v2092, 0
        %v2158 = vsel %vm547, %v2094, 0
        %v2161 = vsel %vm547, %v2096, 0
        %v2164 = vsel %vm547, %v2098, 0
        %v2167 = vsel %vm547, %v2100, 0
        %v2170 = vsel %vm547, %v2102, 0
        %v2173 = vsel %vm547, %v2104, 0
        %v2176 = vsel %vm547, %v2106, 0
        %v2179 = vsel %vm547, %v2108, 0
        %2181 = vmatprep.subr.bf16.mxu0 0
        %2182 = vmatpush1.bf16.msra.mxu0 %v2125
        %2183 = vmatprep.subr.bf16.mxu0 0
        %2184 = vmatpush1.bf16.msra.mxu0 %v2126
        %2185 = vmatprep.subr.bf16.mxu0 0
        %2186 = vmatpush1.bf16.msra.mxu0 %v2127
        %2187 = vmatprep.subr.bf16.mxu0 0
        %2188 = vmatpush1.bf16.msra.mxu0 %v2128
        %2189 = vmatprep.subr.bf16.mxu0 0
        %2190 = vmatpush1.bf16.msra.mxu0 0
        %2191 = vmatprep.subr.bf16.mxu0 0
        %2192 = vmatpush1.bf16.msra.mxu0 0
        %2193 = vmatprep.subr.bf16.mxu0 0
        %2194 = vmatpush1.bf16.msra.mxu0 0
        %2195 = vmatprep.subr.bf16.mxu0 0
        %2196 = vmatpush1.bf16.msra.mxu0 0
        %2197 = vmatprep.subr.bf16.mxu0 0
        %2198 = vmatpush1.bf16.msra.mxu0 0
        %2199 = vmatprep.subr.bf16.mxu0 0
        %2200 = vmatpush1.bf16.msra.mxu0 0
        %2201 = vmatprep.subr.bf16.mxu0 0
        %2202 = vmatpush1.bf16.msra.mxu0 0
        %2203 = vmatprep.subr.bf16.mxu0 0
        %2204 = vmatpush1.bf16.msra.mxu0 0
        %2205 = vmatprep.subr.bf16.mxu0 0
        %2206 = vmatpush1.bf16.msra.mxu0 0
        %2207 = vmatprep.subr.bf16.mxu0 0
        %2208 = vmatpush1.bf16.msra.mxu0 0
        %2209 = vmatprep.subr.bf16.mxu0 0
        %2210 = vmatpush1.bf16.msra.mxu0 0
        %2211 = vmatprep.subr.bf16.mxu0 0
        %2212 = vmatpush1.bf16.msra.mxu0 0
        %2213 = vmatprep.mubr.bf16.mxu0 0
        %2214 = vmatmul.mubr.bf16.gmra.mrb[0].mxu0 %v2134
        %v2215 = vpop.f32.mrb[0].mxu0
        %v2216 = vadd.f32 0.0, %v2215
        %v2217 = vpop.f32.mrb[0].mxu0
        %v2218 = vpop.f32.mrb[0].mxu0
        %v2219 = vadd.f32 0.0, %v2218
        %v2220 = vpop.f32.mrb[0].mxu0
        %2221 = vmatprep.mubr.bf16.mxu0 0
        %2222 = vmatmul.mubr.bf16.gmra.mrb[0].mxu0 %v2137
        %v2223 = vpop.f32.mrb[0].mxu0
        %v2224 = vadd.f32 0.0, %v2223
        %v2225 = vpop.f32.mrb[0].mxu0
        %v2226 = vpop.f32.mrb[0].mxu0
        %v2227 = vadd.f32 0.0, %v2226
        %v2228 = vpop.f32.mrb[0].mxu0
        %2229 = vmatprep.mubr.bf16.mxu0 0
        %2230 = vmatmul.mubr.bf16.gmra.mrb[0].mxu0 %v2140
        %v2231 = vpop.f32.mrb[0].mxu0
        %v2232 = vadd.f32 0.0, %v2231
        %v2233 = vpop.f32.mrb[0].mxu0
        %v2234 = vpop.f32.mrb[0].mxu0
        %v2235 = vadd.f32 0.0, %v2234
        %v2236 = vpop.f32.mrb[0].mxu0
        %2237 = vmatprep.mubr.bf16.mxu0 0
        %2238 = vmatmul.mubr.bf16.gmra.mrb[0].mxu0 %v2143
        %v2239 = vpop.f32.mrb[0].mxu0
        %v2240 = vadd.f32 0.0, %v2239
        %v2241 = vpop.f32.mrb[0].mxu0
        %v2242 = vpop.f32.mrb[0].mxu0
        %v2243 = vadd.f32 0.0, %v2242
        %v2244 = vpop.f32.mrb[0].mxu0
        %2245 = vmatprep.mubr.bf16.mxu0 0
        %2246 = vmatmul.mubr.bf16.gmra.mrb[0].mxu0 %v2146
        %v2247 = vpop.f32.mrb[0].mxu0
        %v2248 = vadd.f32 0.0, %v2247
        %v2249 = vpop.f32.mrb[0].mxu0
        %v2250 = vpop.f32.mrb[0].mxu0
        %v2251 = vadd.f32 0.0, %v2250
        %v2252 = vpop.f32.mrb[0].mxu0
        %2253 = vmatprep.mubr.bf16.mxu0 0
        %2254 = vmatmul.mubr.bf16.gmra.mrb[0].mxu0 %v2149
        %v2255 = vpop.f32.mrb[0].mxu0
        %v2256 = vadd.f32 0.0, %v2255
        %v2257 = vpop.f32.mrb[0].mxu0
        %v2258 = vpop.f32.mrb[0].mxu0
        %v2259 = vadd.f32 0.0, %v2258
        %v2260 = vpop.f32.mrb[0].mxu0
        %2261 = vmatprep.mubr.bf16.mxu0 0
        %2262 = vmatmul.mubr.bf16.gmra.mrb[0].mxu0 %v2152
        %v2263 = vpop.f32.mrb[0].mxu0
        %v2264 = vadd.f32 0.0, %v2263
        %v2265 = vpop.f32.mrb[0].mxu0
        %v2266 = vpop.f32.mrb[0].mxu0
        %v2267 = vadd.f32 0.0, %v2266
        %v2268 = vpop.f32.mrb[0].mxu0
        %2269 = vmatprep.mubr.bf16.mxu0 0
        %2270 = vmatmul.mubr.bf16.gmra.mrb[0].mxu0 %v2155
        %v2271 = vpop.f32.mrb[0].mxu0
        %v2272 = vadd.f32 0.0, %v2271
        %v2273 = vpop.f32.mrb[0].mxu0
        %v2274 = vpop.f32.mrb[0].mxu0
        %v2275 = vadd.f32 0.0, %v2274
        %v2276 = vpop.f32.mrb[0].mxu0
        %2277 = vmatprep.mubr.bf16.mxu0 0
        %2278 = vmatmul.mubr.bf16.gmra.mrb[0].mxu0 %v2158
        %v2279 = vpop.f32.mrb[0].mxu0
        %v2280 = vadd.f32 0.0, %v2279
        %v2281 = vpop.f32.mrb[0].mxu0
        %v2282 = vpop.f32.mrb[0].mxu0
        %v2283 = vadd.f32 0.0, %v2282
        %v2284 = vpop.f32.mrb[0].mxu0
        %2285 = vmatprep.mubr.bf16.mxu0 0
        %2286 = vmatmul.mubr.bf16.gmra.mrb[0].mxu0 %v2161
        %v2287 = vpop.f32.mrb[0].mxu0
        %v2288 = vadd.f32 0.0, %v2287
        %v2289 = vpop.f32.mrb[0].mxu0
        %v2290 = vpop.f32.mrb[0].mxu0
        %v2291 = vadd.f32 0.0, %v2290
        %v2292 = vpop.f32.mrb[0].mxu0
        %2293 = vmatprep.mubr.bf16.mxu0 0
        %2294 = vmatmul.mubr.bf16.gmra.mrb[0].mxu0 %v2164
        %v2295 = vpop.f32.mrb[0].mxu0
        %v2296 = vadd.f32 0.0, %v2295
        %v2297 = vpop.f32.mrb[0].mxu0
        %v2298 = vpop.f32.mrb[0].mxu0
        %v2299 = vadd.f32 0.0, %v2298
        %v2300 = vpop.f32.mrb[0].mxu0
        %2301 = vmatprep.mubr.bf16.mxu0 0
        %2302 = vmatmul.mubr.bf16.gmra.mrb[0].mxu0 %v2167
        %v2303 = vpop.f32.mrb[0].mxu0
        %v2304 = vadd.f32 0.0, %v2303
        %v2305 = vpop.f32.mrb[0].mxu0
        %v2306 = vpop.f32.mrb[0].mxu0
        %v2307 = vadd.f32 0.0, %v2306
        %v2308 = vpop.f32.mrb[0].mxu0
        %2309 = vmatprep.mubr.bf16.mxu0 0
        %2310 = vmatmul.mubr.bf16.gmra.mrb[0].mxu0 %v2170
        %v2311 = vpop.f32.mrb[0].mxu0
        %v2312 = vadd.f32 0.0, %v2311
        %v2313 = vpop.f32.mrb[0].mxu0
        %v2314 = vpop.f32.mrb[0].mxu0
        %v2315 = vadd.f32 0.0, %v2314
        %v2316 = vpop.f32.mrb[0].mxu0
        %2317 = vmatprep.mubr.bf16.mxu0 0
        %2318 = vmatmul.mubr.bf16.gmra.mrb[0].mxu0 %v2173
        %v2319 = vpop.f32.mrb[0].mxu0
        %v2320 = vadd.f32 0.0, %v2319
        %v2321 = vpop.f32.mrb[0].mxu0
        %v2322 = vpop.f32.mrb[0].mxu0
        %v2323 = vadd.f32 0.0, %v2322
        %v2324 = vpop.f32.mrb[0].mxu0
        %2325 = vmatprep.mubr.bf16.mxu0 0
        %2326 = vmatmul.mubr.bf16.gmra.mrb[0].mxu0 %v2176
        %v2327 = vpop.f32.mrb[0].mxu0
        %v2328 = vadd.f32 0.0, %v2327
        %v2329 = vpop.f32.mrb[0].mxu0
        %v2330 = vpop.f32.mrb[0].mxu0
        %v2331 = vadd.f32 0.0, %v2330
        %v2332 = vpop.f32.mrb[0].mxu0
        %2333 = vmatprep.mubr.bf16.mxu0 0
        %2334 = vmatmul.mubr.bf16.gmra.mrb[0].mxu0 %v2179
        %v2335 = vpop.f32.mrb[0].mxu0
        %v2336 = vadd.f32 0.0, %v2335
        %v2337 = vpop.f32.mrb[0].mxu0
        %v2338 = vpop.f32.mrb[0].mxu0
        %v2339 = vadd.f32 0.0, %v2338
        %v2340 = vpop.f32.mrb[0].mxu0
        %2341 = vdwg.mxu0
        %v2342 = vadd.f32 %v2035, %v2216
        %v2343 = vadd.f32 %v2036, %v2219
        %v2344 = vadd.f32 %v2037, %v2224
        %v2345 = vadd.f32 %v2038, %v2227
        %v2346 = vadd.f32 %v2039, %v2232
        %v2347 = vadd.f32 %v2040, %v2235
        %v2348 = vadd.f32 %v2041, %v2240
        %v2349 = vadd.f32 %v2042, %v2243
        %v2350 = vadd.f32 %v2043, %v2248
        %v2351 = vadd.f32 %v2044, %v2251
        %v2352 = vadd.f32 %v2045, %v2256
        %v2353 = vadd.f32 %v2046, %v2259
        %v2354 = vadd.f32 %v2047, %v2264
        %v2355 = vadd.f32 %v2048, %v2267
        %v2356 = vadd.f32 %v2049, %v2272
        %v2357 = vadd.f32 %v2050, %v2275
        %v2358 = vadd.f32 %v2051, %v2280
        %v2359 = vadd.f32 %v2052, %v2283
        %v2360 = vadd.f32 %v2053, %v2288
        %v2361 = vadd.f32 %v2054, %v2291
        %v2362 = vadd.f32 %v2055, %v2296
        %v2363 = vadd.f32 %v2056, %v2299
        %v2364 = vadd.f32 %v2057, %v2304
        %v2365 = vadd.f32 %v2058, %v2307
        %v2366 = vadd.f32 %v2059, %v2312
        %v2367 = vadd.f32 %v2060, %v2315
        %v2368 = vadd.f32 %v2061, %v2320
        %v2369 = vadd.f32 %v2062, %v2323
        %v2370 = vadd.f32 %v2063, %v2328
        %v2371 = vadd.f32 %v2064, %v2331
        %v2372 = vadd.f32 %v2065, %v2336
        %v2373 = vadd.f32 %v2066, %v2339
        %s2374 = smul.u32 %s252, 2
        %s2375 = sadd.s32 %s251, %s2374
        %s2376 = sshra.s32 %s2375, 3
        %s2377 = sand.u32 %s2375, 7
        %s2378 = smul.addr %s2376, 4
        %s2379 = scalar_lea.vmem %s248, %s2378
        %v2380 = vld [vmem:[%s2379] sm:$0xf]
        %v2381 = vld [vmem:[%s2379 + $0x4] sm:$0xf]
        %v2382 = vld [vmem:[%s2379 + $0x8] sm:$0xf]
        %v2383 = vld [vmem:[%s2379 + $0xc] sm:$0xf]
        %v2384 = vld [vmem:[%s2379 + $0x10] sm:$0xf]
        %v2385 = vld [vmem:[%s2379 + $0x14] sm:$0xf]
        %v2386 = vld [vmem:[%s2379 + $0x18] sm:$0xf]
        %v2387 = vld [vmem:[%s2379 + $0x1c] sm:$0xf]
        %v2388 = vld [vmem:[%s2379 + $0x20] sm:$0xf]
        %v2389 = vld [vmem:[%s2379 + $0x24] sm:$0xf]
        %v2390 = vld [vmem:[%s2379 + $0x28] sm:$0xf]
        %v2391 = vld [vmem:[%s2379 + $0x2c] sm:$0xf]
        %v2392 = vld [vmem:[%s2379 + $0x30] sm:$0xf]
        %v2393 = vld [vmem:[%s2379 + $0x34] sm:$0xf]
        %v2394 = vld [vmem:[%s2379 + $0x38] sm:$0xf]
        %v2395 = vld [vmem:[%s2379 + $0x3c] sm:$0xf]
        %v2396 = vld [vmem:[%s2379 + $0x40] sm:$0xf]
        %v2397 = vld [vmem:[%s2379 + $0x44] sm:$0xf]
        %v2398 = vld [vmem:[%s2379 + $0x48] sm:$0xf]
        %v2399 = vld [vmem:[%s2379 + $0x4c] sm:$0xf]
        %v2400 = vld [vmem:[%s2379 + $0x50] sm:$0xf]
        %v2401 = vld [vmem:[%s2379 + $0x54] sm:$0xf]
        %v2402 = vld [vmem:[%s2379 + $0x58] sm:$0xf]
        %v2403 = vld [vmem:[%s2379 + $0x5c] sm:$0xf]
        %v2404 = vld [vmem:[%s2379 + $0x60] sm:$0xf]
        %v2405 = vld [vmem:[%s2379 + $0x64] sm:$0xf]
        %v2406 = vld [vmem:[%s2379 + $0x68] sm:$0xf]
        %v2407 = vld [vmem:[%s2379 + $0x6c] sm:$0xf]
        %v2408 = vld [vmem:[%s2379 + $0x70] sm:$0xf]
        %v2409 = vld [vmem:[%s2379 + $0x74] sm:$0xf]
        %v2410 = vld [vmem:[%s2379 + $0x78] sm:$0xf]
        %v2411 = vld [vmem:[%s2379 + $0x7c] sm:$0xf]
        %v2412 = vld [vmem:[%s2379 + $0x80] sm:$0xf]
        %s2413 = scalar_lea.vmem %s3, 192
        %v2414 = vld [vmem:[%s2413] sm:$0xf]
        %v2415 = vld [vmem:[%s2413 + $0x4] sm:$0xf]
        %v2416 = vld [vmem:[%s2413 + $0x8] sm:$0xf]
        %v2417 = vld [vmem:[%s2413 + $0xc] sm:$0xf]
        %v2418 = vld [vmem:[%s2413 + $0x10] sm:$0xf]
        %v2419 = vld [vmem:[%s2413 + $0x14] sm:$0xf]
        %v2420 = vld [vmem:[%s2413 + $0x18] sm:$0xf]
        %v2421 = vld [vmem:[%s2413 + $0x1c] sm:$0xf]
        %v2454 = vunpack.c.l.b16 %v2380
        %v2455 = vunpack.c.l.b16 %v2381
        %v2456 = vunpack.c.l.b16 %v2382
        %v2457 = vunpack.c.l.b16 %v2383
        %v2458 = vunpack.c.l.b16 %v2384
        %v2459 = vunpack.c.l.b16 %v2385
        %v2460 = vunpack.c.l.b16 %v2386
        %v2461 = vunpack.c.l.b16 %v2387
        %v2462 = vunpack.c.l.b16 %v2388
        %v2463 = vunpack.c.l.b16 %v2389
        %v2464 = vunpack.c.l.b16 %v2390
        %v2465 = vunpack.c.l.b16 %v2391
        %v2466 = vunpack.c.l.b16 %v2392
        %v2467 = vunpack.c.l.b16 %v2393
        %v2468 = vunpack.c.l.b16 %v2394
        %v2469 = vunpack.c.l.b16 %v2395
        %v2470 = vunpack.c.l.b16 %v2396
        %v2471 = vunpack.c.l.b16 %v2397
        %v2472 = vunpack.c.l.b16 %v2398
        %v2473 = vunpack.c.l.b16 %v2399
        %v2474 = vunpack.c.l.b16 %v2400
        %v2475 = vunpack.c.l.b16 %v2401
        %v2476 = vunpack.c.l.b16 %v2402
        %v2477 = vunpack.c.l.b16 %v2403
        %v2478 = vunpack.c.l.b16 %v2404
        %v2479 = vunpack.c.l.b16 %v2405
        %v2480 = vunpack.c.l.b16 %v2406
        %v2481 = vunpack.c.l.b16 %v2407
        %v2482 = vunpack.c.l.b16 %v2408
        %v2483 = vunpack.c.l.b16 %v2409
        %v2484 = vunpack.c.l.b16 %v2410
        %v2485 = vunpack.c.l.b16 %v2411
        %v2486 = vpack.c.b16 %v2455, %v2454
        %v2487 = vpack.c.b16 %v2457, %v2456
        %v2488 = vpack.c.b16 %v2459, %v2458
        %v2489 = vpack.c.b16 %v2461, %v2460
        %v2490 = vpack.c.b16 %v2463, %v2462
        %v2491 = vpack.c.b16 %v2465, %v2464
        %v2492 = vpack.c.b16 %v2467, %v2466
        %v2493 = vpack.c.b16 %v2469, %v2468
        %v2494 = vpack.c.b16 %v2471, %v2470
        %v2495 = vpack.c.b16 %v2473, %v2472
        %v2496 = vpack.c.b16 %v2475, %v2474
        %v2497 = vpack.c.b16 %v2477, %v2476
        %v2498 = vpack.c.b16 %v2479, %v2478
        %v2499 = vpack.c.b16 %v2481, %v2480
        %v2500 = vpack.c.b16 %v2483, %v2482
        %v2501 = vpack.c.b16 %v2485, %v2484
        %v2510 = vunpack.c.l.b16 %v2414
        %v2511 = vunpack.c.l.b16 %v2415
        %v2512 = vunpack.c.l.b16 %v2416
        %v2513 = vunpack.c.l.b16 %v2417
        %v2514 = vunpack.c.l.b16 %v2418
        %v2515 = vunpack.c.l.b16 %v2419
        %v2516 = vunpack.c.l.b16 %v2420
        %v2517 = vunpack.c.l.b16 %v2421
        %v2518 = vpack.c.b16 %v2511, %v2510
        %v2519 = vpack.c.b16 %v2513, %v2512
        %v2520 = vpack.c.b16 %v2515, %v2514
        %v2521 = vpack.c.b16 %v2517, %v2516
        %v2527 = vsel %vm547, %v2486, 0
        %v2530 = vsel %vm547, %v2487, 0
        %v2533 = vsel %vm547, %v2488, 0
        %v2536 = vsel %vm547, %v2489, 0
        %v2539 = vsel %vm547, %v2490, 0
        %v2542 = vsel %vm547, %v2491, 0
        %v2545 = vsel %vm547, %v2492, 0
        %v2548 = vsel %vm547, %v2493, 0
        %v2551 = vsel %vm547, %v2494, 0
        %v2554 = vsel %vm547, %v2495, 0
        %v2557 = vsel %vm547, %v2496, 0
        %v2560 = vsel %vm547, %v2497, 0
        %v2563 = vsel %vm547, %v2498, 0
        %v2566 = vsel %vm547, %v2499, 0
        %v2569 = vsel %vm547, %v2500, 0
        %v2572 = vsel %vm547, %v2501, 0
        %2574 = vmatprep.subr.bf16.mxu0 0
        %2575 = vmatpush1.bf16.msra.mxu0 %v2518
        %2576 = vmatprep.subr.bf16.mxu0 0
        %2577 = vmatpush1.bf16.msra.mxu0 %v2519
        %2578 = vmatprep.subr.bf16.mxu0 0
        %2579 = vmatpush1.bf16.msra.mxu0 %v2520
        %2580 = vmatprep.subr.bf16.mxu0 0
        %2581 = vmatpush1.bf16.msra.mxu0 %v2521
        %2582 = vmatprep.subr.bf16.mxu0 0
        %2583 = vmatpush1.bf16.msra.mxu0 0
        %2584 = vmatprep.subr.bf16.mxu0 0
        %2585 = vmatpush1.bf16.msra.mxu0 0
        %2586 = vmatprep.subr.bf16.mxu0 0
        %2587 = vmatpush1.bf16.msra.mxu0 0
        %2588 = vmatprep.subr.bf16.mxu0 0
        %2589 = vmatpush1.bf16.msra.mxu0 0
        %2590 = vmatprep.subr.bf16.mxu0 0
        %2591 = vmatpush1.bf16.msra.mxu0 0
        %2592 = vmatprep.subr.bf16.mxu0 0
        %2593 = vmatpush1.bf16.msra.mxu0 0
        %2594 = vmatprep.subr.bf16.mxu0 0
        %2595 = vmatpush1.bf16.msra.mxu0 0
        %2596 = vmatprep.subr.bf16.mxu0 0
        %2597 = vmatpush1.bf16.msra.mxu0 0
        %2598 = vmatprep.subr.bf16.mxu0 0
        %2599 = vmatpush1.bf16.msra.mxu0 0
        %2600 = vmatprep.subr.bf16.mxu0 0
        %2601 = vmatpush1.bf16.msra.mxu0 0
        %2602 = vmatprep.subr.bf16.mxu0 0
        %2603 = vmatpush1.bf16.msra.mxu0 0
        %2604 = vmatprep.subr.bf16.mxu0 0
        %2605 = vmatpush1.bf16.msra.mxu0 0
        %2606 = vmatprep.mubr.bf16.mxu0 0
        %2607 = vmatmul.mubr.bf16.gmra.mrb[0].mxu0 %v2527
        %v2608 = vpop.f32.mrb[0].mxu0
        %v2609 = vadd.f32 0.0, %v2608
        %v2610 = vpop.f32.mrb[0].mxu0
        %v2611 = vpop.f32.mrb[0].mxu0
        %v2612 = vadd.f32 0.0, %v2611
        %v2613 = vpop.f32.mrb[0].mxu0
        %2614 = vmatprep.mubr.bf16.mxu0 0
        %2615 = vmatmul.mubr.bf16.gmra.mrb[0].mxu0 %v2530
        %v2616 = vpop.f32.mrb[0].mxu0
        %v2617 = vadd.f32 0.0, %v2616
        %v2618 = vpop.f32.mrb[0].mxu0
        %v2619 = vpop.f32.mrb[0].mxu0
        %v2620 = vadd.f32 0.0, %v2619
        %v2621 = vpop.f32.mrb[0].mxu0
        %2622 = vmatprep.mubr.bf16.mxu0 0
        %2623 = vmatmul.mubr.bf16.gmra.mrb[0].mxu0 %v2533
        %v2624 = vpop.f32.mrb[0].mxu0
        %v2625 = vadd.f32 0.0, %v2624
        %v2626 = vpop.f32.mrb[0].mxu0
        %v2627 = vpop.f32.mrb[0].mxu0
        %v2628 = vadd.f32 0.0, %v2627
        %v2629 = vpop.f32.mrb[0].mxu0
        %2630 = vmatprep.mubr.bf16.mxu0 0
        %2631 = vmatmul.mubr.bf16.gmra.mrb[0].mxu0 %v2536
        %v2632 = vpop.f32.mrb[0].mxu0
        %v2633 = vadd.f32 0.0, %v2632
        %v2634 = vpop.f32.mrb[0].mxu0
        %v2635 = vpop.f32.mrb[0].mxu0
        %v2636 = vadd.f32 0.0, %v2635
        %v2637 = vpop.f32.mrb[0].mxu0
        %2638 = vmatprep.mubr.bf16.mxu0 0
        %2639 = vmatmul.mubr.bf16.gmra.mrb[0].mxu0 %v2539
        %v2640 = vpop.f32.mrb[0].mxu0
        %v2641 = vadd.f32 0.0, %v2640
        %v2642 = vpop.f32.mrb[0].mxu0
        %v2643 = vpop.f32.mrb[0].mxu0
        %v2644 = vadd.f32 0.0, %v2643
        %v2645 = vpop.f32.mrb[0].mxu0
        %2646 = vmatprep.mubr.bf16.mxu0 0
        %2647 = vmatmul.mubr.bf16.gmra.mrb[0].mxu0 %v2542
        %v2648 = vpop.f32.mrb[0].mxu0
        %v2649 = vadd.f32 0.0, %v2648
        %v2650 = vpop.f32.mrb[0].mxu0
        %v2651 = vpop.f32.mrb[0].mxu0
        %v2652 = vadd.f32 0.0, %v2651
        %v2653 = vpop.f32.mrb[0].mxu0
        %2654 = vmatprep.mubr.bf16.mxu0 0
        %2655 = vmatmul.mubr.bf16.gmra.mrb[0].mxu0 %v2545
        %v2656 = vpop.f32.mrb[0].mxu0
        %v2657 = vadd.f32 0.0, %v2656
        %v2658 = vpop.f32.mrb[0].mxu0
        %v2659 = vpop.f32.mrb[0].mxu0
        %v2660 = vadd.f32 0.0, %v2659
        %v2661 = vpop.f32.mrb[0].mxu0
        %2662 = vmatprep.mubr.bf16.mxu0 0
        %2663 = vmatmul.mubr.bf16.gmra.mrb[0].mxu0 %v2548
        %v2664 = vpop.f32.mrb[0].mxu0
        %v2665 = vadd.f32 0.0, %v2664
        %v2666 = vpop.f32.mrb[0].mxu0
        %v2667 = vpop.f32.mrb[0].mxu0
        %v2668 = vadd.f32 0.0, %v2667
        %v2669 = vpop.f32.mrb[0].mxu0
        %2670 = vmatprep.mubr.bf16.mxu0 0
        %2671 = vmatmul.mubr.bf16.gmra.mrb[0].mxu0 %v2551
        %v2672 = vpop.f32.mrb[0].mxu0
        %v2673 = vadd.f32 0.0, %v2672
        %v2674 = vpop.f32.mrb[0].mxu0
        %v2675 = vpop.f32.mrb[0].mxu0
        %v2676 = vadd.f32 0.0, %v2675
        %v2677 = vpop.f32.mrb[0].mxu0
        %2678 = vmatprep.mubr.bf16.mxu0 0
        %2679 = vmatmul.mubr.bf16.gmra.mrb[0].mxu0 %v2554
        %v2680 = vpop.f32.mrb[0].mxu0
        %v2681 = vadd.f32 0.0, %v2680
        %v2682 = vpop.f32.mrb[0].mxu0
        %v2683 = vpop.f32.mrb[0].mxu0
        %v2684 = vadd.f32 0.0, %v2683
        %v2685 = vpop.f32.mrb[0].mxu0
        %2686 = vmatprep.mubr.bf16.mxu0 0
        %2687 = vmatmul.mubr.bf16.gmra.mrb[0].mxu0 %v2557
        %v2688 = vpop.f32.mrb[0].mxu0
        %v2689 = vadd.f32 0.0, %v2688
        %v2690 = vpop.f32.mrb[0].mxu0
        %v2691 = vpop.f32.mrb[0].mxu0
        %v2692 = vadd.f32 0.0, %v2691
        %v2693 = vpop.f32.mrb[0].mxu0
        %2694 = vmatprep.mubr.bf16.mxu0 0
        %2695 = vmatmul.mubr.bf16.gmra.mrb[0].mxu0 %v2560
        %v2696 = vpop.f32.mrb[0].mxu0
        %v2697 = vadd.f32 0.0, %v2696
        %v2698 = vpop.f32.mrb[0].mxu0
        %v2699 = vpop.f32.mrb[0].mxu0
        %v2700 = vadd.f32 0.0, %v2699
        %v2701 = vpop.f32.mrb[0].mxu0
        %2702 = vmatprep.mubr.bf16.mxu0 0
        %2703 = vmatmul.mubr.bf16.gmra.mrb[0].mxu0 %v2563
        %v2704 = vpop.f32.mrb[0].mxu0
        %v2705 = vadd.f32 0.0, %v2704
        %v2706 = vpop.f32.mrb[0].mxu0
        %v2707 = vpop.f32.mrb[0].mxu0
        %v2708 = vadd.f32 0.0, %v2707
        %v2709 = vpop.f32.mrb[0].mxu0
        %2710 = vmatprep.mubr.bf16.mxu0 0
        %2711 = vmatmul.mubr.bf16.gmra.mrb[0].mxu0 %v2566
        %v2712 = vpop.f32.mrb[0].mxu0
        %v2713 = vadd.f32 0.0, %v2712
        %v2714 = vpop.f32.mrb[0].mxu0
        %v2715 = vpop.f32.mrb[0].mxu0
        %v2716 = vadd.f32 0.0, %v2715
        %v2717 = vpop.f32.mrb[0].mxu0
        %2718 = vmatprep.mubr.bf16.mxu0 0
        %2719 = vmatmul.mubr.bf16.gmra.mrb[0].mxu0 %v2569
        %v2720 = vpop.f32.mrb[0].mxu0
        %v2721 = vadd.f32 0.0, %v2720
        %v2722 = vpop.f32.mrb[0].mxu0
        %v2723 = vpop.f32.mrb[0].mxu0
        %v2724 = vadd.f32 0.0, %v2723
        %v2725 = vpop.f32.mrb[0].mxu0
        %2726 = vmatprep.mubr.bf16.mxu0 0
        %2727 = vmatmul.mubr.bf16.gmra.mrb[0].mxu0 %v2572
        %v2728 = vpop.f32.mrb[0].mxu0
        %v2729 = vadd.f32 0.0, %v2728
        %v2730 = vpop.f32.mrb[0].mxu0
        %v2731 = vpop.f32.mrb[0].mxu0
        %v2732 = vadd.f32 0.0, %v2731
        %v2733 = vpop.f32.mrb[0].mxu0
        %2734 = vdwg.mxu0
        %v2735 = vadd.f32 %v2342, %v2609
        %v2736 = vadd.f32 %v2343, %v2612
        %v2737 = vadd.f32 %v2344, %v2617
        %v2738 = vadd.f32 %v2345, %v2620
        %v2739 = vadd.f32 %v2346, %v2625
        %v2740 = vadd.f32 %v2347, %v2628
        %v2741 = vadd.f32 %v2348, %v2633
        %v2742 = vadd.f32 %v2349, %v2636
        %v2743 = vadd.f32 %v2350, %v2641
        %v2744 = vadd.f32 %v2351, %v2644
        %v2745 = vadd.f32 %v2352, %v2649
        %v2746 = vadd.f32 %v2353, %v2652
        %v2747 = vadd.f32 %v2354, %v2657
        %v2748 = vadd.f32 %v2355, %v2660
        %v2749 = vadd.f32 %v2356, %v2665
        %v2750 = vadd.f32 %v2357, %v2668
        %v2751 = vadd.f32 %v2358, %v2673
        %v2752 = vadd.f32 %v2359, %v2676
        %v2753 = vadd.f32 %v2360, %v2681
        %v2754 = vadd.f32 %v2361, %v2684
        %v2755 = vadd.f32 %v2362, %v2689
        %v2756 = vadd.f32 %v2363, %v2692
        %v2757 = vadd.f32 %v2364, %v2697
        %v2758 = vadd.f32 %v2365, %v2700
        %v2759 = vadd.f32 %v2366, %v2705
        %v2760 = vadd.f32 %v2367, %v2708
        %v2761 = vadd.f32 %v2368, %v2713
        %v2762 = vadd.f32 %v2369, %v2716
        %v2763 = vadd.f32 %v2370, %v2721
        %v2764 = vadd.f32 %v2371, %v2724
        %v2765 = vadd.f32 %v2372, %v2729
        %v2766 = vadd.f32 %v2373, %v2732
        %s2767 = scalar_lea.vmem %s3, 224
        %v2768 = vld [vmem:[%s2767] sm:$0xf]
        %v2769 = vld [vmem:[%s2767 + $0x4] sm:$0xf]
        %v2770 = vld [vmem:[%s2767 + $0x8] sm:$0xf]
        %v2771 = vld [vmem:[%s2767 + $0xc] sm:$0xf]
        %v2772 = vld [vmem:[%s2767 + $0x10] sm:$0xf]
        %v2773 = vld [vmem:[%s2767 + $0x14] sm:$0xf]
        %v2774 = vld [vmem:[%s2767 + $0x18] sm:$0xf]
        %v2775 = vld [vmem:[%s2767 + $0x1c] sm:$0xf]
        %v2777 = vunpack.c.l.b16 %v2412
        %v2778 = vpack.c.b16 %v2777, %v2777
        %v2779 = vshrl.u32 %v2486, 16
        %v2781 = vshll.u32 %v2486, 16
        %v2783 = vrot.slane %v2781, 1
        %v2784 = vor.u32 %v2779, %v2783
        %v2785 = vshll.u32 %v2487, 16
        %v2787 = vrot.slane %v2785, 1
        %v2788 = vsel %vm390, %v2784, %v2787
        %v2789 = vshrl.u32 %v2487, 16
        %v2791 = vor.u32 %v2789, %v2787
        %v2792 = vshll.u32 %v2488, 16
        %v2794 = vrot.slane %v2792, 1
        %v2795 = vsel %vm390, %v2791, %v2794
        %v2796 = vshrl.u32 %v2488, 16
        %v2798 = vor.u32 %v2796, %v2794
        %v2799 = vshll.u32 %v2489, 16
        %v2801 = vrot.slane %v2799, 1
        %v2802 = vsel %vm390, %v2798, %v2801
        %v2803 = vshrl.u32 %v2489, 16
        %v2805 = vor.u32 %v2803, %v2801
        %v2806 = vshll.u32 %v2490, 16
        %v2808 = vrot.slane %v2806, 1
        %v2809 = vsel %vm390, %v2805, %v2808
        %v2810 = vshrl.u32 %v2490, 16
        %v2812 = vor.u32 %v2810, %v2808
        %v2813 = vshll.u32 %v2491, 16
        %v2815 = vrot.slane %v2813, 1
        %v2816 = vsel %vm390, %v2812, %v2815
        %v2817 = vshrl.u32 %v2491, 16
        %v2819 = vor.u32 %v2817, %v2815
        %v2820 = vshll.u32 %v2492, 16
        %v2822 = vrot.slane %v2820, 1
        %v2823 = vsel %vm390, %v2819, %v2822
        %v2824 = vshrl.u32 %v2492, 16
        %v2826 = vor.u32 %v2824, %v2822
        %v2827 = vshll.u32 %v2493, 16
        %v2829 = vrot.slane %v2827, 1
        %v2830 = vsel %vm390, %v2826, %v2829
        %v2831 = vshrl.u32 %v2493, 16
        %v2833 = vor.u32 %v2831, %v2829
        %v2834 = vshll.u32 %v2494, 16
        %v2836 = vrot.slane %v2834, 1
        %v2837 = vsel %vm390, %v2833, %v2836
        %v2838 = vshrl.u32 %v2494, 16
        %v2840 = vor.u32 %v2838, %v2836
        %v2841 = vshll.u32 %v2495, 16
        %v2843 = vrot.slane %v2841, 1
        %v2844 = vsel %vm390, %v2840, %v2843
        %v2845 = vshrl.u32 %v2495, 16
        %v2847 = vor.u32 %v2845, %v2843
        %v2848 = vshll.u32 %v2496, 16
        %v2850 = vrot.slane %v2848, 1
        %v2851 = vsel %vm390, %v2847, %v2850
        %v2852 = vshrl.u32 %v2496, 16
        %v2854 = vor.u32 %v2852, %v2850
        %v2855 = vshll.u32 %v2497, 16
        %v2857 = vrot.slane %v2855, 1
        %v2858 = vsel %vm390, %v2854, %v2857
        %v2859 = vshrl.u32 %v2497, 16
        %v2861 = vor.u32 %v2859, %v2857
        %v2862 = vshll.u32 %v2498, 16
        %v2864 = vrot.slane %v2862, 1
        %v2865 = vsel %vm390, %v2861, %v2864
        %v2866 = vshrl.u32 %v2498, 16
        %v2868 = vor.u32 %v2866, %v2864
        %v2869 = vshll.u32 %v2499, 16
        %v2871 = vrot.slane %v2869, 1
        %v2872 = vsel %vm390, %v2868, %v2871
        %v2873 = vshrl.u32 %v2499, 16
        %v2875 = vor.u32 %v2873, %v2871
        %v2876 = vshll.u32 %v2500, 16
        %v2878 = vrot.slane %v2876, 1
        %v2879 = vsel %vm390, %v2875, %v2878
        %v2880 = vshrl.u32 %v2500, 16
        %v2882 = vor.u32 %v2880, %v2878
        %v2883 = vshll.u32 %v2501, 16
        %v2885 = vrot.slane %v2883, 1
        %v2886 = vsel %vm390, %v2882, %v2885
        %v2887 = vshrl.u32 %v2501, 16
        %v2889 = vor.u32 %v2887, %v2885
        %v2891 = vshll.u32 %v2778, 16
        %v2893 = vrot.slane %v2891, 1
        %v2894 = vsel %vm390, %v2889, %v2893
        %v2903 = vunpack.c.l.b16 %v2768
        %v2904 = vunpack.c.l.b16 %v2769
        %v2905 = vunpack.c.l.b16 %v2770
        %v2906 = vunpack.c.l.b16 %v2771
        %v2907 = vunpack.c.l.b16 %v2772
        %v2908 = vunpack.c.l.b16 %v2773
        %v2909 = vunpack.c.l.b16 %v2774
        %v2910 = vunpack.c.l.b16 %v2775
        %v2911 = vpack.c.b16 %v2904, %v2903
        %v2912 = vpack.c.b16 %v2906, %v2905
        %v2913 = vpack.c.b16 %v2908, %v2907
        %v2914 = vpack.c.b16 %v2910, %v2909
        %v2920 = vsel %vm547, %v2788, 0
        %v2923 = vsel %vm547, %v2795, 0
        %v2926 = vsel %vm547, %v2802, 0
        %v2929 = vsel %vm547, %v2809, 0
        %v2932 = vsel %vm547, %v2816, 0
        %v2935 = vsel %vm547, %v2823, 0
        %v2938 = vsel %vm547, %v2830, 0
        %v2941 = vsel %vm547, %v2837, 0
        %v2944 = vsel %vm547, %v2844, 0
        %v2947 = vsel %vm547, %v2851, 0
        %v2950 = vsel %vm547, %v2858, 0
        %v2953 = vsel %vm547, %v2865, 0
        %v2956 = vsel %vm547, %v2872, 0
        %v2959 = vsel %vm547, %v2879, 0
        %v2962 = vsel %vm547, %v2886, 0
        %v2965 = vsel %vm547, %v2894, 0
        %2967 = vmatprep.subr.bf16.mxu0 0
        %2968 = vmatpush1.bf16.msra.mxu0 %v2911
        %2969 = vmatprep.subr.bf16.mxu0 0
        %2970 = vmatpush1.bf16.msra.mxu0 %v2912
        %2971 = vmatprep.subr.bf16.mxu0 0
        %2972 = vmatpush1.bf16.msra.mxu0 %v2913
        %2973 = vmatprep.subr.bf16.mxu0 0
        %2974 = vmatpush1.bf16.msra.mxu0 %v2914
        %2975 = vmatprep.subr.bf16.mxu0 0
        %2976 = vmatpush1.bf16.msra.mxu0 0
        %2977 = vmatprep.subr.bf16.mxu0 0
        %2978 = vmatpush1.bf16.msra.mxu0 0
        %2979 = vmatprep.subr.bf16.mxu0 0
        %2980 = vmatpush1.bf16.msra.mxu0 0
        %2981 = vmatprep.subr.bf16.mxu0 0
        %2982 = vmatpush1.bf16.msra.mxu0 0
        %2983 = vmatprep.subr.bf16.mxu0 0
        %2984 = vmatpush1.bf16.msra.mxu0 0
        %2985 = vmatprep.subr.bf16.mxu0 0
        %2986 = vmatpush1.bf16.msra.mxu0 0
        %2987 = vmatprep.subr.bf16.mxu0 0
        %2988 = vmatpush1.bf16.msra.mxu0 0
        %2989 = vmatprep.subr.bf16.mxu0 0
        %2990 = vmatpush1.bf16.msra.mxu0 0
        %2991 = vmatprep.subr.bf16.mxu0 0
        %2992 = vmatpush1.bf16.msra.mxu0 0
        %2993 = vmatprep.subr.bf16.mxu0 0
        %2994 = vmatpush1.bf16.msra.mxu0 0
        %2995 = vmatprep.subr.bf16.mxu0 0
        %2996 = vmatpush1.bf16.msra.mxu0 0
        %2997 = vmatprep.subr.bf16.mxu0 0
        %2998 = vmatpush1.bf16.msra.mxu0 0
        %2999 = vmatprep.mubr.bf16.mxu0 0
        %3000 = vmatmul.mubr.bf16.gmra.mrb[0].mxu0 %v2920
        %v3001 = vpop.f32.mrb[0].mxu0
        %v3002 = vadd.f32 0.0, %v3001
        %v3003 = vpop.f32.mrb[0].mxu0
        %v3004 = vpop.f32.mrb[0].mxu0
        %v3005 = vadd.f32 0.0, %v3004
        %v3006 = vpop.f32.mrb[0].mxu0
        %3007 = vmatprep.mubr.bf16.mxu0 0
        %3008 = vmatmul.mubr.bf16.gmra.mrb[0].mxu0 %v2923
        %v3009 = vpop.f32.mrb[0].mxu0
        %v3010 = vadd.f32 0.0, %v3009
        %v3011 = vpop.f32.mrb[0].mxu0
        %v3012 = vpop.f32.mrb[0].mxu0
        %v3013 = vadd.f32 0.0, %v3012
        %v3014 = vpop.f32.mrb[0].mxu0
        %3015 = vmatprep.mubr.bf16.mxu0 0
        %3016 = vmatmul.mubr.bf16.gmra.mrb[0].mxu0 %v2926
        %v3017 = vpop.f32.mrb[0].mxu0
        %v3018 = vadd.f32 0.0, %v3017
        %v3019 = vpop.f32.mrb[0].mxu0
        %v3020 = vpop.f32.mrb[0].mxu0
        %v3021 = vadd.f32 0.0, %v3020
        %v3022 = vpop.f32.mrb[0].mxu0
        %3023 = vmatprep.mubr.bf16.mxu0 0
        %3024 = vmatmul.mubr.bf16.gmra.mrb[0].mxu0 %v2929
        %v3025 = vpop.f32.mrb[0].mxu0
        %v3026 = vadd.f32 0.0, %v3025
        %v3027 = vpop.f32.mrb[0].mxu0
        %v3028 = vpop.f32.mrb[0].mxu0
        %v3029 = vadd.f32 0.0, %v3028
        %v3030 = vpop.f32.mrb[0].mxu0
        %3031 = vmatprep.mubr.bf16.mxu0 0
        %3032 = vmatmul.mubr.bf16.gmra.mrb[0].mxu0 %v2932
        %v3033 = vpop.f32.mrb[0].mxu0
        %v3034 = vadd.f32 0.0, %v3033
        %v3035 = vpop.f32.mrb[0].mxu0
        %v3036 = vpop.f32.mrb[0].mxu0
        %v3037 = vadd.f32 0.0, %v3036
        %v3038 = vpop.f32.mrb[0].mxu0
        %3039 = vmatprep.mubr.bf16.mxu0 0
        %3040 = vmatmul.mubr.bf16.gmra.mrb[0].mxu0 %v2935
        %v3041 = vpop.f32.mrb[0].mxu0
        %v3042 = vadd.f32 0.0, %v3041
        %v3043 = vpop.f32.mrb[0].mxu0
        %v3044 = vpop.f32.mrb[0].mxu0
        %v3045 = vadd.f32 0.0, %v3044
        %v3046 = vpop.f32.mrb[0].mxu0
        %3047 = vmatprep.mubr.bf16.mxu0 0
        %3048 = vmatmul.mubr.bf16.gmra.mrb[0].mxu0 %v2938
        %v3049 = vpop.f32.mrb[0].mxu0
        %v3050 = vadd.f32 0.0, %v3049
        %v3051 = vpop.f32.mrb[0].mxu0
        %v3052 = vpop.f32.mrb[0].mxu0
        %v3053 = vadd.f32 0.0, %v3052
        %v3054 = vpop.f32.mrb[0].mxu0
        %3055 = vmatprep.mubr.bf16.mxu0 0
        %3056 = vmatmul.mubr.bf16.gmra.mrb[0].mxu0 %v2941
        %v3057 = vpop.f32.mrb[0].mxu0
        %v3058 = vadd.f32 0.0, %v3057
        %v3059 = vpop.f32.mrb[0].mxu0
        %v3060 = vpop.f32.mrb[0].mxu0
        %v3061 = vadd.f32 0.0, %v3060
        %v3062 = vpop.f32.mrb[0].mxu0
        %3063 = vmatprep.mubr.bf16.mxu0 0
        %3064 = vmatmul.mubr.bf16.gmra.mrb[0].mxu0 %v2944
        %v3065 = vpop.f32.mrb[0].mxu0
        %v3066 = vadd.f32 0.0, %v3065
        %v3067 = vpop.f32.mrb[0].mxu0
        %v3068 = vpop.f32.mrb[0].mxu0
        %v3069 = vadd.f32 0.0, %v3068
        %v3070 = vpop.f32.mrb[0].mxu0
        %3071 = vmatprep.mubr.bf16.mxu0 0
        %3072 = vmatmul.mubr.bf16.gmra.mrb[0].mxu0 %v2947
        %v3073 = vpop.f32.mrb[0].mxu0
        %v3074 = vadd.f32 0.0, %v3073
        %v3075 = vpop.f32.mrb[0].mxu0
        %v3076 = vpop.f32.mrb[0].mxu0
        %v3077 = vadd.f32 0.0, %v3076
        %v3078 = vpop.f32.mrb[0].mxu0
        %3079 = vmatprep.mubr.bf16.mxu0 0
        %3080 = vmatmul.mubr.bf16.gmra.mrb[0].mxu0 %v2950
        %v3081 = vpop.f32.mrb[0].mxu0
        %v3082 = vadd.f32 0.0, %v3081
        %v3083 = vpop.f32.mrb[0].mxu0
        %v3084 = vpop.f32.mrb[0].mxu0
        %v3085 = vadd.f32 0.0, %v3084
        %v3086 = vpop.f32.mrb[0].mxu0
        %3087 = vmatprep.mubr.bf16.mxu0 0
        %3088 = vmatmul.mubr.bf16.gmra.mrb[0].mxu0 %v2953
        %v3089 = vpop.f32.mrb[0].mxu0
        %v3090 = vadd.f32 0.0, %v3089
        %v3091 = vpop.f32.mrb[0].mxu0
        %v3092 = vpop.f32.mrb[0].mxu0
        %v3093 = vadd.f32 0.0, %v3092
        %v3094 = vpop.f32.mrb[0].mxu0
        %3095 = vmatprep.mubr.bf16.mxu0 0
        %3096 = vmatmul.mubr.bf16.gmra.mrb[0].mxu0 %v2956
        %v3097 = vpop.f32.mrb[0].mxu0
        %v3098 = vadd.f32 0.0, %v3097
        %v3099 = vpop.f32.mrb[0].mxu0
        %v3100 = vpop.f32.mrb[0].mxu0
        %v3101 = vadd.f32 0.0, %v3100
        %v3102 = vpop.f32.mrb[0].mxu0
        %3103 = vmatprep.mubr.bf16.mxu0 0
        %3104 = vmatmul.mubr.bf16.gmra.mrb[0].mxu0 %v2959
        %v3105 = vpop.f32.mrb[0].mxu0
        %v3106 = vadd.f32 0.0, %v3105
        %v3107 = vpop.f32.mrb[0].mxu0
        %v3108 = vpop.f32.mrb[0].mxu0
        %v3109 = vadd.f32 0.0, %v3108
        %v3110 = vpop.f32.mrb[0].mxu0
        %3111 = vmatprep.mubr.bf16.mxu0 0
        %3112 = vmatmul.mubr.bf16.gmra.mrb[0].mxu0 %v2962
        %v3113 = vpop.f32.mrb[0].mxu0
        %v3114 = vadd.f32 0.0, %v3113
        %v3115 = vpop.f32.mrb[0].mxu0
        %v3116 = vpop.f32.mrb[0].mxu0
        %v3117 = vadd.f32 0.0, %v3116
        %v3118 = vpop.f32.mrb[0].mxu0
        %3119 = vmatprep.mubr.bf16.mxu0 0
        %3120 = vmatmul.mubr.bf16.gmra.mrb[0].mxu0 %v2965
        %v3121 = vpop.f32.mrb[0].mxu0
        %v3122 = vadd.f32 0.0, %v3121
        %v3123 = vpop.f32.mrb[0].mxu0
        %v3124 = vpop.f32.mrb[0].mxu0
        %v3125 = vadd.f32 0.0, %v3124
        %v3126 = vpop.f32.mrb[0].mxu0
        %3127 = vdwg.mxu0
        %v3128 = vadd.f32 %v2735, %v3002
        %v3129 = vadd.f32 %v2736, %v3005
        %v3130 = vadd.f32 %v2737, %v3010
        %v3131 = vadd.f32 %v2738, %v3013
        %v3132 = vadd.f32 %v2739, %v3018
        %v3133 = vadd.f32 %v2740, %v3021
        %v3134 = vadd.f32 %v2741, %v3026
        %v3135 = vadd.f32 %v2742, %v3029
        %v3136 = vadd.f32 %v2743, %v3034
        %v3137 = vadd.f32 %v2744, %v3037
        %v3138 = vadd.f32 %v2745, %v3042
        %v3139 = vadd.f32 %v2746, %v3045
        %v3140 = vadd.f32 %v2747, %v3050
        %v3141 = vadd.f32 %v2748, %v3053
        %v3142 = vadd.f32 %v2749, %v3058
        %v3143 = vadd.f32 %v2750, %v3061
        %v3144 = vadd.f32 %v2751, %v3066
        %v3145 = vadd.f32 %v2752, %v3069
        %v3146 = vadd.f32 %v2753, %v3074
        %v3147 = vadd.f32 %v2754, %v3077
        %v3148 = vadd.f32 %v2755, %v3082
        %v3149 = vadd.f32 %v2756, %v3085
        %v3150 = vadd.f32 %v2757, %v3090
        %v3151 = vadd.f32 %v2758, %v3093
        %v3152 = vadd.f32 %v2759, %v3098
        %v3153 = vadd.f32 %v2760, %v3101
        %v3154 = vadd.f32 %v2761, %v3106
        %v3155 = vadd.f32 %v2762, %v3109
        %v3156 = vadd.f32 %v2763, %v3114
        %v3157 = vadd.f32 %v2764, %v3117
        %v3158 = vadd.f32 %v2765, %v3122
        %v3159 = vadd.f32 %v2766, %v3125
        %s3160 = scalar_lea.vmem %s3, 256
        %v3161 = vld [vmem:[%s3160] sm:$0xf]
        %v3162 = vld [vmem:[%s3160 + $0x4] sm:$0xf]
        %v3163 = vld [vmem:[%s3160 + $0x8] sm:$0xf]
        %v3164 = vld [vmem:[%s3160 + $0xc] sm:$0xf]
        %v3165 = vld [vmem:[%s3160 + $0x10] sm:$0xf]
        %v3166 = vld [vmem:[%s3160 + $0x14] sm:$0xf]
        %v3167 = vld [vmem:[%s3160 + $0x18] sm:$0xf]
        %v3168 = vld [vmem:[%s3160 + $0x1c] sm:$0xf]
        %v3169 = vrot.slane %v2486, 1
        %v3170 = vrot.slane %v2487, 1
        %v3171 = vsel %vm983, %v3169, %v3170
        %v3172 = vrot.slane %v2488, 1
        %v3173 = vsel %vm983, %v3170, %v3172
        %v3174 = vrot.slane %v2489, 1
        %v3175 = vsel %vm983, %v3172, %v3174
        %v3176 = vrot.slane %v2490, 1
        %v3177 = vsel %vm983, %v3174, %v3176
        %v3178 = vrot.slane %v2491, 1
        %v3179 = vsel %vm983, %v3176, %v3178
        %v3180 = vrot.slane %v2492, 1
        %v3181 = vsel %vm983, %v3178, %v3180
        %v3182 = vrot.slane %v2493, 1
        %v3183 = vsel %vm983, %v3180, %v3182
        %v3184 = vrot.slane %v2494, 1
        %v3185 = vsel %vm983, %v3182, %v3184
        %v3186 = vrot.slane %v2495, 1
        %v3187 = vsel %vm983, %v3184, %v3186
        %v3188 = vrot.slane %v2496, 1
        %v3189 = vsel %vm983, %v3186, %v3188
        %v3190 = vrot.slane %v2497, 1
        %v3191 = vsel %vm983, %v3188, %v3190
        %v3192 = vrot.slane %v2498, 1
        %v3193 = vsel %vm983, %v3190, %v3192
        %v3194 = vrot.slane %v2499, 1
        %v3195 = vsel %vm983, %v3192, %v3194
        %v3196 = vrot.slane %v2500, 1
        %v3197 = vsel %vm983, %v3194, %v3196
        %v3198 = vrot.slane %v2501, 1
        %v3199 = vsel %vm983, %v3196, %v3198
        %v3200 = vrot.slane %v2778, 1
        %v3201 = vsel %vm983, %v3198, %v3200
        %v3210 = vunpack.c.l.b16 %v3161
        %v3211 = vunpack.c.l.b16 %v3162
        %v3212 = vunpack.c.l.b16 %v3163
        %v3213 = vunpack.c.l.b16 %v3164
        %v3214 = vunpack.c.l.b16 %v3165
        %v3215 = vunpack.c.l.b16 %v3166
        %v3216 = vunpack.c.l.b16 %v3167
        %v3217 = vunpack.c.l.b16 %v3168
        %v3218 = vpack.c.b16 %v3211, %v3210
        %v3219 = vpack.c.b16 %v3213, %v3212
        %v3220 = vpack.c.b16 %v3215, %v3214
        %v3221 = vpack.c.b16 %v3217, %v3216
        %v3227 = vsel %vm547, %v3171, 0
        %v3230 = vsel %vm547, %v3173, 0
        %v3233 = vsel %vm547, %v3175, 0
        %v3236 = vsel %vm547, %v3177, 0
        %v3239 = vsel %vm547, %v3179, 0
        %v3242 = vsel %vm547, %v3181, 0
        %v3245 = vsel %vm547, %v3183, 0
        %v3248 = vsel %vm547, %v3185, 0
        %v3251 = vsel %vm547, %v3187, 0
        %v3254 = vsel %vm547, %v3189, 0
        %v3257 = vsel %vm547, %v3191, 0
        %v3260 = vsel %vm547, %v3193, 0
        %v3263 = vsel %vm547, %v3195, 0
        %v3266 = vsel %vm547, %v3197, 0
        %v3269 = vsel %vm547, %v3199, 0
        %v3272 = vsel %vm547, %v3201, 0
        %3274 = vmatprep.subr.bf16.mxu0 0
        %3275 = vmatpush1.bf16.msra.mxu0 %v3218
        %3276 = vmatprep.subr.bf16.mxu0 0
        %3277 = vmatpush1.bf16.msra.mxu0 %v3219
        %3278 = vmatprep.subr.bf16.mxu0 0
        %3279 = vmatpush1.bf16.msra.mxu0 %v3220
        %3280 = vmatprep.subr.bf16.mxu0 0
        %3281 = vmatpush1.bf16.msra.mxu0 %v3221
        %3282 = vmatprep.subr.bf16.mxu0 0
        %3283 = vmatpush1.bf16.msra.mxu0 0
        %3284 = vmatprep.subr.bf16.mxu0 0
        %3285 = vmatpush1.bf16.msra.mxu0 0
        %3286 = vmatprep.subr.bf16.mxu0 0
        %3287 = vmatpush1.bf16.msra.mxu0 0
        %3288 = vmatprep.subr.bf16.mxu0 0
        %3289 = vmatpush1.bf16.msra.mxu0 0
        %3290 = vmatprep.subr.bf16.mxu0 0
        %3291 = vmatpush1.bf16.msra.mxu0 0
        %3292 = vmatprep.subr.bf16.mxu0 0
        %3293 = vmatpush1.bf16.msra.mxu0 0
        %3294 = vmatprep.subr.bf16.mxu0 0
        %3295 = vmatpush1.bf16.msra.mxu0 0
        %3296 = vmatprep.subr.bf16.mxu0 0
        %3297 = vmatpush1.bf16.msra.mxu0 0
        %3298 = vmatprep.subr.bf16.mxu0 0
        %3299 = vmatpush1.bf16.msra.mxu0 0
        %3300 = vmatprep.subr.bf16.mxu0 0
        %3301 = vmatpush1.bf16.msra.mxu0 0
        %3302 = vmatprep.subr.bf16.mxu0 0
        %3303 = vmatpush1.bf16.msra.mxu0 0
        %3304 = vmatprep.subr.bf16.mxu0 0
        %3305 = vmatpush1.bf16.msra.mxu0 0
        %3306 = vmatprep.mubr.bf16.mxu0 0
        %3307 = vmatmul.mubr.bf16.gmra.mrb[0].mxu0 %v3227
        %v3308 = vpop.f32.mrb[0].mxu0
        %v3309 = vadd.f32 0.0, %v3308
        %v3310 = vpop.f32.mrb[0].mxu0
        %v3311 = vpop.f32.mrb[0].mxu0
        %v3312 = vadd.f32 0.0, %v3311
        %v3313 = vpop.f32.mrb[0].mxu0
        %3314 = vmatprep.mubr.bf16.mxu0 0
        %3315 = vmatmul.mubr.bf16.gmra.mrb[0].mxu0 %v3230
        %v3316 = vpop.f32.mrb[0].mxu0
        %v3317 = vadd.f32 0.0, %v3316
        %v3318 = vpop.f32.mrb[0].mxu0
        %v3319 = vpop.f32.mrb[0].mxu0
        %v3320 = vadd.f32 0.0, %v3319
        %v3321 = vpop.f32.mrb[0].mxu0
        %3322 = vmatprep.mubr.bf16.mxu0 0
        %3323 = vmatmul.mubr.bf16.gmra.mrb[0].mxu0 %v3233
        %v3324 = vpop.f32.mrb[0].mxu0
        %v3325 = vadd.f32 0.0, %v3324
        %v3326 = vpop.f32.mrb[0].mxu0
        %v3327 = vpop.f32.mrb[0].mxu0
        %v3328 = vadd.f32 0.0, %v3327
        %v3329 = vpop.f32.mrb[0].mxu0
        %3330 = vmatprep.mubr.bf16.mxu0 0
        %3331 = vmatmul.mubr.bf16.gmra.mrb[0].mxu0 %v3236
        %v3332 = vpop.f32.mrb[0].mxu0
        %v3333 = vadd.f32 0.0, %v3332
        %v3334 = vpop.f32.mrb[0].mxu0
        %v3335 = vpop.f32.mrb[0].mxu0
        %v3336 = vadd.f32 0.0, %v3335
        %v3337 = vpop.f32.mrb[0].mxu0
        %3338 = vmatprep.mubr.bf16.mxu0 0
        %3339 = vmatmul.mubr.bf16.gmra.mrb[0].mxu0 %v3239
        %v3340 = vpop.f32.mrb[0].mxu0
        %v3341 = vadd.f32 0.0, %v3340
        %v3342 = vpop.f32.mrb[0].mxu0
        %v3343 = vpop.f32.mrb[0].mxu0
        %v3344 = vadd.f32 0.0, %v3343
        %v3345 = vpop.f32.mrb[0].mxu0
        %3346 = vmatprep.mubr.bf16.mxu0 0
        %3347 = vmatmul.mubr.bf16.gmra.mrb[0].mxu0 %v3242
        %v3348 = vpop.f32.mrb[0].mxu0
        %v3349 = vadd.f32 0.0, %v3348
        %v3350 = vpop.f32.mrb[0].mxu0
        %v3351 = vpop.f32.mrb[0].mxu0
        %v3352 = vadd.f32 0.0, %v3351
        %v3353 = vpop.f32.mrb[0].mxu0
        %3354 = vmatprep.mubr.bf16.mxu0 0
        %3355 = vmatmul.mubr.bf16.gmra.mrb[0].mxu0 %v3245
        %v3356 = vpop.f32.mrb[0].mxu0
        %v3357 = vadd.f32 0.0, %v3356
        %v3358 = vpop.f32.mrb[0].mxu0
        %v3359 = vpop.f32.mrb[0].mxu0
        %v3360 = vadd.f32 0.0, %v3359
        %v3361 = vpop.f32.mrb[0].mxu0
        %3362 = vmatprep.mubr.bf16.mxu0 0
        %3363 = vmatmul.mubr.bf16.gmra.mrb[0].mxu0 %v3248
        %v3364 = vpop.f32.mrb[0].mxu0
        %v3365 = vadd.f32 0.0, %v3364
        %v3366 = vpop.f32.mrb[0].mxu0
        %v3367 = vpop.f32.mrb[0].mxu0
        %v3368 = vadd.f32 0.0, %v3367
        %v3369 = vpop.f32.mrb[0].mxu0
        %3370 = vmatprep.mubr.bf16.mxu0 0
        %3371 = vmatmul.mubr.bf16.gmra.mrb[0].mxu0 %v3251
        %v3372 = vpop.f32.mrb[0].mxu0
        %v3373 = vadd.f32 0.0, %v3372
        %v3374 = vpop.f32.mrb[0].mxu0
        %v3375 = vpop.f32.mrb[0].mxu0
        %v3376 = vadd.f32 0.0, %v3375
        %v3377 = vpop.f32.mrb[0].mxu0
        %3378 = vmatprep.mubr.bf16.mxu0 0
        %3379 = vmatmul.mubr.bf16.gmra.mrb[0].mxu0 %v3254
        %v3380 = vpop.f32.mrb[0].mxu0
        %v3381 = vadd.f32 0.0, %v3380
        %v3382 = vpop.f32.mrb[0].mxu0
        %v3383 = vpop.f32.mrb[0].mxu0
        %v3384 = vadd.f32 0.0, %v3383
        %v3385 = vpop.f32.mrb[0].mxu0
        %3386 = vmatprep.mubr.bf16.mxu0 0
        %3387 = vmatmul.mubr.bf16.gmra.mrb[0].mxu0 %v3257
        %v3388 = vpop.f32.mrb[0].mxu0
        %v3389 = vadd.f32 0.0, %v3388
        %v3390 = vpop.f32.mrb[0].mxu0
        %v3391 = vpop.f32.mrb[0].mxu0
        %v3392 = vadd.f32 0.0, %v3391
        %v3393 = vpop.f32.mrb[0].mxu0
        %3394 = vmatprep.mubr.bf16.mxu0 0
        %3395 = vmatmul.mubr.bf16.gmra.mrb[0].mxu0 %v3260
        %v3396 = vpop.f32.mrb[0].mxu0
        %v3397 = vadd.f32 0.0, %v3396
        %v3398 = vpop.f32.mrb[0].mxu0
        %v3399 = vpop.f32.mrb[0].mxu0
        %v3400 = vadd.f32 0.0, %v3399
        %v3401 = vpop.f32.mrb[0].mxu0
        %3402 = vmatprep.mubr.bf16.mxu0 0
        %3403 = vmatmul.mubr.bf16.gmra.mrb[0].mxu0 %v3263
        %v3404 = vpop.f32.mrb[0].mxu0
        %v3405 = vadd.f32 0.0, %v3404
        %v3406 = vpop.f32.mrb[0].mxu0
        %v3407 = vpop.f32.mrb[0].mxu0
        %v3408 = vadd.f32 0.0, %v3407
        %v3409 = vpop.f32.mrb[0].mxu0
        %3410 = vmatprep.mubr.bf16.mxu0 0
        %3411 = vmatmul.mubr.bf16.gmra.mrb[0].mxu0 %v3266
        %v3412 = vpop.f32.mrb[0].mxu0
        %v3413 = vadd.f32 0.0, %v3412
        %v3414 = vpop.f32.mrb[0].mxu0
        %v3415 = vpop.f32.mrb[0].mxu0
        %v3416 = vadd.f32 0.0, %v3415
        %v3417 = vpop.f32.mrb[0].mxu0
        %3418 = vmatprep.mubr.bf16.mxu0 0
        %3419 = vmatmul.mubr.bf16.gmra.mrb[0].mxu0 %v3269
        %v3420 = vpop.f32.mrb[0].mxu0
        %v3421 = vadd.f32 0.0, %v3420
        %v3422 = vpop.f32.mrb[0].mxu0
        %v3423 = vpop.f32.mrb[0].mxu0
        %v3424 = vadd.f32 0.0, %v3423
        %v3425 = vpop.f32.mrb[0].mxu0
        %3426 = vmatprep.mubr.bf16.mxu0 0
        %3427 = vmatmul.mubr.bf16.gmra.mrb[0].mxu0 %v3272
        %v3428 = vpop.f32.mrb[0].mxu0
        %v3429 = vadd.f32 0.0, %v3428
        %v3430 = vpop.f32.mrb[0].mxu0
        %v3431 = vpop.f32.mrb[0].mxu0
        %v3432 = vadd.f32 0.0, %v3431
        %v3433 = vpop.f32.mrb[0].mxu0
        %3434 = vdwg.mxu0
        %v3435 = vadd.f32 %v3128, %v3309
        %v3436 = vadd.f32 %v3129, %v3312
        %v3437 = vadd.f32 %v3130, %v3317
        %v3438 = vadd.f32 %v3131, %v3320
        %v3439 = vadd.f32 %v3132, %v3325
        %v3440 = vadd.f32 %v3133, %v3328
        %v3441 = vadd.f32 %v3134, %v3333
        %v3442 = vadd.f32 %v3135, %v3336
        %v3443 = vadd.f32 %v3136, %v3341
        %v3444 = vadd.f32 %v3137, %v3344
        %v3445 = vadd.f32 %v3138, %v3349
        %v3446 = vadd.f32 %v3139, %v3352
        %v3447 = vadd.f32 %v3140, %v3357
        %v3448 = vadd.f32 %v3141, %v3360
        %v3449 = vadd.f32 %v3142, %v3365
        %v3450 = vadd.f32 %v3143, %v3368
        %v3451 = vadd.f32 %v3144, %v3373
        %v3452 = vadd.f32 %v3145, %v3376
        %v3453 = vadd.f32 %v3146, %v3381
        %v3454 = vadd.f32 %v3147, %v3384
        %v3455 = vadd.f32 %v3148, %v3389
        %v3456 = vadd.f32 %v3149, %v3392
        %v3457 = vadd.f32 %v3150, %v3397
        %v3458 = vadd.f32 %v3151, %v3400
        %v3459 = vadd.f32 %v3152, %v3405
        %v3460 = vadd.f32 %v3153, %v3408
        %v3461 = vadd.f32 %v3154, %v3413
        %v3462 = vadd.f32 %v3155, %v3416
        %v3463 = vadd.f32 %v3156, %v3421
        %v3464 = vadd.f32 %v3157, %v3424
        %v3465 = vadd.f32 %v3158, %v3429
        %v3466 = vadd.f32 %v3159, %v3432
        %v3467 = vld [vmem:[%s4] sm:$0x1]
        %v3469 = vlaneseq
        %v3470 = vshrl.u32 %v3469, 7
        %v3471 = vsub.s32 0, %v3470
        %v3472 = vrot.slane %v3467, %v3471
        %v3474 = vadd.f32 %v3435, %v3472
        %v3475 = vadd.f32 %v3436, %v3472
        %v3476 = vadd.f32 %v3437, %v3472
        %v3477 = vadd.f32 %v3438, %v3472
        %v3478 = vadd.f32 %v3439, %v3472
        %v3479 = vadd.f32 %v3440, %v3472
        %v3480 = vadd.f32 %v3441, %v3472
        %v3481 = vadd.f32 %v3442, %v3472
        %v3482 = vadd.f32 %v3443, %v3472
        %v3483 = vadd.f32 %v3444, %v3472
        %v3484 = vadd.f32 %v3445, %v3472
        %v3485 = vadd.f32 %v3446, %v3472
        %v3486 = vadd.f32 %v3447, %v3472
        %v3487 = vadd.f32 %v3448, %v3472
        %v3488 = vadd.f32 %v3449, %v3472
        %v3489 = vadd.f32 %v3450, %v3472
        %v3490 = vadd.f32 %v3451, %v3472
        %v3491 = vadd.f32 %v3452, %v3472
        %v3492 = vadd.f32 %v3453, %v3472
        %v3493 = vadd.f32 %v3454, %v3472
        %v3494 = vadd.f32 %v3455, %v3472
        %v3495 = vadd.f32 %v3456, %v3472
        %v3496 = vadd.f32 %v3457, %v3472
        %v3497 = vadd.f32 %v3458, %v3472
        %v3498 = vadd.f32 %v3459, %v3472
        %v3499 = vadd.f32 %v3460, %v3472
        %v3500 = vadd.f32 %v3461, %v3472
        %v3501 = vadd.f32 %v3462, %v3472
        %v3502 = vadd.f32 %v3463, %v3472
        %v3503 = vadd.f32 %v3464, %v3472
        %v3504 = vadd.f32 %v3465, %v3472
        %v3505 = vadd.f32 %v3466, %v3472
        %v3506 = vmax.f32 %v3474, 0.0
        %v3507 = vmax.f32 %v3475, 0.0
        %v3508 = vmax.f32 %v3476, 0.0
        %v3509 = vmax.f32 %v3477, 0.0
        %v3510 = vmax.f32 %v3478, 0.0
        %v3511 = vmax.f32 %v3479, 0.0
        %v3512 = vmax.f32 %v3480, 0.0
        %v3513 = vmax.f32 %v3481, 0.0
        %v3514 = vmax.f32 %v3482, 0.0
        %v3515 = vmax.f32 %v3483, 0.0
        %v3516 = vmax.f32 %v3484, 0.0
        %v3517 = vmax.f32 %v3485, 0.0
        %v3518 = vmax.f32 %v3486, 0.0
        %v3519 = vmax.f32 %v3487, 0.0
        %v3520 = vmax.f32 %v3488, 0.0
        %v3521 = vmax.f32 %v3489, 0.0
        %v3522 = vmax.f32 %v3490, 0.0
        %v3523 = vmax.f32 %v3491, 0.0
        %v3524 = vmax.f32 %v3492, 0.0
        %v3525 = vmax.f32 %v3493, 0.0
        %v3526 = vmax.f32 %v3494, 0.0
        %v3527 = vmax.f32 %v3495, 0.0
        %v3528 = vmax.f32 %v3496, 0.0
        %v3529 = vmax.f32 %v3497, 0.0
        %v3530 = vmax.f32 %v3498, 0.0
        %v3531 = vmax.f32 %v3499, 0.0
        %v3532 = vmax.f32 %v3500, 0.0
        %v3533 = vmax.f32 %v3501, 0.0
        %v3534 = vmax.f32 %v3502, 0.0
        %v3535 = vmax.f32 %v3503, 0.0
        %v3536 = vmax.f32 %v3504, 0.0
        %v3537 = vmax.f32 %v3505, 0.0
        %v3538 = vpack.c.bf16 %v3507, %v3506
        %v3539 = vpack.c.bf16 %v3509, %v3508
        %v3540 = vpack.c.bf16 %v3511, %v3510
        %v3541 = vpack.c.bf16 %v3513, %v3512
        %v3542 = vpack.c.bf16 %v3515, %v3514
        %v3543 = vpack.c.bf16 %v3517, %v3516
        %v3544 = vpack.c.bf16 %v3519, %v3518
        %v3545 = vpack.c.bf16 %v3521, %v3520
        %v3546 = vpack.c.bf16 %v3523, %v3522
        %v3547 = vpack.c.bf16 %v3525, %v3524
        %v3548 = vpack.c.bf16 %v3527, %v3526
        %v3549 = vpack.c.bf16 %v3529, %v3528
        %v3550 = vpack.c.bf16 %v3531, %v3530
        %v3551 = vpack.c.bf16 %v3533, %v3532
        %v3552 = vpack.c.bf16 %v3535, %v3534
        %v3553 = vpack.c.bf16 %v3537, %v3536
        %v3554 = vld [vmem:[%s5] sm:$0xf]
        %v3555 = vld [vmem:[%s5 + $0x4] sm:$0xf]
        %v3556 = vld [vmem:[%s5 + $0x8] sm:$0xf]
        %v3557 = vld [vmem:[%s5 + $0xc] sm:$0xf]
        %v3558 = vld [vmem:[%s5 + $0x10] sm:$0xf]
        %v3559 = vld [vmem:[%s5 + $0x14] sm:$0xf]
        %v3560 = vld [vmem:[%s5 + $0x18] sm:$0xf]
        %v3561 = vld [vmem:[%s5 + $0x1c] sm:$0xf]
        %v3562 = vld [vmem:[%s6] sm:$0x1]
        %v3564 = vlaneseq
        %v3565 = vshrl.u32 %v3564, 7
        %v3566 = vsub.s32 0, %v3565
        %v3567 = vrot.slane %v3562, %v3566
        %v3577 = vunpack.c.l.b16 %v3554
        %v3578 = vunpack.c.l.b16 %v3555
        %v3579 = vunpack.c.l.b16 %v3556
        %v3580 = vunpack.c.l.b16 %v3557
        %v3581 = vunpack.c.l.b16 %v3558
        %v3582 = vunpack.c.l.b16 %v3559
        %v3583 = vunpack.c.l.b16 %v3560
        %v3584 = vunpack.c.l.b16 %v3561
        %v3585 = vpack.c.b16 %v3578, %v3577
        %v3586 = vpack.c.b16 %v3580, %v3579
        %v3587 = vpack.c.b16 %v3582, %v3581
        %v3588 = vpack.c.b16 %v3584, %v3583
        %v3594 = vsel %vm547, %v3538, 0
        %v3597 = vsel %vm547, %v3539, 0
        %v3600 = vsel %vm547, %v3540, 0
        %v3603 = vsel %vm547, %v3541, 0
        %v3606 = vsel %vm547, %v3542, 0
        %v3609 = vsel %vm547, %v3543, 0
        %v3612 = vsel %vm547, %v3544, 0
        %v3615 = vsel %vm547, %v3545, 0
        %v3618 = vsel %vm547, %v3546, 0
        %v3621 = vsel %vm547, %v3547, 0
        %v3624 = vsel %vm547, %v3548, 0
        %v3627 = vsel %vm547, %v3549, 0
        %v3630 = vsel %vm547, %v3550, 0
        %v3633 = vsel %vm547, %v3551, 0
        %v3636 = vsel %vm547, %v3552, 0
        %v3639 = vsel %vm547, %v3553, 0
        %3641 = vmatprep.subr.bf16.mxu0 0
        %3642 = vmatpush1.bf16.msra.mxu0 %v3585
        %3643 = vmatprep.subr.bf16.mxu0 0
        %3644 = vmatpush1.bf16.msra.mxu0 %v3586
        %3645 = vmatprep.subr.bf16.mxu0 0
        %3646 = vmatpush1.bf16.msra.mxu0 %v3587
        %3647 = vmatprep.subr.bf16.mxu0 0
        %3648 = vmatpush1.bf16.msra.mxu0 %v3588
        %3649 = vmatprep.subr.bf16.mxu0 0
        %3650 = vmatpush1.bf16.msra.mxu0 0
        %3651 = vmatprep.subr.bf16.mxu0 0
        %3652 = vmatpush1.bf16.msra.mxu0 0
        %3653 = vmatprep.subr.bf16.mxu0 0
        %3654 = vmatpush1.bf16.msra.mxu0 0
        %3655 = vmatprep.subr.bf16.mxu0 0
        %3656 = vmatpush1.bf16.msra.mxu0 0
        %3657 = vmatprep.subr.bf16.mxu0 0
        %3658 = vmatpush1.bf16.msra.mxu0 0
        %3659 = vmatprep.subr.bf16.mxu0 0
        %3660 = vmatpush1.bf16.msra.mxu0 0
        %3661 = vmatprep.subr.bf16.mxu0 0
        %3662 = vmatpush1.bf16.msra.mxu0 0
        %3663 = vmatprep.subr.bf16.mxu0 0
        %3664 = vmatpush1.bf16.msra.mxu0 0
        %3665 = vmatprep.subr.bf16.mxu0 0
        %3666 = vmatpush1.bf16.msra.mxu0 0
        %3667 = vmatprep.subr.bf16.mxu0 0
        %3668 = vmatpush1.bf16.msra.mxu0 0
        %3669 = vmatprep.subr.bf16.mxu0 0
        %3670 = vmatpush1.bf16.msra.mxu0 0
        %3671 = vmatprep.subr.bf16.mxu0 0
        %3672 = vmatpush1.bf16.msra.mxu0 0
        %3673 = vmatprep.mubr.bf16.mxu0 0
        %3674 = vmatmul.mubr.bf16.gmra.mrb[0].mxu0 %v3594
        %v3675 = vpop.f32.mrb[0].mxu0
        %v3676 = vadd.f32 %v3567, %v3675
        %v3677 = vpop.f32.mrb[0].mxu0
        %v3678 = vpop.f32.mrb[0].mxu0
        %v3679 = vadd.f32 %v3567, %v3678
        %v3680 = vpop.f32.mrb[0].mxu0
        %3681 = vmatprep.mubr.bf16.mxu0 0
        %3682 = vmatmul.mubr.bf16.gmra.mrb[0].mxu0 %v3597
        %v3683 = vpop.f32.mrb[0].mxu0
        %v3684 = vadd.f32 %v3567, %v3683
        %v3685 = vpop.f32.mrb[0].mxu0
        %v3686 = vpop.f32.mrb[0].mxu0
        %v3687 = vadd.f32 %v3567, %v3686
        %v3688 = vpop.f32.mrb[0].mxu0
        %3689 = vmatprep.mubr.bf16.mxu0 0
        %3690 = vmatmul.mubr.bf16.gmra.mrb[0].mxu0 %v3600
        %v3691 = vpop.f32.mrb[0].mxu0
        %v3692 = vadd.f32 %v3567, %v3691
        %v3693 = vpop.f32.mrb[0].mxu0
        %v3694 = vpop.f32.mrb[0].mxu0
        %v3695 = vadd.f32 %v3567, %v3694
        %v3696 = vpop.f32.mrb[0].mxu0
        %3697 = vmatprep.mubr.bf16.mxu0 0
        %3698 = vmatmul.mubr.bf16.gmra.mrb[0].mxu0 %v3603
        %v3699 = vpop.f32.mrb[0].mxu0
        %v3700 = vadd.f32 %v3567, %v3699
        %v3701 = vpop.f32.mrb[0].mxu0
        %v3702 = vpop.f32.mrb[0].mxu0
        %v3703 = vadd.f32 %v3567, %v3702
        %v3704 = vpop.f32.mrb[0].mxu0
        %3705 = vmatprep.mubr.bf16.mxu0 0
        %3706 = vmatmul.mubr.bf16.gmra.mrb[0].mxu0 %v3606
        %v3707 = vpop.f32.mrb[0].mxu0
        %v3708 = vadd.f32 %v3567, %v3707
        %v3709 = vpop.f32.mrb[0].mxu0
        %v3710 = vpop.f32.mrb[0].mxu0
        %v3711 = vadd.f32 %v3567, %v3710
        %v3712 = vpop.f32.mrb[0].mxu0
        %3713 = vmatprep.mubr.bf16.mxu0 0
        %3714 = vmatmul.mubr.bf16.gmra.mrb[0].mxu0 %v3609
        %v3715 = vpop.f32.mrb[0].mxu0
        %v3716 = vadd.f32 %v3567, %v3715
        %v3717 = vpop.f32.mrb[0].mxu0
        %v3718 = vpop.f32.mrb[0].mxu0
        %v3719 = vadd.f32 %v3567, %v3718
        %v3720 = vpop.f32.mrb[0].mxu0
        %3721 = vmatprep.mubr.bf16.mxu0 0
        %3722 = vmatmul.mubr.bf16.gmra.mrb[0].mxu0 %v3612
        %v3723 = vpop.f32.mrb[0].mxu0
        %v3724 = vadd.f32 %v3567, %v3723
        %v3725 = vpop.f32.mrb[0].mxu0
        %v3726 = vpop.f32.mrb[0].mxu0
        %v3727 = vadd.f32 %v3567, %v3726
        %v3728 = vpop.f32.mrb[0].mxu0
        %3729 = vmatprep.mubr.bf16.mxu0 0
        %3730 = vmatmul.mubr.bf16.gmra.mrb[0].mxu0 %v3615
        %v3731 = vpop.f32.mrb[0].mxu0
        %v3732 = vadd.f32 %v3567, %v3731
        %v3733 = vpop.f32.mrb[0].mxu0
        %v3734 = vpop.f32.mrb[0].mxu0
        %v3735 = vadd.f32 %v3567, %v3734
        %v3736 = vpop.f32.mrb[0].mxu0
        %3737 = vmatprep.mubr.bf16.mxu0 0
        %3738 = vmatmul.mubr.bf16.gmra.mrb[0].mxu0 %v3618
        %v3739 = vpop.f32.mrb[0].mxu0
        %v3740 = vadd.f32 %v3567, %v3739
        %v3741 = vpop.f32.mrb[0].mxu0
        %v3742 = vpop.f32.mrb[0].mxu0
        %v3743 = vadd.f32 %v3567, %v3742
        %v3744 = vpop.f32.mrb[0].mxu0
        %3745 = vmatprep.mubr.bf16.mxu0 0
        %3746 = vmatmul.mubr.bf16.gmra.mrb[0].mxu0 %v3621
        %v3747 = vpop.f32.mrb[0].mxu0
        %v3748 = vadd.f32 %v3567, %v3747
        %v3749 = vpop.f32.mrb[0].mxu0
        %v3750 = vpop.f32.mrb[0].mxu0
        %v3751 = vadd.f32 %v3567, %v3750
        %v3752 = vpop.f32.mrb[0].mxu0
        %3753 = vmatprep.mubr.bf16.mxu0 0
        %3754 = vmatmul.mubr.bf16.gmra.mrb[0].mxu0 %v3624
        %v3755 = vpop.f32.mrb[0].mxu0
        %v3756 = vadd.f32 %v3567, %v3755
        %v3757 = vpop.f32.mrb[0].mxu0
        %v3758 = vpop.f32.mrb[0].mxu0
        %v3759 = vadd.f32 %v3567, %v3758
        %v3760 = vpop.f32.mrb[0].mxu0
        %3761 = vmatprep.mubr.bf16.mxu0 0
        %3762 = vmatmul.mubr.bf16.gmra.mrb[0].mxu0 %v3627
        %v3763 = vpop.f32.mrb[0].mxu0
        %v3764 = vadd.f32 %v3567, %v3763
        %v3765 = vpop.f32.mrb[0].mxu0
        %v3766 = vpop.f32.mrb[0].mxu0
        %v3767 = vadd.f32 %v3567, %v3766
        %v3768 = vpop.f32.mrb[0].mxu0
        %3769 = vmatprep.mubr.bf16.mxu0 0
        %3770 = vmatmul.mubr.bf16.gmra.mrb[0].mxu0 %v3630
        %v3771 = vpop.f32.mrb[0].mxu0
        %v3772 = vadd.f32 %v3567, %v3771
        %v3773 = vpop.f32.mrb[0].mxu0
        %v3774 = vpop.f32.mrb[0].mxu0
        %v3775 = vadd.f32 %v3567, %v3774
        %v3776 = vpop.f32.mrb[0].mxu0
        %3777 = vmatprep.mubr.bf16.mxu0 0
        %3778 = vmatmul.mubr.bf16.gmra.mrb[0].mxu0 %v3633
        %v3779 = vpop.f32.mrb[0].mxu0
        %v3780 = vadd.f32 %v3567, %v3779
        %v3781 = vpop.f32.mrb[0].mxu0
        %v3782 = vpop.f32.mrb[0].mxu0
        %v3783 = vadd.f32 %v3567, %v3782
        %v3784 = vpop.f32.mrb[0].mxu0
        %3785 = vmatprep.mubr.bf16.mxu0 0
        %3786 = vmatmul.mubr.bf16.gmra.mrb[0].mxu0 %v3636
        %v3787 = vpop.f32.mrb[0].mxu0
        %v3788 = vadd.f32 %v3567, %v3787
        %v3789 = vpop.f32.mrb[0].mxu0
        %v3790 = vpop.f32.mrb[0].mxu0
        %v3791 = vadd.f32 %v3567, %v3790
        %v3792 = vpop.f32.mrb[0].mxu0
        %3793 = vmatprep.mubr.bf16.mxu0 0
        %3794 = vmatmul.mubr.bf16.gmra.mrb[0].mxu0 %v3639
        %v3795 = vpop.f32.mrb[0].mxu0
        %v3796 = vadd.f32 %v3567, %v3795
        %v3797 = vpop.f32.mrb[0].mxu0
        %v3798 = vpop.f32.mrb[0].mxu0
        %v3799 = vadd.f32 %v3567, %v3798
        %v3800 = vpop.f32.mrb[0].mxu0
        %3801 = vdwg.mxu0
        %v3802 = vpack.c.bf16 %v3679, %v3676
        %v3803 = vpack.c.bf16 %v3687, %v3684
        %v3804 = vpack.c.bf16 %v3695, %v3692
        %v3805 = vpack.c.bf16 %v3703, %v3700
        %v3806 = vpack.c.bf16 %v3711, %v3708
        %v3807 = vpack.c.bf16 %v3719, %v3716
        %v3808 = vpack.c.bf16 %v3727, %v3724
        %v3809 = vpack.c.bf16 %v3735, %v3732
        %v3810 = vpack.c.bf16 %v3743, %v3740
        %v3811 = vpack.c.bf16 %v3751, %v3748
        %v3812 = vpack.c.bf16 %v3759, %v3756
        %v3813 = vpack.c.bf16 %v3767, %v3764
        %v3814 = vpack.c.bf16 %v3775, %v3772
        %v3815 = vpack.c.bf16 %v3783, %v3780
        %v3816 = vpack.c.bf16 %v3791, %v3788
        %v3817 = vpack.c.bf16 %v3799, %v3796
        %v3834 = vunpack.c.l.b16 %v3802
        %v3835 = vunpack.c.h.b16 %v3802
        %v3836 = vunpack.c.l.b16 %v3803
        %v3837 = vunpack.c.h.b16 %v3803
        %v3838 = vunpack.c.l.b16 %v3804
        %v3839 = vunpack.c.h.b16 %v3804
        %v3840 = vunpack.c.l.b16 %v3805
        %v3841 = vunpack.c.h.b16 %v3805
        %v3842 = vunpack.c.l.b16 %v3806
        %v3843 = vunpack.c.h.b16 %v3806
        %v3844 = vunpack.c.l.b16 %v3807
        %v3845 = vunpack.c.h.b16 %v3807
        %v3846 = vunpack.c.l.b16 %v3808
        %v3847 = vunpack.c.h.b16 %v3808
        %v3848 = vunpack.c.l.b16 %v3809
        %v3849 = vunpack.c.h.b16 %v3809
        %v3850 = vunpack.c.l.b16 %v3810
        %v3851 = vunpack.c.h.b16 %v3810
        %v3852 = vunpack.c.l.b16 %v3811
        %v3853 = vunpack.c.h.b16 %v3811
        %v3854 = vunpack.c.l.b16 %v3812
        %v3855 = vunpack.c.h.b16 %v3812
        %v3856 = vunpack.c.l.b16 %v3813
        %v3857 = vunpack.c.h.b16 %v3813
        %v3858 = vunpack.c.l.b16 %v3814
        %v3859 = vunpack.c.h.b16 %v3814
        %v3860 = vunpack.c.l.b16 %v3815
        %v3861 = vunpack.c.h.b16 %v3815
        %v3862 = vunpack.c.l.b16 %v3816
        %v3863 = vunpack.c.h.b16 %v3816
        %v3864 = vunpack.c.l.b16 %v3817
        %v3865 = vunpack.c.h.b16 %v3817
        %v3866 = vpack.c.b16 %v3834, %v3834
        %v3867 = vpack.c.b16 %v3835, %v3835
        %v3868 = vpack.c.b16 %v3836, %v3836
        %v3869 = vpack.c.b16 %v3837, %v3837
        %v3870 = vpack.c.b16 %v3838, %v3838
        %v3871 = vpack.c.b16 %v3839, %v3839
        %v3872 = vpack.c.b16 %v3840, %v3840
        %v3873 = vpack.c.b16 %v3841, %v3841
        %v3874 = vpack.c.b16 %v3842, %v3842
        %v3875 = vpack.c.b16 %v3843, %v3843
        %v3876 = vpack.c.b16 %v3844, %v3844
        %v3877 = vpack.c.b16 %v3845, %v3845
        %v3878 = vpack.c.b16 %v3846, %v3846
        %v3879 = vpack.c.b16 %v3847, %v3847
        %v3880 = vpack.c.b16 %v3848, %v3848
        %v3881 = vpack.c.b16 %v3849, %v3849
        %v3882 = vpack.c.b16 %v3850, %v3850
        %v3883 = vpack.c.b16 %v3851, %v3851
        %v3884 = vpack.c.b16 %v3852, %v3852
        %v3885 = vpack.c.b16 %v3853, %v3853
        %v3886 = vpack.c.b16 %v3854, %v3854
        %v3887 = vpack.c.b16 %v3855, %v3855
        %v3888 = vpack.c.b16 %v3856, %v3856
        %v3889 = vpack.c.b16 %v3857, %v3857
        %v3890 = vpack.c.b16 %v3858, %v3858
        %v3891 = vpack.c.b16 %v3859, %v3859
        %v3892 = vpack.c.b16 %v3860, %v3860
        %v3893 = vpack.c.b16 %v3861, %v3861
        %v3894 = vpack.c.b16 %v3862, %v3862
        %v3895 = vpack.c.b16 %v3863, %v3863
        %v3896 = vpack.c.b16 %v3864, %v3864
        %v3897 = vpack.c.b16 %v3865, %v3865
        %3930 = vst [vmem:[%s243] sm:$0xf] %v3866
        %3931 = vst [vmem:[%s243 + $0x4] sm:$0xf] %v3867
        %3932 = vst [vmem:[%s243 + $0x8] sm:$0xf] %v3868
        %3933 = vst [vmem:[%s243 + $0xc] sm:$0xf] %v3869
        %3934 = vst [vmem:[%s243 + $0x10] sm:$0xf] %v3870
        %3935 = vst [vmem:[%s243 + $0x14] sm:$0xf] %v3871
        %3936 = vst [vmem:[%s243 + $0x18] sm:$0xf] %v3872
        %3937 = vst [vmem:[%s243 + $0x1c] sm:$0xf] %v3873
        %3938 = vst [vmem:[%s243 + $0x20] sm:$0xf] %v3874
        %3939 = vst [vmem:[%s243 + $0x24] sm:$0xf] %v3875
        %3940 = vst [vmem:[%s243 + $0x28] sm:$0xf] %v3876
        %3941 = vst [vmem:[%s243 + $0x2c] sm:$0xf] %v3877
        %3942 = vst [vmem:[%s243 + $0x30] sm:$0xf] %v3878
        %3943 = vst [vmem:[%s243 + $0x34] sm:$0xf] %v3879
        %3944 = vst [vmem:[%s243 + $0x38] sm:$0xf] %v3880
        %3945 = vst [vmem:[%s243 + $0x3c] sm:$0xf] %v3881
        %3946 = vst [vmem:[%s243 + $0x40] sm:$0xf] %v3882
        %3947 = vst [vmem:[%s243 + $0x44] sm:$0xf] %v3883
        %3948 = vst [vmem:[%s243 + $0x48] sm:$0xf] %v3884
        %3949 = vst [vmem:[%s243 + $0x4c] sm:$0xf] %v3885
        %3950 = vst [vmem:[%s243 + $0x50] sm:$0xf] %v3886
        %3951 = vst [vmem:[%s243 + $0x54] sm:$0xf] %v3887
        %3952 = vst [vmem:[%s243 + $0x58] sm:$0xf] %v3888
        %3953 = vst [vmem:[%s243 + $0x5c] sm:$0xf] %v3889
        %3954 = vst [vmem:[%s243 + $0x60] sm:$0xf] %v3890
        %3955 = vst [vmem:[%s243 + $0x64] sm:$0xf] %v3891
        %3956 = vst [vmem:[%s243 + $0x68] sm:$0xf] %v3892
        %3957 = vst [vmem:[%s243 + $0x6c] sm:$0xf] %v3893
        %3958 = vst [vmem:[%s243 + $0x70] sm:$0xf] %v3894
        %3959 = vst [vmem:[%s243 + $0x74] sm:$0xf] %v3895
        %3960 = vst [vmem:[%s243 + $0x78] sm:$0xf] %v3896
        %3961 = vst [vmem:[%s243 + $0x7c] sm:$0xf] %v3897
        %s3962 = sand.u32 %s163, 1
        %s3963 = scalar_lea.sflag [#allocation6], %s3962
        %s3964 = sand.u32 %s163, 1
        %s3965 = smul.addr %s3964, 128
        %s3966 = scalar_lea.vmem [#allocation5], %s3965
        // Predicated region
        $region41: #{tpu_custom_call.1} parent=39 // pred_check
          %p3967 = pneg %p173
        $region42: #{tpu_custom_call.1} parent=39 // pred_check_branch
          %3969 = sbr.rel (%p3967) target = $region44
        $region43: #{tpu_custom_call.1} parent=39 // pred_region
          %s3970 = smul.u32 32, %s36
          %s3972 = ssub.s32 2048, 2048
          %3973 = vsyncadd %s3963, %s3972
          %s3974 = smul.addr %s35, 96
          %s3975 = sadd.s32 %s3970, %s3974
          %s3976 = smul.addr %s3975, 64
          %s3977 = scalar_lea.hbm %s7, %s3976
          %s3978 = sshll.u32 %s3966, 4
          %s3979 = int_to_ptr.vmem [resolvable:$true] %s3978
          %3984 = dma.vmem_to_hbm [thread:$0]  %s3979, 2048, %s3977, %s3963, 64, 64, 4
        $region44: #{tpu_custom_call.1} parent=39 // pred_fallthru
          _
      $region40: #{tpu_custom_call.1} parent=5 // pred_fallthru
        _
      %p3985 = scmp.le.s32.totalorder 2, %s26
      // Predicated region
      $region45: #{tpu_custom_call.1} parent=5 // pred_check
        %p3986 = pneg %p3985
      $region46: #{tpu_custom_call.1} parent=5 // pred_check_branch
        %3988 = sbr.rel (%p3986) target = $region48
      $region47: #{tpu_custom_call.1} parent=5 // pred_region
        %s3989 = ssub.s32 %s26, 2
        // Predicated region
        $region49: #{tpu_custom_call.1} parent=47 // pred_check
          %p3990 = pneg %p179
        $region50: #{tpu_custom_call.1} parent=47 // pred_check_branch
          %3992 = sbr.rel (%p3990) target = $region52
        $region51: #{tpu_custom_call.1} parent=47 // pred_region
          %s3993 = sand.u32 %s164, 1
          %s3994 = scalar_lea.sflag [#allocation6], %s3993
          %s3995 = sand.u32 %s164, 1
          %s3996 = smul.addr %s3995, 128
          %s3997 = scalar_lea.vmem [#allocation5], %s3996
          %3998 = dma.done %s3994, 2048
        $region52: #{tpu_custom_call.1} parent=47 // pred_fallthru
          _
      $region48: #{tpu_custom_call.1} parent=5 // pred_fallthru
        _
    $region6: #{tpu_custom_call.1} parent=1 // loop_footer
      %s30 = sadd.s32 1, %s26
    $region7: #{tpu_custom_call.1} parent=1 // loop_footer_branch
      %25 = sbr.rel target = $region3
    $region8: #{tpu_custom_call.1} parent=1 // loop_exit
      _
    %3999 = vsyncpa [#allocation6], 1
    %s4000 = scalar_lea.sflag [#allocation6], 1
    %4001 = vsyncpa %s4000, 1

</llo_original>
